<compile_context>
chip_gen: v7x
topology: tpu7x:2x2x1
jax: 0.10.0
libtpu: 0.0.40
codegen_flags: <defaults>
</compile_context>

<pallas_src>
import jax
import jax.numpy as jnp
from jax.experimental import pallas as pl
from jax.experimental.pallas import tpu as pltpu

_LANES = 128
_ROW_BLOCK = 8 * _LANES  # 1024 rows -> whole f32 output vregs per tile


def edge_predictor_kernel(src_ref, dst_ref, w1s_ref, w1d_ref, b1_ref,
                          w2_ref, b2_ref, out_ref):
    # Hidden layer: h = ReLU(src @ W1_src + dst @ W1_dst + b1)  (MXU, f32 acc)
    h = (jnp.dot(src_ref[...], w1s_ref[...], preferred_element_type=jnp.float32)
         + jnp.dot(dst_ref[...], w1d_ref[...], preferred_element_type=jnp.float32)
         + b1_ref[...])                                  # b1 broadcasts (1, D)
    h = jnp.maximum(h, 0.0)

    # Output layer: logit[i] = sum_d h[i, d] * w2[d] + b2
    # VPU multiply + XLU lane reduce instead of a 1-wide MXU matmul.
    logit = jnp.sum(h * w2_ref[...], axis=-1) + b2_ref[0]          # (tile_n,)

    # Lane-dense store: pack tile_n probabilities into (tile_n//128, 128).
    out_ref[...] = jax.nn.sigmoid(logit).reshape(out_ref.shape).astype(out_ref.dtype)


def _choose_tile_n(n_rows, dim, in_bytes, budget_bytes=8 * 1024 * 1024):
    """Rows per grid step: multiple of 1024 (=8*128) so the per-tile output
    packs into whole f32 vregs, capped so the double-buffered src+dst tiles
    (2 arrays x 2 buffers x tile_n x D x in_bytes) fit the VMEM budget."""
    t = budget_bytes // max(1, 4 * dim * in_bytes)
    t = max(_ROW_BLOCK, (t // _ROW_BLOCK) * _ROW_BLOCK)
    # don't pad a tiny problem up to a huge single tile
    t = min(t, ((n_rows + _ROW_BLOCK - 1) // _ROW_BLOCK) * _ROW_BLOCK)
    return t


def edge_predictor(src_emb, dst_emb, params, *, tile_n=None,
                   compute_dtype=jnp.bfloat16):
    """src_emb, dst_emb: [N, D] float32 -> [N, 1] float32 probabilities."""
    N, D = src_emb.shape
    w1_src, w1_dst, b1, w2_row, b2 = params
    in_bytes = jnp.dtype(compute_dtype).itemsize

    if tile_n is None:
        tile_n = _choose_tile_n(N, D, in_bytes)
    assert tile_n % _ROW_BLOCK == 0

    num_tiles = pl.cdiv(N, tile_n)
    n_pad = num_tiles * tile_n

    # Pad the edge list to a whole number of tiles (padded rows discarded).
    if n_pad != N:
        src_emb = jnp.pad(src_emb, ((0, n_pad - N), (0, 0)))
        dst_emb = jnp.pad(dst_emb, ((0, n_pad - N), (0, 0)))

    # bf16 at the boundary halves HBM traffic; f32 accumulation in-kernel.
    src_c = src_emb.astype(compute_dtype)
    dst_c = dst_emb.astype(compute_dtype)
    w1s_c = w1_src.astype(compute_dtype)
    w1d_c = w1_dst.astype(compute_dtype)
    b1_f = b1.reshape(1, D).astype(jnp.float32)
    w2_f = w2_row.reshape(1, D).astype(jnp.float32)
    b2_f = b2.reshape(1).astype(jnp.float32)

    out_rows = n_pad // _LANES        # lane-dense output viewed as [n_pad/128, 128]
    blk_rows = tile_n // _LANES

    out2d = pl.pallas_call(
        edge_predictor_kernel,
        out_shape=jax.ShapeDtypeStruct((out_rows, _LANES), jnp.float32),
        grid_spec=pltpu.PrefetchScalarGridSpec(
            num_scalar_prefetch=0,
            grid=(num_tiles,),
            in_specs=[
                pl.BlockSpec((tile_n, D), lambda i: (i, 0)),   # src tile (bf16)
                pl.BlockSpec((tile_n, D), lambda i: (i, 0)),   # dst tile (bf16)
                pl.BlockSpec((D, D), lambda i: (0, 0)),        # W1_src (resident)
                pl.BlockSpec((D, D), lambda i: (0, 0)),        # W1_dst (resident)
                pl.BlockSpec((1, D), lambda i: (0, 0)),        # b1
                pl.BlockSpec((1, D), lambda i: (0, 0)),        # w2 row
                pl.BlockSpec(memory_space=pltpu.MemorySpace.SMEM),  # b2 scalar
            ],
            out_specs=pl.BlockSpec((blk_rows, _LANES), lambda i: (i, 0)),
        ),
        compiler_params=pltpu.CompilerParams(
            dimension_semantics=("parallel",),   # shard row tiles across TCs (v7x)
            vmem_limit_bytes=32 * 1024 * 1024,   # above v5e's 16 MiB scoped default
        ),
        # NOTE(v7x, very large D): if the double-buffered DxD bf16 weights
        # approach the 64 MiB/TC VMEM, single-buffer them
        # (pipeline_mode=pl.Buffered(1)) or shrink the tile budget above.
    )(src_c, dst_c, w1s_c, w1d_c, b1_f, w2_f, b2_f)

    return out2d.reshape(-1)[:N].reshape(N, 1)


def init_params(key, dim):
    """Shapes matching the PyTorch module:
       Linear(2*dim, dim): W1 [2*dim, dim] (x @ W convention), b1 [1, dim]
       Linear(dim, 1):     W2 row [1, dim],                    b2 [1]"""
    k1, k2, k3, k4 = jax.random.split(key, 4)
    s1 = 1.0 / jnp.sqrt(2.0 * dim)
    s2 = 1.0 / jnp.sqrt(1.0 * dim)
    w1 = jax.random.uniform(k1, (2 * dim, dim), jnp.float32, -s1, s1)
    b1 = jax.random.uniform(k2, (1, dim), jnp.float32, -s1, s1)
    w2 = jax.random.uniform(k3, (1, dim), jnp.float32, -s2, s2)
    b2 = jax.random.uniform(k4, (1,), jnp.float32, -s2, s2)
    # split W1 into the src-half and dst-half (equivalent to the concat)
    return w1[:dim, :], w1[dim:, :], b1, w2, b2


def edge_predictor_ref(src_emb, dst_emb, params, cast_dtype=jnp.float32):
    w1_src, w1_dst, b1, w2_row, b2 = params
    c = lambda x: x.astype(cast_dtype).astype(jnp.float32)
    h = jnp.maximum(c(src_emb) @ c(w1_src) + c(dst_emb) @ c(w1_dst) + b1, 0.0)
    return jax.nn.sigmoid(h @ w2_row.T + b2.reshape(1, 1))


if __name__ == "__main__":
    key = jax.random.PRNGKey(0)
    k_src, k_dst, k_par = jax.random.split(key, 3)

    N, D = 8, 32  # 8 edges, embedding dim 32
    src_emb = jax.random.normal(k_src, (N, D), jnp.float32)
    dst_emb = jax.random.normal(k_dst, (N, D), jnp.float32)
    params = init_params(k_par, D)

    out = edge_predictor(src_emb, dst_emb, params)
    out = jax.block_until_ready(out)
    assert out.shape == (N, 1)

    # Kernel uses bf16 inputs with f32 accumulation: compare tightly against a
    # bf16-cast reference and loosely against the pure-f32 reference.
    ref_bf16 = edge_predictor_ref(src_emb, dst_emb, params, jnp.bfloat16)
    ref_f32 = edge_predictor_ref(src_emb, dst_emb, params, jnp.float32)
    assert jnp.allclose(out, ref_bf16, atol=2e-3, rtol=2e-3), "mismatch vs bf16 ref"
    assert jnp.allclose(out, ref_f32, atol=2e-2, rtol=2e-2), "mismatch vs f32 ref"

    print("KERNEL_OK")
</pallas_src>

<mosaic_0001>
module attributes {stable_mosaic.version = 11 : i64} {
  func.func @edge_predictor_kernel(%arg0: i32, %arg1: memref<1024x32xbf16, #tpu.memory_space<vmem>>, %arg2: memref<1024x32xbf16, #tpu.memory_space<vmem>>, %arg3: memref<32x32xbf16, #tpu.memory_space<vmem>>, %arg4: memref<32x32xbf16, #tpu.memory_space<vmem>>, %arg5: memref<1x32xf32, #tpu.memory_space<vmem>>, %arg6: memref<1x32xf32, #tpu.memory_space<vmem>>, %arg7: memref<1xf32, #tpu.memory_space<smem>>, %arg8: memref<8x128xf32, #tpu.memory_space<vmem>>) attributes {dimension_semantics = [#tpu.dimension_semantics<parallel>], iteration_bounds = array<i64: 1>, scalar_prefetch = 0 : i64, scratch_operands = 0 : i64, tpu.core_type = #tpu.core_type<tc>, window_params = [{transform_indices = @transform_0, window_bounds = array<i64: 1024, 32>}, {transform_indices = @transform_1, window_bounds = array<i64: 1024, 32>}, {pipeline_mode = #tpu.pipeline_mode<synchronous>, transform_indices = @transform_2, window_bounds = array<i64: 32, 32>}, {pipeline_mode = #tpu.pipeline_mode<synchronous>, transform_indices = @transform_3, window_bounds = array<i64: 32, 32>}, {pipeline_mode = #tpu.pipeline_mode<synchronous>, transform_indices = @transform_4, window_bounds = array<i64: 1, 32>}, {pipeline_mode = #tpu.pipeline_mode<synchronous>, transform_indices = @transform_5, window_bounds = array<i64: 1, 32>}, {transform_indices = @transform_6, window_bounds = array<i64: 1>}, {transform_indices = @transform_7, window_bounds = array<i64: 8, 128>}]} {
    %c0 = arith.constant 0 : index
    %c0_0 = arith.constant 0 : index
    %0 = vector.load %arg1[%c0, %c0_0] : memref<1024x32xbf16, #tpu.memory_space<vmem>>, vector<1024x32xbf16>
    %c0_1 = arith.constant 0 : index
    %c0_2 = arith.constant 0 : index
    %1 = vector.load %arg3[%c0_1, %c0_2] : memref<32x32xbf16, #tpu.memory_space<vmem>>, vector<32x32xbf16>
    %cst = arith.constant dense<0.000000e+00> : vector<1024x32xf32>
    %2 = tpu.matmul %0, %1, %cst {dimension_numbers = #tpu.dot_dimension_numbers<[1], [0], [0], [1], [0, 0, 1, 1], [], []>} : vector<1024x32xbf16>, vector<32x32xbf16>, vector<1024x32xf32> -> vector<1024x32xf32>
    %c0_3 = arith.constant 0 : index
    %c0_4 = arith.constant 0 : index
    %3 = vector.load %arg2[%c0_3, %c0_4] : memref<1024x32xbf16, #tpu.memory_space<vmem>>, vector<1024x32xbf16>
    %c0_5 = arith.constant 0 : index
    %c0_6 = arith.constant 0 : index
    %4 = vector.load %arg4[%c0_5, %c0_6] : memref<32x32xbf16, #tpu.memory_space<vmem>>, vector<32x32xbf16>
    %cst_7 = arith.constant dense<0.000000e+00> : vector<1024x32xf32>
    %5 = tpu.matmul %3, %4, %cst_7 {dimension_numbers = #tpu.dot_dimension_numbers<[1], [0], [0], [1], [0, 0, 1, 1], [], []>} : vector<1024x32xbf16>, vector<32x32xbf16>, vector<1024x32xf32> -> vector<1024x32xf32>
    %6 = arith.addf %2, %5 : vector<1024x32xf32>
    %c0_8 = arith.constant 0 : index
    %c0_9 = arith.constant 0 : index
    %7 = vector.load %arg5[%c0_8, %c0_9] : memref<1x32xf32, #tpu.memory_space<vmem>>, vector<1x32xf32>
    %8 = vector.broadcast %7 : vector<1x32xf32> to vector<1024x32xf32>
    %9 = arith.addf %6, %8 : vector<1024x32xf32>
    %cst_10 = arith.constant 0.000000e+00 : f32
    %10 = vector.broadcast %cst_10 : f32 to vector<1024x32xf32>
    %11 = arith.maximumf %9, %10 : vector<1024x32xf32>
    %c0_11 = arith.constant 0 : index
    %c0_12 = arith.constant 0 : index
    %12 = vector.load %arg6[%c0_11, %c0_12] : memref<1x32xf32, #tpu.memory_space<vmem>>, vector<1x32xf32>
    %13 = vector.broadcast %12 : vector<1x32xf32> to vector<1024x32xf32>
    %14 = arith.mulf %11, %13 : vector<1024x32xf32>
    %cst_13 = arith.constant dense<0.000000e+00> : vector<1024xf32>
    %15 = vector.multi_reduction <add>, %14, %cst_13 [1] : vector<1024x32xf32> to vector<1024xf32>
    %c0_14 = arith.constant 0 : index
    %16 = memref.load %arg7[%c0_14] : memref<1xf32, #tpu.memory_space<smem>>
    %17 = vector.broadcast %16 : f32 to vector<1024xf32>
    %18 = arith.addf %15, %17 : vector<1024xf32>
    %19 = arith.negf %18 : vector<1024xf32>
    %20 = math.exp %19 : vector<1024xf32>
    %cst_15 = arith.constant 1.000000e+00 : f32
    %21 = vector.broadcast %cst_15 : f32 to vector<1024xf32>
    %22 = arith.addf %21, %20 : vector<1024xf32>
    %23 = arith.divf %21, %22 : vector<1024xf32>
    %24 = vector.shape_cast %23 : vector<1024xf32> to vector<8x128xf32>
    %c0_16 = arith.constant 0 : index
    %c0_17 = arith.constant 0 : index
    %25 = vector.load %arg8[%c0_16, %c0_17] : memref<8x128xf32, #tpu.memory_space<vmem>>, vector<8x128xf32>
    tpu.vector_store %arg8[%c0_16, %c0_17], %24 {strides = array<i32>} : memref<8x128xf32, #tpu.memory_space<vmem>>, vector<8x128xf32>,
    return
  }
  func.func @transform_0(%arg0: i32) -> (i32, i32) {
    %c0_i32 = arith.constant 0 : i32
    %c0_i32_0 = arith.constant 0 : i32
    return %arg0, %c0_i32 : i32, i32
  }
  func.func @transform_1(%arg0: i32) -> (i32, i32) {
    %c0_i32 = arith.constant 0 : i32
    %c0_i32_0 = arith.constant 0 : i32
    return %arg0, %c0_i32 : i32, i32
  }
  func.func @transform_2(%arg0: i32) -> (i32, i32) {
    %c0_i32 = arith.constant 0 : i32
    %c0_i32_0 = arith.constant 0 : i32
    %c0_i32_1 = arith.constant 0 : i32
    return %c0_i32, %c0_i32_0 : i32, i32
  }
  func.func @transform_3(%arg0: i32) -> (i32, i32) {
    %c0_i32 = arith.constant 0 : i32
    %c0_i32_0 = arith.constant 0 : i32
    %c0_i32_1 = arith.constant 0 : i32
    return %c0_i32, %c0_i32_0 : i32, i32
  }
  func.func @transform_4(%arg0: i32) -> (i32, i32) {
    %c0_i32 = arith.constant 0 : i32
    %c0_i32_0 = arith.constant 0 : i32
    %c0_i32_1 = arith.constant 0 : i32
    return %c0_i32, %c0_i32_0 : i32, i32
  }
  func.func @transform_5(%arg0: i32) -> (i32, i32) {
    %c0_i32 = arith.constant 0 : i32
    %c0_i32_0 = arith.constant 0 : i32
    %c0_i32_1 = arith.constant 0 : i32
    return %c0_i32, %c0_i32_0 : i32, i32
  }
  func.func @transform_6(%arg0: i32) -> i32 {
    %c0_i32 = arith.constant 0 : i32
    %c0_i32_0 = arith.constant 0 : i32
    return %c0_i32 : i32
  }
  func.func @transform_7(%arg0: i32) -> (i32, i32) {
    %c0_i32 = arith.constant 0 : i32
    %c0_i32_0 = arith.constant 0 : i32
    return %arg0, %c0_i32 : i32, i32
  }
}

</mosaic_0001>

<llo_original>
// kernel: tpu_custom_call.1
$region0: #{tpu_custom_call.1}
  #allocation0 [shape = 'u32[]', space=smem, size = 0x4, offset = 0x4, fixed_abs, tag = 'smem constant byte address 0x4 - core index']
  #allocation1 [shape = 'u32[144,128]{1,0:T(1,128)}', space=vmem, size = 0x12000, scoped, tag = 'internal scratch']
  #allocation2 [shape = 'f32[1]{0:T(128)S(6)}', space=smem, size = 0x200, scoped, tag = 'scoped memory for tpu_custom_call.1']
  %s0 = inlined_call_operand.vmem [shape: bf16[1024,32], index: 0, kind: input, shape index: {}]
  %s1 = inlined_call_operand.vmem [shape: bf16[1024,32], index: 1, kind: input, shape index: {}]
  %s2 = inlined_call_operand.vmem [shape: bf16[32,32], index: 2, kind: input, shape index: {}]
  %s3 = inlined_call_operand.vmem [shape: bf16[32,32], index: 3, kind: input, shape index: {}]
  %s4 = inlined_call_operand.vmem [shape: f32[1,32], index: 4, kind: input, shape index: {}]
  %s5 = inlined_call_operand.vmem [shape: f32[1,32], index: 5, kind: input, shape index: {}]
  %s6 = inlined_call_operand.<no memory space> [shape: f32[1], index: 6, kind: input, shape index: {}]
  %s7 = inlined_call_operand.hbm [shape: f32[8,128], index: 7, kind: output, shape index: {}]
  %s8 = sld [smem:[#allocation0]]
  $region38: #{tpu_custom_call.1} parent=0
    _
  %s10 = ssub.s32 1, %s8
  %s11 = scalar_select 0, %s10, %s8
  %12 = sst [smem:[#allocation2]] %s6
  $region1: #{tpu_custom_call.1} parent=0
    #allocation3 [shape = 'u8[4096]{0}', space=vmem, size = 0x1000, scoped, tag = 'output window, operand 0, single buffered']
    #allocation4 [shape = 's32[1]{0}', space=sflag, size = 0x4, scoped, tag = 'scoped memory for tpu_custom_call.1']
    %13 = vsyncpa [#allocation4], 0
    // Predicated region
    $region2: #{tpu_custom_call.1} parent=1 // pred_check
      _
    $region3: #{tpu_custom_call.1} parent=1 // pred_check_branch
      %15 = sbr.rel (0) target = $region5
    $region4: #{tpu_custom_call.1} parent=1 // pred_region
      _
    $region5: #{tpu_custom_call.1} parent=1 // pred_fallthru
      _
    // Predicated region
    $region6: #{tpu_custom_call.1} parent=1 // pred_check
      _
    $region7: #{tpu_custom_call.1} parent=1 // pred_check_branch
      %17 = sbr.rel (0) target = $region9
    $region8: #{tpu_custom_call.1} parent=1 // pred_region
      _
    $region9: #{tpu_custom_call.1} parent=1 // pred_fallthru
      _
    // Predicated region
    $region10: #{tpu_custom_call.1} parent=1 // pred_check
      _
    $region11: #{tpu_custom_call.1} parent=1 // pred_check_branch
      %19 = sbr.rel (0) target = $region13
    $region12: #{tpu_custom_call.1} parent=1 // pred_region
      _
    $region13: #{tpu_custom_call.1} parent=1 // pred_fallthru
      _
    // Predicated region
    $region14: #{tpu_custom_call.1} parent=1 // pred_check
      _
    $region15: #{tpu_custom_call.1} parent=1 // pred_check_branch
      %21 = sbr.rel (0) target = $region17
    $region16: #{tpu_custom_call.1} parent=1 // pred_region
      _
    $region17: #{tpu_custom_call.1} parent=1 // pred_fallthru
      _
    // Predicated region
    $region18: #{tpu_custom_call.1} parent=1 // pred_check
      _
    $region19: #{tpu_custom_call.1} parent=1 // pred_check_branch
      %23 = sbr.rel (0) target = $region21
    $region20: #{tpu_custom_call.1} parent=1 // pred_region
      _
    $region21: #{tpu_custom_call.1} parent=1 // pred_fallthru
      _
    // Predicated region
    $region22: #{tpu_custom_call.1} parent=1 // pred_check
      _
    $region23: #{tpu_custom_call.1} parent=1 // pred_check_branch
      %25 = sbr.rel (0) target = $region25
    $region24: #{tpu_custom_call.1} parent=1 // pred_region
      _
    $region25: #{tpu_custom_call.1} parent=1 // pred_fallthru
      _
    // Predicated region
    $region26: #{tpu_custom_call.1} parent=1 // pred_check
      _
    $region27: #{tpu_custom_call.1} parent=1 // pred_check_branch
      %27 = sbr.rel (0) target = $region29
    $region28: #{tpu_custom_call.1} parent=1 // pred_region
      _
    $region29: #{tpu_custom_call.1} parent=1 // pred_fallthru
      _
    %v29 = vld [vmem:[%s0] sm:$0xf]
    %v30 = vld [vmem:[%s0 + $0x4] sm:$0xf]
    %v31 = vld [vmem:[%s0 + $0x8] sm:$0xf]
    %v32 = vld [vmem:[%s0 + $0xc] sm:$0xf]
    %v33 = vld [vmem:[%s0 + $0x10] sm:$0xf]
    %v34 = vld [vmem:[%s0 + $0x14] sm:$0xf]
    %v35 = vld [vmem:[%s0 + $0x18] sm:$0xf]
    %v36 = vld [vmem:[%s0 + $0x1c] sm:$0xf]
    %v37 = vld [vmem:[%s0 + $0x20] sm:$0xf]
    %v38 = vld [vmem:[%s0 + $0x24] sm:$0xf]
    %v39 = vld [vmem:[%s0 + $0x28] sm:$0xf]
    %v40 = vld [vmem:[%s0 + $0x2c] sm:$0xf]
    %v41 = vld [vmem:[%s0 + $0x30] sm:$0xf]
    %v42 = vld [vmem:[%s0 + $0x34] sm:$0xf]
    %v43 = vld [vmem:[%s0 + $0x38] sm:$0xf]
    %v44 = vld [vmem:[%s0 + $0x3c] sm:$0xf]
    %v45 = vld [vmem:[%s0 + $0x40] sm:$0xf]
    %v46 = vld [vmem:[%s0 + $0x44] sm:$0xf]
    %v47 = vld [vmem:[%s0 + $0x48] sm:$0xf]
    %v48 = vld [vmem:[%s0 + $0x4c] sm:$0xf]
    %v49 = vld [vmem:[%s0 + $0x50] sm:$0xf]
    %v50 = vld [vmem:[%s0 + $0x54] sm:$0xf]
    %v51 = vld [vmem:[%s0 + $0x58] sm:$0xf]
    %v52 = vld [vmem:[%s0 + $0x5c] sm:$0xf]
    %v53 = vld [vmem:[%s0 + $0x60] sm:$0xf]
    %v54 = vld [vmem:[%s0 + $0x64] sm:$0xf]
    %v55 = vld [vmem:[%s0 + $0x68] sm:$0xf]
    %v56 = vld [vmem:[%s0 + $0x6c] sm:$0xf]
    %v57 = vld [vmem:[%s0 + $0x70] sm:$0xf]
    %v58 = vld [vmem:[%s0 + $0x74] sm:$0xf]
    %v59 = vld [vmem:[%s0 + $0x78] sm:$0xf]
    %v60 = vld [vmem:[%s0 + $0x7c] sm:$0xf]
    %v61 = vld [vmem:[%s0 + $0x80] sm:$0xf]
    %v62 = vld [vmem:[%s0 + $0x84] sm:$0xf]
    %v63 = vld [vmem:[%s0 + $0x88] sm:$0xf]
    %v64 = vld [vmem:[%s0 + $0x8c] sm:$0xf]
    %v65 = vld [vmem:[%s0 + $0x90] sm:$0xf]
    %v66 = vld [vmem:[%s0 + $0x94] sm:$0xf]
    %v67 = vld [vmem:[%s0 + $0x98] sm:$0xf]
    %v68 = vld [vmem:[%s0 + $0x9c] sm:$0xf]
    %v69 = vld [vmem:[%s0 + $0xa0] sm:$0xf]
    %v70 = vld [vmem:[%s0 + $0xa4] sm:$0xf]
    %v71 = vld [vmem:[%s0 + $0xa8] sm:$0xf]
    %v72 = vld [vmem:[%s0 + $0xac] sm:$0xf]
    %v73 = vld [vmem:[%s0 + $0xb0] sm:$0xf]
    %v74 = vld [vmem:[%s0 + $0xb4] sm:$0xf]
    %v75 = vld [vmem:[%s0 + $0xb8] sm:$0xf]
    %v76 = vld [vmem:[%s0 + $0xbc] sm:$0xf]
    %v77 = vld [vmem:[%s0 + $0xc0] sm:$0xf]
    %v78 = vld [vmem:[%s0 + $0xc4] sm:$0xf]
    %v79 = vld [vmem:[%s0 + $0xc8] sm:$0xf]
    %v80 = vld [vmem:[%s0 + $0xcc] sm:$0xf]
    %v81 = vld [vmem:[%s0 + $0xd0] sm:$0xf]
    %v82 = vld [vmem:[%s0 + $0xd4] sm:$0xf]
    %v83 = vld [vmem:[%s0 + $0xd8] sm:$0xf]
    %v84 = vld [vmem:[%s0 + $0xdc] sm:$0xf]
    %v85 = vld [vmem:[%s0 + $0xe0] sm:$0xf]
    %v86 = vld [vmem:[%s0 + $0xe4] sm:$0xf]
    %v87 = vld [vmem:[%s0 + $0xe8] sm:$0xf]
    %v88 = vld [vmem:[%s0 + $0xec] sm:$0xf]
    %v89 = vld [vmem:[%s0 + $0xf0] sm:$0xf]
    %v90 = vld [vmem:[%s0 + $0xf4] sm:$0xf]
    %v91 = vld [vmem:[%s0 + $0xf8] sm:$0xf]
    %v92 = vld [vmem:[%s0 + $0xfc] sm:$0xf]
    %v93 = vld [vmem:[%s0 + $0x100] sm:$0xf]
    %v94 = vld [vmem:[%s0 + $0x104] sm:$0xf]
    %v95 = vld [vmem:[%s0 + $0x108] sm:$0xf]
    %v96 = vld [vmem:[%s0 + $0x10c] sm:$0xf]
    %v97 = vld [vmem:[%s0 + $0x110] sm:$0xf]
    %v98 = vld [vmem:[%s0 + $0x114] sm:$0xf]
    %v99 = vld [vmem:[%s0 + $0x118] sm:$0xf]
    %v100 = vld [vmem:[%s0 + $0x11c] sm:$0xf]
    %v101 = vld [vmem:[%s0 + $0x120] sm:$0xf]
    %v102 = vld [vmem:[%s0 + $0x124] sm:$0xf]
    %v103 = vld [vmem:[%s0 + $0x128] sm:$0xf]
    %v104 = vld [vmem:[%s0 + $0x12c] sm:$0xf]
    %v105 = vld [vmem:[%s0 + $0x130] sm:$0xf]
    %v106 = vld [vmem:[%s0 + $0x134] sm:$0xf]
    %v107 = vld [vmem:[%s0 + $0x138] sm:$0xf]
    %v108 = vld [vmem:[%s0 + $0x13c] sm:$0xf]
    %v109 = vld [vmem:[%s0 + $0x140] sm:$0xf]
    %v110 = vld [vmem:[%s0 + $0x144] sm:$0xf]
    %v111 = vld [vmem:[%s0 + $0x148] sm:$0xf]
    %v112 = vld [vmem:[%s0 + $0x14c] sm:$0xf]
    %v113 = vld [vmem:[%s0 + $0x150] sm:$0xf]
    %v114 = vld [vmem:[%s0 + $0x154] sm:$0xf]
    %v115 = vld [vmem:[%s0 + $0x158] sm:$0xf]
    %v116 = vld [vmem:[%s0 + $0x15c] sm:$0xf]
    %v117 = vld [vmem:[%s0 + $0x160] sm:$0xf]
    %v118 = vld [vmem:[%s0 + $0x164] sm:$0xf]
    %v119 = vld [vmem:[%s0 + $0x168] sm:$0xf]
    %v120 = vld [vmem:[%s0 + $0x16c] sm:$0xf]
    %v121 = vld [vmem:[%s0 + $0x170] sm:$0xf]
    %v122 = vld [vmem:[%s0 + $0x174] sm:$0xf]
    %v123 = vld [vmem:[%s0 + $0x178] sm:$0xf]
    %v124 = vld [vmem:[%s0 + $0x17c] sm:$0xf]
    %v125 = vld [vmem:[%s0 + $0x180] sm:$0xf]
    %v126 = vld [vmem:[%s0 + $0x184] sm:$0xf]
    %v127 = vld [vmem:[%s0 + $0x188] sm:$0xf]
    %v128 = vld [vmem:[%s0 + $0x18c] sm:$0xf]
    %v129 = vld [vmem:[%s0 + $0x190] sm:$0xf]
    %v130 = vld [vmem:[%s0 + $0x194] sm:$0xf]
    %v131 = vld [vmem:[%s0 + $0x198] sm:$0xf]
    %v132 = vld [vmem:[%s0 + $0x19c] sm:$0xf]
    %v133 = vld [vmem:[%s0 + $0x1a0] sm:$0xf]
    %v134 = vld [vmem:[%s0 + $0x1a4] sm:$0xf]
    %v135 = vld [vmem:[%s0 + $0x1a8] sm:$0xf]
    %v136 = vld [vmem:[%s0 + $0x1ac] sm:$0xf]
    %v137 = vld [vmem:[%s0 + $0x1b0] sm:$0xf]
    %v138 = vld [vmem:[%s0 + $0x1b4] sm:$0xf]
    %v139 = vld [vmem:[%s0 + $0x1b8] sm:$0xf]
    %v140 = vld [vmem:[%s0 + $0x1bc] sm:$0xf]
    %v141 = vld [vmem:[%s0 + $0x1c0] sm:$0xf]
    %v142 = vld [vmem:[%s0 + $0x1c4] sm:$0xf]
    %v143 = vld [vmem:[%s0 + $0x1c8] sm:$0xf]
    %v144 = vld [vmem:[%s0 + $0x1cc] sm:$0xf]
    %v145 = vld [vmem:[%s0 + $0x1d0] sm:$0xf]
    %v146 = vld [vmem:[%s0 + $0x1d4] sm:$0xf]
    %v147 = vld [vmem:[%s0 + $0x1d8] sm:$0xf]
    %v148 = vld [vmem:[%s0 + $0x1dc] sm:$0xf]
    %v149 = vld [vmem:[%s0 + $0x1e0] sm:$0xf]
    %v150 = vld [vmem:[%s0 + $0x1e4] sm:$0xf]
    %v151 = vld [vmem:[%s0 + $0x1e8] sm:$0xf]
    %v152 = vld [vmem:[%s0 + $0x1ec] sm:$0xf]
    %v153 = vld [vmem:[%s0 + $0x1f0] sm:$0xf]
    %v154 = vld [vmem:[%s0 + $0x1f4] sm:$0xf]
    %v155 = vld [vmem:[%s0 + $0x1f8] sm:$0xf]
    %v156 = vld [vmem:[%s0 + $0x1fc] sm:$0xf]
    %v157 = vld [vmem:[%s2] sm:$0xf]
    %v158 = vld [vmem:[%s2 + $0x4] sm:$0xf]
    %v159 = vld [vmem:[%s2 + $0x8] sm:$0xf]
    %v160 = vld [vmem:[%s2 + $0xc] sm:$0xf]
    %v161 = vld [vmem:[%s1] sm:$0xf]
    %v162 = vld [vmem:[%s1 + $0x4] sm:$0xf]
    %v163 = vld [vmem:[%s1 + $0x8] sm:$0xf]
    %v164 = vld [vmem:[%s1 + $0xc] sm:$0xf]
    %v165 = vld [vmem:[%s1 + $0x10] sm:$0xf]
    %v166 = vld [vmem:[%s1 + $0x14] sm:$0xf]
    %v167 = vld [vmem:[%s1 + $0x18] sm:$0xf]
    %v168 = vld [vmem:[%s1 + $0x1c] sm:$0xf]
    %v169 = vld [vmem:[%s1 + $0x20] sm:$0xf]
    %v170 = vld [vmem:[%s1 + $0x24] sm:$0xf]
    %v171 = vld [vmem:[%s1 + $0x28] sm:$0xf]
    %v172 = vld [vmem:[%s1 + $0x2c] sm:$0xf]
    %v173 = vld [vmem:[%s1 + $0x30] sm:$0xf]
    %v174 = vld [vmem:[%s1 + $0x34] sm:$0xf]
    %v175 = vld [vmem:[%s1 + $0x38] sm:$0xf]
    %v176 = vld [vmem:[%s1 + $0x3c] sm:$0xf]
    %v177 = vld [vmem:[%s1 + $0x40] sm:$0xf]
    %v178 = vld [vmem:[%s1 + $0x44] sm:$0xf]
    %v179 = vld [vmem:[%s1 + $0x48] sm:$0xf]
    %v180 = vld [vmem:[%s1 + $0x4c] sm:$0xf]
    %v181 = vld [vmem:[%s1 + $0x50] sm:$0xf]
    %v182 = vld [vmem:[%s1 + $0x54] sm:$0xf]
    %v183 = vld [vmem:[%s1 + $0x58] sm:$0xf]
    %v184 = vld [vmem:[%s1 + $0x5c] sm:$0xf]
    %v185 = vld [vmem:[%s1 + $0x60] sm:$0xf]
    %v186 = vld [vmem:[%s1 + $0x64] sm:$0xf]
    %v187 = vld [vmem:[%s1 + $0x68] sm:$0xf]
    %v188 = vld [vmem:[%s1 + $0x6c] sm:$0xf]
    %v189 = vld [vmem:[%s1 + $0x70] sm:$0xf]
    %v190 = vld [vmem:[%s1 + $0x74] sm:$0xf]
    %v191 = vld [vmem:[%s1 + $0x78] sm:$0xf]
    %v192 = vld [vmem:[%s1 + $0x7c] sm:$0xf]
    %v193 = vld [vmem:[%s1 + $0x80] sm:$0xf]
    %v194 = vld [vmem:[%s1 + $0x84] sm:$0xf]
    %v195 = vld [vmem:[%s1 + $0x88] sm:$0xf]
    %v196 = vld [vmem:[%s1 + $0x8c] sm:$0xf]
    %v197 = vld [vmem:[%s1 + $0x90] sm:$0xf]
    %v198 = vld [vmem:[%s1 + $0x94] sm:$0xf]
    %v199 = vld [vmem:[%s1 + $0x98] sm:$0xf]
    %v200 = vld [vmem:[%s1 + $0x9c] sm:$0xf]
    %v201 = vld [vmem:[%s1 + $0xa0] sm:$0xf]
    %v202 = vld [vmem:[%s1 + $0xa4] sm:$0xf]
    %v203 = vld [vmem:[%s1 + $0xa8] sm:$0xf]
    %v204 = vld [vmem:[%s1 + $0xac] sm:$0xf]
    %v205 = vld [vmem:[%s1 + $0xb0] sm:$0xf]
    %v206 = vld [vmem:[%s1 + $0xb4] sm:$0xf]
    %v207 = vld [vmem:[%s1 + $0xb8] sm:$0xf]
    %v208 = vld [vmem:[%s1 + $0xbc] sm:$0xf]
    %v209 = vld [vmem:[%s1 + $0xc0] sm:$0xf]
    %v210 = vld [vmem:[%s1 + $0xc4] sm:$0xf]
    %v211 = vld [vmem:[%s1 + $0xc8] sm:$0xf]
    %v212 = vld [vmem:[%s1 + $0xcc] sm:$0xf]
    %v213 = vld [vmem:[%s1 + $0xd0] sm:$0xf]
    %v214 = vld [vmem:[%s1 + $0xd4] sm:$0xf]
    %v215 = vld [vmem:[%s1 + $0xd8] sm:$0xf]
    %v216 = vld [vmem:[%s1 + $0xdc] sm:$0xf]
    %v217 = vld [vmem:[%s1 + $0xe0] sm:$0xf]
    %v218 = vld [vmem:[%s1 + $0xe4] sm:$0xf]
    %v219 = vld [vmem:[%s1 + $0xe8] sm:$0xf]
    %v220 = vld [vmem:[%s1 + $0xec] sm:$0xf]
    %v221 = vld [vmem:[%s1 + $0xf0] sm:$0xf]
    %v222 = vld [vmem:[%s1 + $0xf4] sm:$0xf]
    %v223 = vld [vmem:[%s1 + $0xf8] sm:$0xf]
    %v224 = vld [vmem:[%s1 + $0xfc] sm:$0xf]
    %v225 = vld [vmem:[%s1 + $0x100] sm:$0xf]
    %v226 = vld [vmem:[%s1 + $0x104] sm:$0xf]
    %v227 = vld [vmem:[%s1 + $0x108] sm:$0xf]
    %v228 = vld [vmem:[%s1 + $0x10c] sm:$0xf]
    %v229 = vld [vmem:[%s1 + $0x110] sm:$0xf]
    %v230 = vld [vmem:[%s1 + $0x114] sm:$0xf]
    %v231 = vld [vmem:[%s1 + $0x118] sm:$0xf]
    %v232 = vld [vmem:[%s1 + $0x11c] sm:$0xf]
    %v233 = vld [vmem:[%s1 + $0x120] sm:$0xf]
    %v234 = vld [vmem:[%s1 + $0x124] sm:$0xf]
    %v235 = vld [vmem:[%s1 + $0x128] sm:$0xf]
    %v236 = vld [vmem:[%s1 + $0x12c] sm:$0xf]
    %v237 = vld [vmem:[%s1 + $0x130] sm:$0xf]
    %v238 = vld [vmem:[%s1 + $0x134] sm:$0xf]
    %v239 = vld [vmem:[%s1 + $0x138] sm:$0xf]
    %v240 = vld [vmem:[%s1 + $0x13c] sm:$0xf]
    %v241 = vld [vmem:[%s1 + $0x140] sm:$0xf]
    %v242 = vld [vmem:[%s1 + $0x144] sm:$0xf]
    %v243 = vld [vmem:[%s1 + $0x148] sm:$0xf]
    %v244 = vld [vmem:[%s1 + $0x14c] sm:$0xf]
    %v245 = vld [vmem:[%s1 + $0x150] sm:$0xf]
    %v246 = vld [vmem:[%s1 + $0x154] sm:$0xf]
    %v247 = vld [vmem:[%s1 + $0x158] sm:$0xf]
    %v248 = vld [vmem:[%s1 + $0x15c] sm:$0xf]
    %v249 = vld [vmem:[%s1 + $0x160] sm:$0xf]
    %v250 = vld [vmem:[%s1 + $0x164] sm:$0xf]
    %v251 = vld [vmem:[%s1 + $0x168] sm:$0xf]
    %v252 = vld [vmem:[%s1 + $0x16c] sm:$0xf]
    %v253 = vld [vmem:[%s1 + $0x170] sm:$0xf]
    %v254 = vld [vmem:[%s1 + $0x174] sm:$0xf]
    %v255 = vld [vmem:[%s1 + $0x178] sm:$0xf]
    %v256 = vld [vmem:[%s1 + $0x17c] sm:$0xf]
    %v257 = vld [vmem:[%s1 + $0x180] sm:$0xf]
    %v258 = vld [vmem:[%s1 + $0x184] sm:$0xf]
    %v259 = vld [vmem:[%s1 + $0x188] sm:$0xf]
    %v260 = vld [vmem:[%s1 + $0x18c] sm:$0xf]
    %v261 = vld [vmem:[%s1 + $0x190] sm:$0xf]
    %v262 = vld [vmem:[%s1 + $0x194] sm:$0xf]
    %v263 = vld [vmem:[%s1 + $0x198] sm:$0xf]
    %v264 = vld [vmem:[%s1 + $0x19c] sm:$0xf]
    %v265 = vld [vmem:[%s1 + $0x1a0] sm:$0xf]
    %v266 = vld [vmem:[%s1 + $0x1a4] sm:$0xf]
    %v267 = vld [vmem:[%s1 + $0x1a8] sm:$0xf]
    %v268 = vld [vmem:[%s1 + $0x1ac] sm:$0xf]
    %v269 = vld [vmem:[%s1 + $0x1b0] sm:$0xf]
    %v270 = vld [vmem:[%s1 + $0x1b4] sm:$0xf]
    %v271 = vld [vmem:[%s1 + $0x1b8] sm:$0xf]
    %v272 = vld [vmem:[%s1 + $0x1bc] sm:$0xf]
    %v273 = vld [vmem:[%s1 + $0x1c0] sm:$0xf]
    %v274 = vld [vmem:[%s1 + $0x1c4] sm:$0xf]
    %v275 = vld [vmem:[%s1 + $0x1c8] sm:$0xf]
    %v276 = vld [vmem:[%s1 + $0x1cc] sm:$0xf]
    %v277 = vld [vmem:[%s1 + $0x1d0] sm:$0xf]
    %v278 = vld [vmem:[%s1 + $0x1d4] sm:$0xf]
    %v279 = vld [vmem:[%s1 + $0x1d8] sm:$0xf]
    %v280 = vld [vmem:[%s1 + $0x1dc] sm:$0xf]
    %v281 = vld [vmem:[%s1 + $0x1e0] sm:$0xf]
    %v282 = vld [vmem:[%s1 + $0x1e4] sm:$0xf]
    %v283 = vld [vmem:[%s1 + $0x1e8] sm:$0xf]
    %v284 = vld [vmem:[%s1 + $0x1ec] sm:$0xf]
    %v285 = vld [vmem:[%s1 + $0x1f0] sm:$0xf]
    %v286 = vld [vmem:[%s1 + $0x1f4] sm:$0xf]
    %v287 = vld [vmem:[%s1 + $0x1f8] sm:$0xf]
    %v288 = vld [vmem:[%s1 + $0x1fc] sm:$0xf]
    %v289 = vld [vmem:[%s3] sm:$0xf]
    %v290 = vld [vmem:[%s3 + $0x4] sm:$0xf]
    %v291 = vld [vmem:[%s3 + $0x8] sm:$0xf]
    %v292 = vld [vmem:[%s3 + $0xc] sm:$0xf]
    %v421 = vunpack.c.l.b16 %v161
    %v422 = vunpack.c.l.b16 %v162
    %v423 = vunpack.c.l.b16 %v163
    %v424 = vunpack.c.l.b16 %v164
    %v425 = vunpack.c.l.b16 %v165
    %v426 = vunpack.c.l.b16 %v166
    %v427 = vunpack.c.l.b16 %v167
    %v428 = vunpack.c.l.b16 %v168
    %v429 = vunpack.c.l.b16 %v169
    %v430 = vunpack.c.l.b16 %v170
    %v431 = vunpack.c.l.b16 %v171
    %v432 = vunpack.c.l.b16 %v172
    %v433 = vunpack.c.l.b16 %v173
    %v434 = vunpack.c.l.b16 %v174
    %v435 = vunpack.c.l.b16 %v175
    %v436 = vunpack.c.l.b16 %v176
    %v437 = vunpack.c.l.b16 %v177
    %v438 = vunpack.c.l.b16 %v178
    %v439 = vunpack.c.l.b16 %v179
    %v440 = vunpack.c.l.b16 %v180
    %v441 = vunpack.c.l.b16 %v181
    %v442 = vunpack.c.l.b16 %v182
    %v443 = vunpack.c.l.b16 %v183
    %v444 = vunpack.c.l.b16 %v184
    %v445 = vunpack.c.l.b16 %v185
    %v446 = vunpack.c.l.b16 %v186
    %v447 = vunpack.c.l.b16 %v187
    %v448 = vunpack.c.l.b16 %v188
    %v449 = vunpack.c.l.b16 %v189
    %v450 = vunpack.c.l.b16 %v190
    %v451 = vunpack.c.l.b16 %v191
    %v452 = vunpack.c.l.b16 %v192
    %v453 = vunpack.c.l.b16 %v193
    %v454 = vunpack.c.l.b16 %v194
    %v455 = vunpack.c.l.b16 %v195
    %v456 = vunpack.c.l.b16 %v196
    %v457 = vunpack.c.l.b16 %v197
    %v458 = vunpack.c.l.b16 %v198
    %v459 = vunpack.c.l.b16 %v199
    %v460 = vunpack.c.l.b16 %v200
    %v461 = vunpack.c.l.b16 %v201
    %v462 = vunpack.c.l.b16 %v202
    %v463 = vunpack.c.l.b16 %v203
    %v464 = vunpack.c.l.b16 %v204
    %v465 = vunpack.c.l.b16 %v205
    %v466 = vunpack.c.l.b16 %v206
    %v467 = vunpack.c.l.b16 %v207
    %v468 = vunpack.c.l.b16 %v208
    %v469 = vunpack.c.l.b16 %v209
    %v470 = vunpack.c.l.b16 %v210
    %v471 = vunpack.c.l.b16 %v211
    %v472 = vunpack.c.l.b16 %v212
    %v473 = vunpack.c.l.b16 %v213
    %v474 = vunpack.c.l.b16 %v214
    %v475 = vunpack.c.l.b16 %v215
    %v476 = vunpack.c.l.b16 %v216
    %v477 = vunpack.c.l.b16 %v217
    %v478 = vunpack.c.l.b16 %v218
    %v479 = vunpack.c.l.b16 %v219
    %v480 = vunpack.c.l.b16 %v220
    %v481 = vunpack.c.l.b16 %v221
    %v482 = vunpack.c.l.b16 %v222
    %v483 = vunpack.c.l.b16 %v223
    %v484 = vunpack.c.l.b16 %v224
    %v485 = vunpack.c.l.b16 %v225
    %v486 = vunpack.c.l.b16 %v226
    %v487 = vunpack.c.l.b16 %v227
    %v488 = vunpack.c.l.b16 %v228
    %v489 = vunpack.c.l.b16 %v229
    %v490 = vunpack.c.l.b16 %v230
    %v491 = vunpack.c.l.b16 %v231
    %v492 = vunpack.c.l.b16 %v232
    %v493 = vunpack.c.l.b16 %v233
    %v494 = vunpack.c.l.b16 %v234
    %v495 = vunpack.c.l.b16 %v235
    %v496 = vunpack.c.l.b16 %v236
    %v497 = vunpack.c.l.b16 %v237
    %v498 = vunpack.c.l.b16 %v238
    %v499 = vunpack.c.l.b16 %v239
    %v500 = vunpack.c.l.b16 %v240
    %v501 = vunpack.c.l.b16 %v241
    %v502 = vunpack.c.l.b16 %v242
    %v503 = vunpack.c.l.b16 %v243
    %v504 = vunpack.c.l.b16 %v244
    %v505 = vunpack.c.l.b16 %v245
    %v506 = vunpack.c.l.b16 %v246
    %v507 = vunpack.c.l.b16 %v247
    %v508 = vunpack.c.l.b16 %v248
    %v509 = vunpack.c.l.b16 %v249
    %v510 = vunpack.c.l.b16 %v250
    %v511 = vunpack.c.l.b16 %v251
    %v512 = vunpack.c.l.b16 %v252
    %v513 = vunpack.c.l.b16 %v253
    %v514 = vunpack.c.l.b16 %v254
    %v515 = vunpack.c.l.b16 %v255
    %v516 = vunpack.c.l.b16 %v256
    %v517 = vunpack.c.l.b16 %v257
    %v518 = vunpack.c.l.b16 %v258
    %v519 = vunpack.c.l.b16 %v259
    %v520 = vunpack.c.l.b16 %v260
    %v521 = vunpack.c.l.b16 %v261
    %v522 = vunpack.c.l.b16 %v262
    %v523 = vunpack.c.l.b16 %v263
    %v524 = vunpack.c.l.b16 %v264
    %v525 = vunpack.c.l.b16 %v265
    %v526 = vunpack.c.l.b16 %v266
    %v527 = vunpack.c.l.b16 %v267
    %v528 = vunpack.c.l.b16 %v268
    %v529 = vunpack.c.l.b16 %v269
    %v530 = vunpack.c.l.b16 %v270
    %v531 = vunpack.c.l.b16 %v271
    %v532 = vunpack.c.l.b16 %v272
    %v533 = vunpack.c.l.b16 %v273
    %v534 = vunpack.c.l.b16 %v274
    %v535 = vunpack.c.l.b16 %v275
    %v536 = vunpack.c.l.b16 %v276
    %v537 = vunpack.c.l.b16 %v277
    %v538 = vunpack.c.l.b16 %v278
    %v539 = vunpack.c.l.b16 %v279
    %v540 = vunpack.c.l.b16 %v280
    %v541 = vunpack.c.l.b16 %v281
    %v542 = vunpack.c.l.b16 %v282
    %v543 = vunpack.c.l.b16 %v283
    %v544 = vunpack.c.l.b16 %v284
    %v545 = vunpack.c.l.b16 %v285
    %v546 = vunpack.c.l.b16 %v286
    %v547 = vunpack.c.l.b16 %v287
    %v548 = vunpack.c.l.b16 %v288
    %v549 = vpack.c.b16 %v422, %v421
    %v550 = vpack.c.b16 %v424, %v423
    %v551 = vpack.c.b16 %v426, %v425
    %v552 = vpack.c.b16 %v428, %v427
    %v553 = vpack.c.b16 %v430, %v429
    %v554 = vpack.c.b16 %v432, %v431
    %v555 = vpack.c.b16 %v434, %v433
    %v556 = vpack.c.b16 %v436, %v435
    %v557 = vpack.c.b16 %v438, %v437
    %v558 = vpack.c.b16 %v440, %v439
    %v559 = vpack.c.b16 %v442, %v441
    %v560 = vpack.c.b16 %v444, %v443
    %v561 = vpack.c.b16 %v446, %v445
    %v562 = vpack.c.b16 %v448, %v447
    %v563 = vpack.c.b16 %v450, %v449
    %v564 = vpack.c.b16 %v452, %v451
    %v565 = vpack.c.b16 %v454, %v453
    %v566 = vpack.c.b16 %v456, %v455
    %v567 = vpack.c.b16 %v458, %v457
    %v568 = vpack.c.b16 %v460, %v459
    %v569 = vpack.c.b16 %v462, %v461
    %v570 = vpack.c.b16 %v464, %v463
    %v571 = vpack.c.b16 %v466, %v465
    %v572 = vpack.c.b16 %v468, %v467
    %v573 = vpack.c.b16 %v470, %v469
    %v574 = vpack.c.b16 %v472, %v471
    %v575 = vpack.c.b16 %v474, %v473
    %v576 = vpack.c.b16 %v476, %v475
    %v577 = vpack.c.b16 %v478, %v477
    %v578 = vpack.c.b16 %v480, %v479
    %v579 = vpack.c.b16 %v482, %v481
    %v580 = vpack.c.b16 %v484, %v483
    %v581 = vpack.c.b16 %v486, %v485
    %v582 = vpack.c.b16 %v488, %v487
    %v583 = vpack.c.b16 %v490, %v489
    %v584 = vpack.c.b16 %v492, %v491
    %v585 = vpack.c.b16 %v494, %v493
    %v586 = vpack.c.b16 %v496, %v495
    %v587 = vpack.c.b16 %v498, %v497
    %v588 = vpack.c.b16 %v500, %v499
    %v589 = vpack.c.b16 %v502, %v501
    %v590 = vpack.c.b16 %v504, %v503
    %v591 = vpack.c.b16 %v506, %v505
    %v592 = vpack.c.b16 %v508, %v507
    %v593 = vpack.c.b16 %v510, %v509
    %v594 = vpack.c.b16 %v512, %v511
    %v595 = vpack.c.b16 %v514, %v513
    %v596 = vpack.c.b16 %v516, %v515
    %v597 = vpack.c.b16 %v518, %v517
    %v598 = vpack.c.b16 %v520, %v519
    %v599 = vpack.c.b16 %v522, %v521
    %v600 = vpack.c.b16 %v524, %v523
    %v601 = vpack.c.b16 %v526, %v525
    %v602 = vpack.c.b16 %v528, %v527
    %v603 = vpack.c.b16 %v530, %v529
    %v604 = vpack.c.b16 %v532, %v531
    %v605 = vpack.c.b16 %v534, %v533
    %v606 = vpack.c.b16 %v536, %v535
    %v607 = vpack.c.b16 %v538, %v537
    %v608 = vpack.c.b16 %v540, %v539
    %v609 = vpack.c.b16 %v542, %v541
    %v610 = vpack.c.b16 %v544, %v543
    %v611 = vpack.c.b16 %v546, %v545
    %v612 = vpack.c.b16 %v548, %v547
    %v617 = vunpack.c.l.b16 %v289
    %v618 = vunpack.c.l.b16 %v290
    %v619 = vunpack.c.l.b16 %v291
    %v620 = vunpack.c.l.b16 %v292
    %v621 = vpack.c.b16 %v618, %v617
    %v622 = vpack.c.b16 %v620, %v619
    %vm625 = vcmask 261120
    %v627 = vsel %vm625, %v549, 0
    %v630 = vsel %vm625, %v550, 0
    %v633 = vsel %vm625, %v551, 0
    %v636 = vsel %vm625, %v552, 0
    %v639 = vsel %vm625, %v553, 0
    %v642 = vsel %vm625, %v554, 0
    %v645 = vsel %vm625, %v555, 0
    %v648 = vsel %vm625, %v556, 0
    %v651 = vsel %vm625, %v557, 0
    %v654 = vsel %vm625, %v558, 0
    %v657 = vsel %vm625, %v559, 0
    %v660 = vsel %vm625, %v560, 0
    %v663 = vsel %vm625, %v561, 0
    %v666 = vsel %vm625, %v562, 0
    %v669 = vsel %vm625, %v563, 0
    %v672 = vsel %vm625, %v564, 0
    %v675 = vsel %vm625, %v565, 0
    %v678 = vsel %vm625, %v566, 0
    %v681 = vsel %vm625, %v567, 0
    %v684 = vsel %vm625, %v568, 0
    %v687 = vsel %vm625, %v569, 0
    %v690 = vsel %vm625, %v570, 0
    %v693 = vsel %vm625, %v571, 0
    %v696 = vsel %vm625, %v572, 0
    %v699 = vsel %vm625, %v573, 0
    %v702 = vsel %vm625, %v574, 0
    %v705 = vsel %vm625, %v575, 0
    %v708 = vsel %vm625, %v576, 0
    %v711 = vsel %vm625, %v577, 0
    %v714 = vsel %vm625, %v578, 0
    %v717 = vsel %vm625, %v579, 0
    %v720 = vsel %vm625, %v580, 0
    %v723 = vsel %vm625, %v581, 0
    %v726 = vsel %vm625, %v582, 0
    %v729 = vsel %vm625, %v583, 0
    %v732 = vsel %vm625, %v584, 0
    %v735 = vsel %vm625, %v585, 0
    %v738 = vsel %vm625, %v586, 0
    %v741 = vsel %vm625, %v587, 0
    %v744 = vsel %vm625, %v588, 0
    %v747 = vsel %vm625, %v589, 0
    %v750 = vsel %vm625, %v590, 0
    %v753 = vsel %vm625, %v591, 0
    %v756 = vsel %vm625, %v592, 0
    %v759 = vsel %vm625, %v593, 0
    %v762 = vsel %vm625, %v594, 0
    %v765 = vsel %vm625, %v595, 0
    %v768 = vsel %vm625, %v596, 0
    %v771 = vsel %vm625, %v597, 0
    %v774 = vsel %vm625, %v598, 0
    %v777 = vsel %vm625, %v599, 0
    %v780 = vsel %vm625, %v600, 0
    %v783 = vsel %vm625, %v601, 0
    %v786 = vsel %vm625, %v602, 0
    %v789 = vsel %vm625, %v603, 0
    %v792 = vsel %vm625, %v604, 0
    %v795 = vsel %vm625, %v605, 0
    %v798 = vsel %vm625, %v606, 0
    %v801 = vsel %vm625, %v607, 0
    %v804 = vsel %vm625, %v608, 0
    %v807 = vsel %vm625, %v609, 0
    %v810 = vsel %vm625, %v610, 0
    %v813 = vsel %vm625, %v611, 0
    %v816 = vsel %vm625, %v612, 0
    %818 = vmatprep.subr.bf16.mxu0 0
    %819 = vmatpush1.bf16.msra.mxu0 %v621
    %820 = vmatprep.subr.bf16.mxu0 0
    %821 = vmatpush1.bf16.msra.mxu0 %v622
    %822 = vmatprep.subr.bf16.mxu0 0
    %823 = vmatpush1.bf16.msra.mxu0 0
    %824 = vmatprep.subr.bf16.mxu0 0
    %825 = vmatpush1.bf16.msra.mxu0 0
    %826 = vmatprep.subr.bf16.mxu0 0
    %827 = vmatpush1.bf16.msra.mxu0 0
    %828 = vmatprep.subr.bf16.mxu0 0
    %829 = vmatpush1.bf16.msra.mxu0 0
    %830 = vmatprep.subr.bf16.mxu0 0
    %831 = vmatpush1.bf16.msra.mxu0 0
    %832 = vmatprep.subr.bf16.mxu0 0
    %833 = vmatpush1.bf16.msra.mxu0 0
    %834 = vmatprep.subr.bf16.mxu0 0
    %835 = vmatpush1.bf16.msra.mxu0 0
    %836 = vmatprep.subr.bf16.mxu0 0
    %837 = vmatpush1.bf16.msra.mxu0 0
    %838 = vmatprep.subr.bf16.mxu0 0
    %839 = vmatpush1.bf16.msra.mxu0 0
    %840 = vmatprep.subr.bf16.mxu0 0
    %841 = vmatpush1.bf16.msra.mxu0 0
    %842 = vmatprep.subr.bf16.mxu0 0
    %843 = vmatpush1.bf16.msra.mxu0 0
    %844 = vmatprep.subr.bf16.mxu0 0
    %845 = vmatpush1.bf16.msra.mxu0 0
    %846 = vmatprep.subr.bf16.mxu0 0
    %847 = vmatpush1.bf16.msra.mxu0 0
    %848 = vmatprep.subr.bf16.mxu0 0
    %849 = vmatpush1.bf16.msra.mxu0 0
    %850 = vmatprep.mubr.bf16.mxu0 0
    %851 = vmatmul.mubr.bf16.gmra.mrb[0].mxu0 %v627
    %v852 = vpop.f32.mrb[0].mxu0
    %v853 = vadd.f32 0.0, %v852
    %v854 = vpop.f32.mrb[0].mxu0
    %v855 = vpop.f32.mrb[0].mxu0
    %v856 = vadd.f32 0.0, %v855
    %v857 = vpop.f32.mrb[0].mxu0
    %858 = vmatprep.mubr.bf16.mxu0 0
    %859 = vmatmul.mubr.bf16.gmra.mrb[0].mxu0 %v630
    %v860 = vpop.f32.mrb[0].mxu0
    %v861 = vadd.f32 0.0, %v860
    %v862 = vpop.f32.mrb[0].mxu0
    %v863 = vpop.f32.mrb[0].mxu0
    %v864 = vadd.f32 0.0, %v863
    %v865 = vpop.f32.mrb[0].mxu0
    %866 = vmatprep.mubr.bf16.mxu0 0
    %867 = vmatmul.mubr.bf16.gmra.mrb[0].mxu0 %v633
    %v868 = vpop.f32.mrb[0].mxu0
    %v869 = vadd.f32 0.0, %v868
    %v870 = vpop.f32.mrb[0].mxu0
    %v871 = vpop.f32.mrb[0].mxu0
    %v872 = vadd.f32 0.0, %v871
    %v873 = vpop.f32.mrb[0].mxu0
    %874 = vmatprep.mubr.bf16.mxu0 0
    %875 = vmatmul.mubr.bf16.gmra.mrb[0].mxu0 %v636
    %v876 = vpop.f32.mrb[0].mxu0
    %v877 = vadd.f32 0.0, %v876
    %v878 = vpop.f32.mrb[0].mxu0
    %v879 = vpop.f32.mrb[0].mxu0
    %v880 = vadd.f32 0.0, %v879
    %v881 = vpop.f32.mrb[0].mxu0
    %882 = vmatprep.mubr.bf16.mxu0 0
    %883 = vmatmul.mubr.bf16.gmra.mrb[0].mxu0 %v639
    %v884 = vpop.f32.mrb[0].mxu0
    %v885 = vadd.f32 0.0, %v884
    %v886 = vpop.f32.mrb[0].mxu0
    %v887 = vpop.f32.mrb[0].mxu0
    %v888 = vadd.f32 0.0, %v887
    %v889 = vpop.f32.mrb[0].mxu0
    %890 = vmatprep.mubr.bf16.mxu0 0
    %891 = vmatmul.mubr.bf16.gmra.mrb[0].mxu0 %v642
    %v892 = vpop.f32.mrb[0].mxu0
    %v893 = vadd.f32 0.0, %v892
    %v894 = vpop.f32.mrb[0].mxu0
    %v895 = vpop.f32.mrb[0].mxu0
    %v896 = vadd.f32 0.0, %v895
    %v897 = vpop.f32.mrb[0].mxu0
    %898 = vmatprep.mubr.bf16.mxu0 0
    %899 = vmatmul.mubr.bf16.gmra.mrb[0].mxu0 %v645
    %v900 = vpop.f32.mrb[0].mxu0
    %v901 = vadd.f32 0.0, %v900
    %v902 = vpop.f32.mrb[0].mxu0
    %v903 = vpop.f32.mrb[0].mxu0
    %v904 = vadd.f32 0.0, %v903
    %v905 = vpop.f32.mrb[0].mxu0
    %906 = vmatprep.mubr.bf16.mxu0 0
    %907 = vmatmul.mubr.bf16.gmra.mrb[0].mxu0 %v648
    %v908 = vpop.f32.mrb[0].mxu0
    %v909 = vadd.f32 0.0, %v908
    %v910 = vpop.f32.mrb[0].mxu0
    %v911 = vpop.f32.mrb[0].mxu0
    %v912 = vadd.f32 0.0, %v911
    %v913 = vpop.f32.mrb[0].mxu0
    %914 = vmatprep.mubr.bf16.mxu0 0
    %915 = vmatmul.mubr.bf16.gmra.mrb[0].mxu0 %v651
    %v916 = vpop.f32.mrb[0].mxu0
    %v917 = vadd.f32 0.0, %v916
    %v918 = vpop.f32.mrb[0].mxu0
    %v919 = vpop.f32.mrb[0].mxu0
    %v920 = vadd.f32 0.0, %v919
    %v921 = vpop.f32.mrb[0].mxu0
    %922 = vmatprep.mubr.bf16.mxu0 0
    %923 = vmatmul.mubr.bf16.gmra.mrb[0].mxu0 %v654
    %v924 = vpop.f32.mrb[0].mxu0
    %v925 = vadd.f32 0.0, %v924
    %v926 = vpop.f32.mrb[0].mxu0
    %v927 = vpop.f32.mrb[0].mxu0
    %v928 = vadd.f32 0.0, %v927
    %v929 = vpop.f32.mrb[0].mxu0
    %930 = vmatprep.mubr.bf16.mxu0 0
    %931 = vmatmul.mubr.bf16.gmra.mrb[0].mxu0 %v657
    %v932 = vpop.f32.mrb[0].mxu0
    %v933 = vadd.f32 0.0, %v932
    %v934 = vpop.f32.mrb[0].mxu0
    %v935 = vpop.f32.mrb[0].mxu0
    %v936 = vadd.f32 0.0, %v935
    %v937 = vpop.f32.mrb[0].mxu0
    %938 = vmatprep.mubr.bf16.mxu0 0
    %939 = vmatmul.mubr.bf16.gmra.mrb[0].mxu0 %v660
    %v940 = vpop.f32.mrb[0].mxu0
    %v941 = vadd.f32 0.0, %v940
    %v942 = vpop.f32.mrb[0].mxu0
    %v943 = vpop.f32.mrb[0].mxu0
    %v944 = vadd.f32 0.0, %v943
    %v945 = vpop.f32.mrb[0].mxu0
    %946 = vmatprep.mubr.bf16.mxu0 0
    %947 = vmatmul.mubr.bf16.gmra.mrb[0].mxu0 %v663
    %v948 = vpop.f32.mrb[0].mxu0
    %v949 = vadd.f32 0.0, %v948
    %v950 = vpop.f32.mrb[0].mxu0
    %v951 = vpop.f32.mrb[0].mxu0
    %v952 = vadd.f32 0.0, %v951
    %v953 = vpop.f32.mrb[0].mxu0
    %954 = vmatprep.mubr.bf16.mxu0 0
    %955 = vmatmul.mubr.bf16.gmra.mrb[0].mxu0 %v666
    %v956 = vpop.f32.mrb[0].mxu0
    %v957 = vadd.f32 0.0, %v956
    %v958 = vpop.f32.mrb[0].mxu0
    %v959 = vpop.f32.mrb[0].mxu0
    %v960 = vadd.f32 0.0, %v959
    %v961 = vpop.f32.mrb[0].mxu0
    %962 = vmatprep.mubr.bf16.mxu0 0
    %963 = vmatmul.mubr.bf16.gmra.mrb[0].mxu0 %v669
    %v964 = vpop.f32.mrb[0].mxu0
    %v965 = vadd.f32 0.0, %v964
    %v966 = vpop.f32.mrb[0].mxu0
    %v967 = vpop.f32.mrb[0].mxu0
    %v968 = vadd.f32 0.0, %v967
    %v969 = vpop.f32.mrb[0].mxu0
    %970 = vmatprep.mubr.bf16.mxu0 0
    %971 = vmatmul.mubr.bf16.gmra.mrb[0].mxu0 %v672
    %v972 = vpop.f32.mrb[0].mxu0
    %v973 = vadd.f32 0.0, %v972
    %v974 = vpop.f32.mrb[0].mxu0
    %v975 = vpop.f32.mrb[0].mxu0
    %v976 = vadd.f32 0.0, %v975
    %v977 = vpop.f32.mrb[0].mxu0
    %978 = vmatprep.mubr.bf16.mxu0 0
    %979 = vmatmul.mubr.bf16.gmra.mrb[0].mxu0 %v675
    %v980 = vpop.f32.mrb[0].mxu0
    %v981 = vadd.f32 0.0, %v980
    %v982 = vpop.f32.mrb[0].mxu0
    %v983 = vpop.f32.mrb[0].mxu0
    %v984 = vadd.f32 0.0, %v983
    %v985 = vpop.f32.mrb[0].mxu0
    %986 = vmatprep.mubr.bf16.mxu0 0
    %987 = vmatmul.mubr.bf16.gmra.mrb[0].mxu0 %v678
    %v988 = vpop.f32.mrb[0].mxu0
    %v989 = vadd.f32 0.0, %v988
    %v990 = vpop.f32.mrb[0].mxu0
    %v991 = vpop.f32.mrb[0].mxu0
    %v992 = vadd.f32 0.0, %v991
    %v993 = vpop.f32.mrb[0].mxu0
    %994 = vmatprep.mubr.bf16.mxu0 0
    %995 = vmatmul.mubr.bf16.gmra.mrb[0].mxu0 %v681
    %v996 = vpop.f32.mrb[0].mxu0
    %v997 = vadd.f32 0.0, %v996
    %v998 = vpop.f32.mrb[0].mxu0
    %v999 = vpop.f32.mrb[0].mxu0
    %v1000 = vadd.f32 0.0, %v999
    %v1001 = vpop.f32.mrb[0].mxu0
    %1002 = vmatprep.mubr.bf16.mxu0 0
    %1003 = vmatmul.mubr.bf16.gmra.mrb[0].mxu0 %v684
    %v1004 = vpop.f32.mrb[0].mxu0
    %v1005 = vadd.f32 0.0, %v1004
    %v1006 = vpop.f32.mrb[0].mxu0
    %v1007 = vpop.f32.mrb[0].mxu0
    %v1008 = vadd.f32 0.0, %v1007
    %v1009 = vpop.f32.mrb[0].mxu0
    %1010 = vmatprep.mubr.bf16.mxu0 0
    %1011 = vmatmul.mubr.bf16.gmra.mrb[0].mxu0 %v687
    %v1012 = vpop.f32.mrb[0].mxu0
    %v1013 = vadd.f32 0.0, %v1012
    %v1014 = vpop.f32.mrb[0].mxu0
    %v1015 = vpop.f32.mrb[0].mxu0
    %v1016 = vadd.f32 0.0, %v1015
    %v1017 = vpop.f32.mrb[0].mxu0
    %1018 = vmatprep.mubr.bf16.mxu0 0
    %1019 = vmatmul.mubr.bf16.gmra.mrb[0].mxu0 %v690
    %v1020 = vpop.f32.mrb[0].mxu0
    %v1021 = vadd.f32 0.0, %v1020
    %v1022 = vpop.f32.mrb[0].mxu0
    %v1023 = vpop.f32.mrb[0].mxu0
    %v1024 = vadd.f32 0.0, %v1023
    %v1025 = vpop.f32.mrb[0].mxu0
    %1026 = vmatprep.mubr.bf16.mxu0 0
    %1027 = vmatmul.mubr.bf16.gmra.mrb[0].mxu0 %v693
    %v1028 = vpop.f32.mrb[0].mxu0
    %v1029 = vadd.f32 0.0, %v1028
    %v1030 = vpop.f32.mrb[0].mxu0
    %v1031 = vpop.f32.mrb[0].mxu0
    %v1032 = vadd.f32 0.0, %v1031
    %v1033 = vpop.f32.mrb[0].mxu0
    %1034 = vmatprep.mubr.bf16.mxu0 0
    %1035 = vmatmul.mubr.bf16.gmra.mrb[0].mxu0 %v696
    %v1036 = vpop.f32.mrb[0].mxu0
    %v1037 = vadd.f32 0.0, %v1036
    %v1038 = vpop.f32.mrb[0].mxu0
    %v1039 = vpop.f32.mrb[0].mxu0
    %v1040 = vadd.f32 0.0, %v1039
    %v1041 = vpop.f32.mrb[0].mxu0
    %1042 = vmatprep.mubr.bf16.mxu0 0
    %1043 = vmatmul.mubr.bf16.gmra.mrb[0].mxu0 %v699
    %v1044 = vpop.f32.mrb[0].mxu0
    %v1045 = vadd.f32 0.0, %v1044
    %v1046 = vpop.f32.mrb[0].mxu0
    %v1047 = vpop.f32.mrb[0].mxu0
    %v1048 = vadd.f32 0.0, %v1047
    %v1049 = vpop.f32.mrb[0].mxu0
    %1050 = vmatprep.mubr.bf16.mxu0 0
    %1051 = vmatmul.mubr.bf16.gmra.mrb[0].mxu0 %v702
    %v1052 = vpop.f32.mrb[0].mxu0
    %v1053 = vadd.f32 0.0, %v1052
    %v1054 = vpop.f32.mrb[0].mxu0
    %v1055 = vpop.f32.mrb[0].mxu0
    %v1056 = vadd.f32 0.0, %v1055
    %v1057 = vpop.f32.mrb[0].mxu0
    %1058 = vmatprep.mubr.bf16.mxu0 0
    %1059 = vmatmul.mubr.bf16.gmra.mrb[0].mxu0 %v705
    %v1060 = vpop.f32.mrb[0].mxu0
    %v1061 = vadd.f32 0.0, %v1060
    %v1062 = vpop.f32.mrb[0].mxu0
    %v1063 = vpop.f32.mrb[0].mxu0
    %v1064 = vadd.f32 0.0, %v1063
    %v1065 = vpop.f32.mrb[0].mxu0
    %1066 = vmatprep.mubr.bf16.mxu0 0
    %1067 = vmatmul.mubr.bf16.gmra.mrb[0].mxu0 %v708
    %v1068 = vpop.f32.mrb[0].mxu0
    %v1069 = vadd.f32 0.0, %v1068
    %v1070 = vpop.f32.mrb[0].mxu0
    %v1071 = vpop.f32.mrb[0].mxu0
    %v1072 = vadd.f32 0.0, %v1071
    %v1073 = vpop.f32.mrb[0].mxu0
    %1074 = vmatprep.mubr.bf16.mxu0 0
    %1075 = vmatmul.mubr.bf16.gmra.mrb[0].mxu0 %v711
    %v1076 = vpop.f32.mrb[0].mxu0
    %v1077 = vadd.f32 0.0, %v1076
    %v1078 = vpop.f32.mrb[0].mxu0
    %v1079 = vpop.f32.mrb[0].mxu0
    %v1080 = vadd.f32 0.0, %v1079
    %v1081 = vpop.f32.mrb[0].mxu0
    %1082 = vmatprep.mubr.bf16.mxu0 0
    %1083 = vmatmul.mubr.bf16.gmra.mrb[0].mxu0 %v714
    %v1084 = vpop.f32.mrb[0].mxu0
    %v1085 = vadd.f32 0.0, %v1084
    %v1086 = vpop.f32.mrb[0].mxu0
    %v1087 = vpop.f32.mrb[0].mxu0
    %v1088 = vadd.f32 0.0, %v1087
    %v1089 = vpop.f32.mrb[0].mxu0
    %1090 = vmatprep.mubr.bf16.mxu0 0
    %1091 = vmatmul.mubr.bf16.gmra.mrb[0].mxu0 %v717
    %v1092 = vpop.f32.mrb[0].mxu0
    %v1093 = vadd.f32 0.0, %v1092
    %v1094 = vpop.f32.mrb[0].mxu0
    %v1095 = vpop.f32.mrb[0].mxu0
    %v1096 = vadd.f32 0.0, %v1095
    %v1097 = vpop.f32.mrb[0].mxu0
    %1098 = vmatprep.mubr.bf16.mxu0 0
    %1099 = vmatmul.mubr.bf16.gmra.mrb[0].mxu0 %v720
    %v1100 = vpop.f32.mrb[0].mxu0
    %v1101 = vadd.f32 0.0, %v1100
    %v1102 = vpop.f32.mrb[0].mxu0
    %v1103 = vpop.f32.mrb[0].mxu0
    %v1104 = vadd.f32 0.0, %v1103
    %v1105 = vpop.f32.mrb[0].mxu0
    %1106 = vmatprep.mubr.bf16.mxu0 0
    %1107 = vmatmul.mubr.bf16.gmra.mrb[0].mxu0 %v723
    %v1108 = vpop.f32.mrb[0].mxu0
    %v1109 = vadd.f32 0.0, %v1108
    %v1110 = vpop.f32.mrb[0].mxu0
    %v1111 = vpop.f32.mrb[0].mxu0
    %v1112 = vadd.f32 0.0, %v1111
    %v1113 = vpop.f32.mrb[0].mxu0
    %1114 = vmatprep.mubr.bf16.mxu0 0
    %1115 = vmatmul.mubr.bf16.gmra.mrb[0].mxu0 %v726
    %v1116 = vpop.f32.mrb[0].mxu0
    %v1117 = vadd.f32 0.0, %v1116
    %v1118 = vpop.f32.mrb[0].mxu0
    %v1119 = vpop.f32.mrb[0].mxu0
    %v1120 = vadd.f32 0.0, %v1119
    %v1121 = vpop.f32.mrb[0].mxu0
    %1122 = vmatprep.mubr.bf16.mxu0 0
    %1123 = vmatmul.mubr.bf16.gmra.mrb[0].mxu0 %v729
    %v1124 = vpop.f32.mrb[0].mxu0
    %v1125 = vadd.f32 0.0, %v1124
    %v1126 = vpop.f32.mrb[0].mxu0
    %v1127 = vpop.f32.mrb[0].mxu0
    %v1128 = vadd.f32 0.0, %v1127
    %v1129 = vpop.f32.mrb[0].mxu0
    %1130 = vmatprep.mubr.bf16.mxu0 0
    %1131 = vmatmul.mubr.bf16.gmra.mrb[0].mxu0 %v732
    %v1132 = vpop.f32.mrb[0].mxu0
    %v1133 = vadd.f32 0.0, %v1132
    %v1134 = vpop.f32.mrb[0].mxu0
    %v1135 = vpop.f32.mrb[0].mxu0
    %v1136 = vadd.f32 0.0, %v1135
    %v1137 = vpop.f32.mrb[0].mxu0
    %1138 = vmatprep.mubr.bf16.mxu0 0
    %1139 = vmatmul.mubr.bf16.gmra.mrb[0].mxu0 %v735
    %v1140 = vpop.f32.mrb[0].mxu0
    %v1141 = vadd.f32 0.0, %v1140
    %v1142 = vpop.f32.mrb[0].mxu0
    %v1143 = vpop.f32.mrb[0].mxu0
    %v1144 = vadd.f32 0.0, %v1143
    %v1145 = vpop.f32.mrb[0].mxu0
    %1146 = vmatprep.mubr.bf16.mxu0 0
    %1147 = vmatmul.mubr.bf16.gmra.mrb[0].mxu0 %v738
    %v1148 = vpop.f32.mrb[0].mxu0
    %v1149 = vadd.f32 0.0, %v1148
    %v1150 = vpop.f32.mrb[0].mxu0
    %v1151 = vpop.f32.mrb[0].mxu0
    %v1152 = vadd.f32 0.0, %v1151
    %v1153 = vpop.f32.mrb[0].mxu0
    %1154 = vmatprep.mubr.bf16.mxu0 0
    %1155 = vmatmul.mubr.bf16.gmra.mrb[0].mxu0 %v741
    %v1156 = vpop.f32.mrb[0].mxu0
    %v1157 = vadd.f32 0.0, %v1156
    %v1158 = vpop.f32.mrb[0].mxu0
    %v1159 = vpop.f32.mrb[0].mxu0
    %v1160 = vadd.f32 0.0, %v1159
    %v1161 = vpop.f32.mrb[0].mxu0
    %1162 = vmatprep.mubr.bf16.mxu0 0
    %1163 = vmatmul.mubr.bf16.gmra.mrb[0].mxu0 %v744
    %v1164 = vpop.f32.mrb[0].mxu0
    %v1165 = vadd.f32 0.0, %v1164
    %v1166 = vpop.f32.mrb[0].mxu0
    %v1167 = vpop.f32.mrb[0].mxu0
    %v1168 = vadd.f32 0.0, %v1167
    %v1169 = vpop.f32.mrb[0].mxu0
    %1170 = vmatprep.mubr.bf16.mxu0 0
    %1171 = vmatmul.mubr.bf16.gmra.mrb[0].mxu0 %v747
    %v1172 = vpop.f32.mrb[0].mxu0
    %v1173 = vadd.f32 0.0, %v1172
    %v1174 = vpop.f32.mrb[0].mxu0
    %v1175 = vpop.f32.mrb[0].mxu0
    %v1176 = vadd.f32 0.0, %v1175
    %v1177 = vpop.f32.mrb[0].mxu0
    %1178 = vmatprep.mubr.bf16.mxu0 0
    %1179 = vmatmul.mubr.bf16.gmra.mrb[0].mxu0 %v750
    %v1180 = vpop.f32.mrb[0].mxu0
    %v1181 = vadd.f32 0.0, %v1180
    %v1182 = vpop.f32.mrb[0].mxu0
    %v1183 = vpop.f32.mrb[0].mxu0
    %v1184 = vadd.f32 0.0, %v1183
    %v1185 = vpop.f32.mrb[0].mxu0
    %1186 = vmatprep.mubr.bf16.mxu0 0
    %1187 = vmatmul.mubr.bf16.gmra.mrb[0].mxu0 %v753
    %v1188 = vpop.f32.mrb[0].mxu0
    %v1189 = vadd.f32 0.0, %v1188
    %v1190 = vpop.f32.mrb[0].mxu0
    %v1191 = vpop.f32.mrb[0].mxu0
    %v1192 = vadd.f32 0.0, %v1191
    %v1193 = vpop.f32.mrb[0].mxu0
    %1194 = vmatprep.mubr.bf16.mxu0 0
    %1195 = vmatmul.mubr.bf16.gmra.mrb[0].mxu0 %v756
    %v1196 = vpop.f32.mrb[0].mxu0
    %v1197 = vadd.f32 0.0, %v1196
    %v1198 = vpop.f32.mrb[0].mxu0
    %v1199 = vpop.f32.mrb[0].mxu0
    %v1200 = vadd.f32 0.0, %v1199
    %v1201 = vpop.f32.mrb[0].mxu0
    %1202 = vmatprep.mubr.bf16.mxu0 0
    %1203 = vmatmul.mubr.bf16.gmra.mrb[0].mxu0 %v759
    %v1204 = vpop.f32.mrb[0].mxu0
    %v1205 = vadd.f32 0.0, %v1204
    %v1206 = vpop.f32.mrb[0].mxu0
    %v1207 = vpop.f32.mrb[0].mxu0
    %v1208 = vadd.f32 0.0, %v1207
    %v1209 = vpop.f32.mrb[0].mxu0
    %1210 = vmatprep.mubr.bf16.mxu0 0
    %1211 = vmatmul.mubr.bf16.gmra.mrb[0].mxu0 %v762
    %v1212 = vpop.f32.mrb[0].mxu0
    %v1213 = vadd.f32 0.0, %v1212
    %v1214 = vpop.f32.mrb[0].mxu0
    %v1215 = vpop.f32.mrb[0].mxu0
    %v1216 = vadd.f32 0.0, %v1215
    %v1217 = vpop.f32.mrb[0].mxu0
    %1218 = vmatprep.mubr.bf16.mxu0 0
    %1219 = vmatmul.mubr.bf16.gmra.mrb[0].mxu0 %v765
    %v1220 = vpop.f32.mrb[0].mxu0
    %v1221 = vadd.f32 0.0, %v1220
    %v1222 = vpop.f32.mrb[0].mxu0
    %v1223 = vpop.f32.mrb[0].mxu0
    %v1224 = vadd.f32 0.0, %v1223
    %v1225 = vpop.f32.mrb[0].mxu0
    %1226 = vmatprep.mubr.bf16.mxu0 0
    %1227 = vmatmul.mubr.bf16.gmra.mrb[0].mxu0 %v768
    %v1228 = vpop.f32.mrb[0].mxu0
    %v1229 = vadd.f32 0.0, %v1228
    %v1230 = vpop.f32.mrb[0].mxu0
    %v1231 = vpop.f32.mrb[0].mxu0
    %v1232 = vadd.f32 0.0, %v1231
    %v1233 = vpop.f32.mrb[0].mxu0
    %1234 = vmatprep.mubr.bf16.mxu0 0
    %1235 = vmatmul.mubr.bf16.gmra.mrb[0].mxu0 %v771
    %v1236 = vpop.f32.mrb[0].mxu0
    %v1237 = vadd.f32 0.0, %v1236
    %v1238 = vpop.f32.mrb[0].mxu0
    %v1239 = vpop.f32.mrb[0].mxu0
    %v1240 = vadd.f32 0.0, %v1239
    %v1241 = vpop.f32.mrb[0].mxu0
    %1242 = vmatprep.mubr.bf16.mxu0 0
    %1243 = vmatmul.mubr.bf16.gmra.mrb[0].mxu0 %v774
    %v1244 = vpop.f32.mrb[0].mxu0
    %v1245 = vadd.f32 0.0, %v1244
    %v1246 = vpop.f32.mrb[0].mxu0
    %v1247 = vpop.f32.mrb[0].mxu0
    %v1248 = vadd.f32 0.0, %v1247
    %v1249 = vpop.f32.mrb[0].mxu0
    %1250 = vmatprep.mubr.bf16.mxu0 0
    %1251 = vmatmul.mubr.bf16.gmra.mrb[0].mxu0 %v777
    %v1252 = vpop.f32.mrb[0].mxu0
    %v1253 = vadd.f32 0.0, %v1252
    %v1254 = vpop.f32.mrb[0].mxu0
    %v1255 = vpop.f32.mrb[0].mxu0
    %v1256 = vadd.f32 0.0, %v1255
    %v1257 = vpop.f32.mrb[0].mxu0
    %1258 = vmatprep.mubr.bf16.mxu0 0
    %1259 = vmatmul.mubr.bf16.gmra.mrb[0].mxu0 %v780
    %v1260 = vpop.f32.mrb[0].mxu0
    %v1261 = vadd.f32 0.0, %v1260
    %v1262 = vpop.f32.mrb[0].mxu0
    %v1263 = vpop.f32.mrb[0].mxu0
    %v1264 = vadd.f32 0.0, %v1263
    %v1265 = vpop.f32.mrb[0].mxu0
    %1266 = vmatprep.mubr.bf16.mxu0 0
    %1267 = vmatmul.mubr.bf16.gmra.mrb[0].mxu0 %v783
    %v1268 = vpop.f32.mrb[0].mxu0
    %v1269 = vadd.f32 0.0, %v1268
    %v1270 = vpop.f32.mrb[0].mxu0
    %v1271 = vpop.f32.mrb[0].mxu0
    %v1272 = vadd.f32 0.0, %v1271
    %v1273 = vpop.f32.mrb[0].mxu0
    %1274 = vmatprep.mubr.bf16.mxu0 0
    %1275 = vmatmul.mubr.bf16.gmra.mrb[0].mxu0 %v786
    %v1276 = vpop.f32.mrb[0].mxu0
    %v1277 = vadd.f32 0.0, %v1276
    %v1278 = vpop.f32.mrb[0].mxu0
    %v1279 = vpop.f32.mrb[0].mxu0
    %v1280 = vadd.f32 0.0, %v1279
    %v1281 = vpop.f32.mrb[0].mxu0
    %1282 = vmatprep.mubr.bf16.mxu0 0
    %1283 = vmatmul.mubr.bf16.gmra.mrb[0].mxu0 %v789
    %v1284 = vpop.f32.mrb[0].mxu0
    %v1285 = vadd.f32 0.0, %v1284
    %v1286 = vpop.f32.mrb[0].mxu0
    %v1287 = vpop.f32.mrb[0].mxu0
    %v1288 = vadd.f32 0.0, %v1287
    %v1289 = vpop.f32.mrb[0].mxu0
    %1290 = vmatprep.mubr.bf16.mxu0 0
    %1291 = vmatmul.mubr.bf16.gmra.mrb[0].mxu0 %v792
    %v1292 = vpop.f32.mrb[0].mxu0
    %v1293 = vadd.f32 0.0, %v1292
    %v1294 = vpop.f32.mrb[0].mxu0
    %v1295 = vpop.f32.mrb[0].mxu0
    %v1296 = vadd.f32 0.0, %v1295
    %v1297 = vpop.f32.mrb[0].mxu0
    %1298 = vmatprep.mubr.bf16.mxu0 0
    %1299 = vmatmul.mubr.bf16.gmra.mrb[0].mxu0 %v795
    %v1300 = vpop.f32.mrb[0].mxu0
    %v1301 = vadd.f32 0.0, %v1300
    %v1302 = vpop.f32.mrb[0].mxu0
    %v1303 = vpop.f32.mrb[0].mxu0
    %v1304 = vadd.f32 0.0, %v1303
    %v1305 = vpop.f32.mrb[0].mxu0
    %1306 = vmatprep.mubr.bf16.mxu0 0
    %1307 = vmatmul.mubr.bf16.gmra.mrb[0].mxu0 %v798
    %v1308 = vpop.f32.mrb[0].mxu0
    %v1309 = vadd.f32 0.0, %v1308
    %v1310 = vpop.f32.mrb[0].mxu0
    %v1311 = vpop.f32.mrb[0].mxu0
    %v1312 = vadd.f32 0.0, %v1311
    %v1313 = vpop.f32.mrb[0].mxu0
    %1314 = vmatprep.mubr.bf16.mxu0 0
    %1315 = vmatmul.mubr.bf16.gmra.mrb[0].mxu0 %v801
    %v1316 = vpop.f32.mrb[0].mxu0
    %v1317 = vadd.f32 0.0, %v1316
    %v1318 = vpop.f32.mrb[0].mxu0
    %v1319 = vpop.f32.mrb[0].mxu0
    %v1320 = vadd.f32 0.0, %v1319
    %v1321 = vpop.f32.mrb[0].mxu0
    %1322 = vmatprep.mubr.bf16.mxu0 0
    %1323 = vmatmul.mubr.bf16.gmra.mrb[0].mxu0 %v804
    %v1324 = vpop.f32.mrb[0].mxu0
    %v1325 = vadd.f32 0.0, %v1324
    %v1326 = vpop.f32.mrb[0].mxu0
    %v1327 = vpop.f32.mrb[0].mxu0
    %v1328 = vadd.f32 0.0, %v1327
    %v1329 = vpop.f32.mrb[0].mxu0
    %1330 = vmatprep.mubr.bf16.mxu0 0
    %1331 = vmatmul.mubr.bf16.gmra.mrb[0].mxu0 %v807
    %v1332 = vpop.f32.mrb[0].mxu0
    %v1333 = vadd.f32 0.0, %v1332
    %v1334 = vpop.f32.mrb[0].mxu0
    %v1335 = vpop.f32.mrb[0].mxu0
    %v1336 = vadd.f32 0.0, %v1335
    %v1337 = vpop.f32.mrb[0].mxu0
    %1338 = vmatprep.mubr.bf16.mxu0 0
    %1339 = vmatmul.mubr.bf16.gmra.mrb[0].mxu0 %v810
    %v1340 = vpop.f32.mrb[0].mxu0
    %v1341 = vadd.f32 0.0, %v1340
    %v1342 = vpop.f32.mrb[0].mxu0
    %v1343 = vpop.f32.mrb[0].mxu0
    %v1344 = vadd.f32 0.0, %v1343
    %v1345 = vpop.f32.mrb[0].mxu0
    %1346 = vmatprep.mubr.bf16.mxu0 0
    %1347 = vmatmul.mubr.bf16.gmra.mrb[0].mxu0 %v813
    %v1348 = vpop.f32.mrb[0].mxu0
    %v1349 = vadd.f32 0.0, %v1348
    %v1350 = vpop.f32.mrb[0].mxu0
    %v1351 = vpop.f32.mrb[0].mxu0
    %v1352 = vadd.f32 0.0, %v1351
    %v1353 = vpop.f32.mrb[0].mxu0
    %1354 = vmatprep.mubr.bf16.mxu0 0
    %1355 = vmatmul.mubr.bf16.gmra.mrb[0].mxu0 %v816
    %v1356 = vpop.f32.mrb[0].mxu0
    %v1357 = vadd.f32 0.0, %v1356
    %v1358 = vpop.f32.mrb[0].mxu0
    %v1359 = vpop.f32.mrb[0].mxu0
    %v1360 = vadd.f32 0.0, %v1359
    %v1361 = vpop.f32.mrb[0].mxu0
    %1362 = vdwg.mxu0
    %v1491 = vunpack.c.l.b16 %v29
    %v1492 = vunpack.c.l.b16 %v30
    %v1493 = vunpack.c.l.b16 %v31
    %v1494 = vunpack.c.l.b16 %v32
    %v1495 = vunpack.c.l.b16 %v33
    %v1496 = vunpack.c.l.b16 %v34
    %v1497 = vunpack.c.l.b16 %v35
    %v1498 = vunpack.c.l.b16 %v36
    %v1499 = vunpack.c.l.b16 %v37
    %v1500 = vunpack.c.l.b16 %v38
    %v1501 = vunpack.c.l.b16 %v39
    %v1502 = vunpack.c.l.b16 %v40
    %v1503 = vunpack.c.l.b16 %v41
    %v1504 = vunpack.c.l.b16 %v42
    %v1505 = vunpack.c.l.b16 %v43
    %v1506 = vunpack.c.l.b16 %v44
    %v1507 = vunpack.c.l.b16 %v45
    %v1508 = vunpack.c.l.b16 %v46
    %v1509 = vunpack.c.l.b16 %v47
    %v1510 = vunpack.c.l.b16 %v48
    %v1511 = vunpack.c.l.b16 %v49
    %v1512 = vunpack.c.l.b16 %v50
    %v1513 = vunpack.c.l.b16 %v51
    %v1514 = vunpack.c.l.b16 %v52
    %v1515 = vunpack.c.l.b16 %v53
    %v1516 = vunpack.c.l.b16 %v54
    %v1517 = vunpack.c.l.b16 %v55
    %v1518 = vunpack.c.l.b16 %v56
    %v1519 = vunpack.c.l.b16 %v57
    %v1520 = vunpack.c.l.b16 %v58
    %v1521 = vunpack.c.l.b16 %v59
    %v1522 = vunpack.c.l.b16 %v60
    %v1523 = vunpack.c.l.b16 %v61
    %v1524 = vunpack.c.l.b16 %v62
    %v1525 = vunpack.c.l.b16 %v63
    %v1526 = vunpack.c.l.b16 %v64
    %v1527 = vunpack.c.l.b16 %v65
    %v1528 = vunpack.c.l.b16 %v66
    %v1529 = vunpack.c.l.b16 %v67
    %v1530 = vunpack.c.l.b16 %v68
    %v1531 = vunpack.c.l.b16 %v69
    %v1532 = vunpack.c.l.b16 %v70
    %v1533 = vunpack.c.l.b16 %v71
    %v1534 = vunpack.c.l.b16 %v72
    %v1535 = vunpack.c.l.b16 %v73
    %v1536 = vunpack.c.l.b16 %v74
    %v1537 = vunpack.c.l.b16 %v75
    %v1538 = vunpack.c.l.b16 %v76
    %v1539 = vunpack.c.l.b16 %v77
    %v1540 = vunpack.c.l.b16 %v78
    %v1541 = vunpack.c.l.b16 %v79
    %v1542 = vunpack.c.l.b16 %v80
    %v1543 = vunpack.c.l.b16 %v81
    %v1544 = vunpack.c.l.b16 %v82
    %v1545 = vunpack.c.l.b16 %v83
    %v1546 = vunpack.c.l.b16 %v84
    %v1547 = vunpack.c.l.b16 %v85
    %v1548 = vunpack.c.l.b16 %v86
    %v1549 = vunpack.c.l.b16 %v87
    %v1550 = vunpack.c.l.b16 %v88
    %v1551 = vunpack.c.l.b16 %v89
    %v1552 = vunpack.c.l.b16 %v90
    %v1553 = vunpack.c.l.b16 %v91
    %v1554 = vunpack.c.l.b16 %v92
    %v1555 = vunpack.c.l.b16 %v93
    %v1556 = vunpack.c.l.b16 %v94
    %v1557 = vunpack.c.l.b16 %v95
    %v1558 = vunpack.c.l.b16 %v96
    %v1559 = vunpack.c.l.b16 %v97
    %v1560 = vunpack.c.l.b16 %v98
    %v1561 = vunpack.c.l.b16 %v99
    %v1562 = vunpack.c.l.b16 %v100
    %v1563 = vunpack.c.l.b16 %v101
    %v1564 = vunpack.c.l.b16 %v102
    %v1565 = vunpack.c.l.b16 %v103
    %v1566 = vunpack.c.l.b16 %v104
    %v1567 = vunpack.c.l.b16 %v105
    %v1568 = vunpack.c.l.b16 %v106
    %v1569 = vunpack.c.l.b16 %v107
    %v1570 = vunpack.c.l.b16 %v108
    %v1571 = vunpack.c.l.b16 %v109
    %v1572 = vunpack.c.l.b16 %v110
    %v1573 = vunpack.c.l.b16 %v111
    %v1574 = vunpack.c.l.b16 %v112
    %v1575 = vunpack.c.l.b16 %v113
    %v1576 = vunpack.c.l.b16 %v114
    %v1577 = vunpack.c.l.b16 %v115
    %v1578 = vunpack.c.l.b16 %v116
    %v1579 = vunpack.c.l.b16 %v117
    %v1580 = vunpack.c.l.b16 %v118
    %v1581 = vunpack.c.l.b16 %v119
    %v1582 = vunpack.c.l.b16 %v120
    %v1583 = vunpack.c.l.b16 %v121
    %v1584 = vunpack.c.l.b16 %v122
    %v1585 = vunpack.c.l.b16 %v123
    %v1586 = vunpack.c.l.b16 %v124
    %v1587 = vunpack.c.l.b16 %v125
    %v1588 = vunpack.c.l.b16 %v126
    %v1589 = vunpack.c.l.b16 %v127
    %v1590 = vunpack.c.l.b16 %v128
    %v1591 = vunpack.c.l.b16 %v129
    %v1592 = vunpack.c.l.b16 %v130
    %v1593 = vunpack.c.l.b16 %v131
    %v1594 = vunpack.c.l.b16 %v132
    %v1595 = vunpack.c.l.b16 %v133
    %v1596 = vunpack.c.l.b16 %v134
    %v1597 = vunpack.c.l.b16 %v135
    %v1598 = vunpack.c.l.b16 %v136
    %v1599 = vunpack.c.l.b16 %v137
    %v1600 = vunpack.c.l.b16 %v138
    %v1601 = vunpack.c.l.b16 %v139
    %v1602 = vunpack.c.l.b16 %v140
    %v1603 = vunpack.c.l.b16 %v141
    %v1604 = vunpack.c.l.b16 %v142
    %v1605 = vunpack.c.l.b16 %v143
    %v1606 = vunpack.c.l.b16 %v144
    %v1607 = vunpack.c.l.b16 %v145
    %v1608 = vunpack.c.l.b16 %v146
    %v1609 = vunpack.c.l.b16 %v147
    %v1610 = vunpack.c.l.b16 %v148
    %v1611 = vunpack.c.l.b16 %v149
    %v1612 = vunpack.c.l.b16 %v150
    %v1613 = vunpack.c.l.b16 %v151
    %v1614 = vunpack.c.l.b16 %v152
    %v1615 = vunpack.c.l.b16 %v153
    %v1616 = vunpack.c.l.b16 %v154
    %v1617 = vunpack.c.l.b16 %v155
    %v1618 = vunpack.c.l.b16 %v156
    %v1619 = vpack.c.b16 %v1492, %v1491
    %v1620 = vpack.c.b16 %v1494, %v1493
    %v1621 = vpack.c.b16 %v1496, %v1495
    %v1622 = vpack.c.b16 %v1498, %v1497
    %v1623 = vpack.c.b16 %v1500, %v1499
    %v1624 = vpack.c.b16 %v1502, %v1501
    %v1625 = vpack.c.b16 %v1504, %v1503
    %v1626 = vpack.c.b16 %v1506, %v1505
    %v1627 = vpack.c.b16 %v1508, %v1507
    %v1628 = vpack.c.b16 %v1510, %v1509
    %v1629 = vpack.c.b16 %v1512, %v1511
    %v1630 = vpack.c.b16 %v1514, %v1513
    %v1631 = vpack.c.b16 %v1516, %v1515
    %v1632 = vpack.c.b16 %v1518, %v1517
    %v1633 = vpack.c.b16 %v1520, %v1519
    %v1634 = vpack.c.b16 %v1522, %v1521
    %v1635 = vpack.c.b16 %v1524, %v1523
    %v1636 = vpack.c.b16 %v1526, %v1525
    %v1637 = vpack.c.b16 %v1528, %v1527
    %v1638 = vpack.c.b16 %v1530, %v1529
    %v1639 = vpack.c.b16 %v1532, %v1531
    %v1640 = vpack.c.b16 %v1534, %v1533
    %v1641 = vpack.c.b16 %v1536, %v1535
    %v1642 = vpack.c.b16 %v1538, %v1537
    %v1643 = vpack.c.b16 %v1540, %v1539
    %v1644 = vpack.c.b16 %v1542, %v1541
    %v1645 = vpack.c.b16 %v1544, %v1543
    %v1646 = vpack.c.b16 %v1546, %v1545
    %v1647 = vpack.c.b16 %v1548, %v1547
    %v1648 = vpack.c.b16 %v1550, %v1549
    %v1649 = vpack.c.b16 %v1552, %v1551
    %v1650 = vpack.c.b16 %v1554, %v1553
    %v1651 = vpack.c.b16 %v1556, %v1555
    %v1652 = vpack.c.b16 %v1558, %v1557
    %v1653 = vpack.c.b16 %v1560, %v1559
    %v1654 = vpack.c.b16 %v1562, %v1561
    %v1655 = vpack.c.b16 %v1564, %v1563
    %v1656 = vpack.c.b16 %v1566, %v1565
    %v1657 = vpack.c.b16 %v1568, %v1567
    %v1658 = vpack.c.b16 %v1570, %v1569
    %v1659 = vpack.c.b16 %v1572, %v1571
    %v1660 = vpack.c.b16 %v1574, %v1573
    %v1661 = vpack.c.b16 %v1576, %v1575
    %v1662 = vpack.c.b16 %v1578, %v1577
    %v1663 = vpack.c.b16 %v1580, %v1579
    %v1664 = vpack.c.b16 %v1582, %v1581
    %v1665 = vpack.c.b16 %v1584, %v1583
    %v1666 = vpack.c.b16 %v1586, %v1585
    %v1667 = vpack.c.b16 %v1588, %v1587
    %v1668 = vpack.c.b16 %v1590, %v1589
    %v1669 = vpack.c.b16 %v1592, %v1591
    %v1670 = vpack.c.b16 %v1594, %v1593
    %v1671 = vpack.c.b16 %v1596, %v1595
    %v1672 = vpack.c.b16 %v1598, %v1597
    %v1673 = vpack.c.b16 %v1600, %v1599
    %v1674 = vpack.c.b16 %v1602, %v1601
    %v1675 = vpack.c.b16 %v1604, %v1603
    %v1676 = vpack.c.b16 %v1606, %v1605
    %v1677 = vpack.c.b16 %v1608, %v1607
    %v1678 = vpack.c.b16 %v1610, %v1609
    %v1679 = vpack.c.b16 %v1612, %v1611
    %v1680 = vpack.c.b16 %v1614, %v1613
    %v1681 = vpack.c.b16 %v1616, %v1615
    %v1682 = vpack.c.b16 %v1618, %v1617
    %v1687 = vunpack.c.l.b16 %v157
    %v1688 = vunpack.c.l.b16 %v158
    %v1689 = vunpack.c.l.b16 %v159
    %v1690 = vunpack.c.l.b16 %v160
    %v1691 = vpack.c.b16 %v1688, %v1687
    %v1692 = vpack.c.b16 %v1690, %v1689
    %v1696 = vsel %vm625, %v1619, 0
    %v1699 = vsel %vm625, %v1620, 0
    %v1702 = vsel %vm625, %v1621, 0
    %v1705 = vsel %vm625, %v1622, 0
    %v1708 = vsel %vm625, %v1623, 0
    %v1711 = vsel %vm625, %v1624, 0
    %v1714 = vsel %vm625, %v1625, 0
    %v1717 = vsel %vm625, %v1626, 0
    %v1720 = vsel %vm625, %v1627, 0
    %v1723 = vsel %vm625, %v1628, 0
    %v1726 = vsel %vm625, %v1629, 0
    %v1729 = vsel %vm625, %v1630, 0
    %v1732 = vsel %vm625, %v1631, 0
    %v1735 = vsel %vm625, %v1632, 0
    %v1738 = vsel %vm625, %v1633, 0
    %v1741 = vsel %vm625, %v1634, 0
    %v1744 = vsel %vm625, %v1635, 0
    %v1747 = vsel %vm625, %v1636, 0
    %v1750 = vsel %vm625, %v1637, 0
    %v1753 = vsel %vm625, %v1638, 0
    %v1756 = vsel %vm625, %v1639, 0
    %v1759 = vsel %vm625, %v1640, 0
    %v1762 = vsel %vm625, %v1641, 0
    %v1765 = vsel %vm625, %v1642, 0
    %v1768 = vsel %vm625, %v1643, 0
    %v1771 = vsel %vm625, %v1644, 0
    %v1774 = vsel %vm625, %v1645, 0
    %v1777 = vsel %vm625, %v1646, 0
    %v1780 = vsel %vm625, %v1647, 0
    %v1783 = vsel %vm625, %v1648, 0
    %v1786 = vsel %vm625, %v1649, 0
    %v1789 = vsel %vm625, %v1650, 0
    %v1792 = vsel %vm625, %v1651, 0
    %v1795 = vsel %vm625, %v1652, 0
    %v1798 = vsel %vm625, %v1653, 0
    %v1801 = vsel %vm625, %v1654, 0
    %v1804 = vsel %vm625, %v1655, 0
    %v1807 = vsel %vm625, %v1656, 0
    %v1810 = vsel %vm625, %v1657, 0
    %v1813 = vsel %vm625, %v1658, 0
    %v1816 = vsel %vm625, %v1659, 0
    %v1819 = vsel %vm625, %v1660, 0
    %v1822 = vsel %vm625, %v1661, 0
    %v1825 = vsel %vm625, %v1662, 0
    %v1828 = vsel %vm625, %v1663, 0
    %v1831 = vsel %vm625, %v1664, 0
    %v1834 = vsel %vm625, %v1665, 0
    %v1837 = vsel %vm625, %v1666, 0
    %v1840 = vsel %vm625, %v1667, 0
    %v1843 = vsel %vm625, %v1668, 0
    %v1846 = vsel %vm625, %v1669, 0
    %v1849 = vsel %vm625, %v1670, 0
    %v1852 = vsel %vm625, %v1671, 0
    %v1855 = vsel %vm625, %v1672, 0
    %v1858 = vsel %vm625, %v1673, 0
    %v1861 = vsel %vm625, %v1674, 0
    %v1864 = vsel %vm625, %v1675, 0
    %v1867 = vsel %vm625, %v1676, 0
    %v1870 = vsel %vm625, %v1677, 0
    %v1873 = vsel %vm625, %v1678, 0
    %v1876 = vsel %vm625, %v1679, 0
    %v1879 = vsel %vm625, %v1680, 0
    %v1882 = vsel %vm625, %v1681, 0
    %v1885 = vsel %vm625, %v1682, 0
    %1887 = vmatprep.subr.bf16.mxu0 0
    %1888 = vmatpush1.bf16.msra.mxu0 %v1691
    %1889 = vmatprep.subr.bf16.mxu0 0
    %1890 = vmatpush1.bf16.msra.mxu0 %v1692
    %1891 = vmatprep.subr.bf16.mxu0 0
    %1892 = vmatpush1.bf16.msra.mxu0 0
    %1893 = vmatprep.subr.bf16.mxu0 0
    %1894 = vmatpush1.bf16.msra.mxu0 0
    %1895 = vmatprep.subr.bf16.mxu0 0
    %1896 = vmatpush1.bf16.msra.mxu0 0
    %1897 = vmatprep.subr.bf16.mxu0 0
    %1898 = vmatpush1.bf16.msra.mxu0 0
    %1899 = vmatprep.subr.bf16.mxu0 0
    %1900 = vmatpush1.bf16.msra.mxu0 0
    %1901 = vmatprep.subr.bf16.mxu0 0
    %1902 = vmatpush1.bf16.msra.mxu0 0
    %1903 = vmatprep.subr.bf16.mxu0 0
    %1904 = vmatpush1.bf16.msra.mxu0 0
    %1905 = vmatprep.subr.bf16.mxu0 0
    %1906 = vmatpush1.bf16.msra.mxu0 0
    %1907 = vmatprep.subr.bf16.mxu0 0
    %1908 = vmatpush1.bf16.msra.mxu0 0
    %1909 = vmatprep.subr.bf16.mxu0 0
    %1910 = vmatpush1.bf16.msra.mxu0 0
    %1911 = vmatprep.subr.bf16.mxu0 0
    %1912 = vmatpush1.bf16.msra.mxu0 0
    %1913 = vmatprep.subr.bf16.mxu0 0
    %1914 = vmatpush1.bf16.msra.mxu0 0
    %1915 = vmatprep.subr.bf16.mxu0 0
    %1916 = vmatpush1.bf16.msra.mxu0 0
    %1917 = vmatprep.subr.bf16.mxu0 0
    %1918 = vmatpush1.bf16.msra.mxu0 0
    %1919 = vmatprep.mubr.bf16.mxu0 0
    %1920 = vmatmul.mubr.bf16.gmra.mrb[0].mxu0 %v1696
    %v1921 = vpop.f32.mrb[0].mxu0
    %v1922 = vadd.f32 %v853, %v1921
    %v1923 = vpop.f32.mrb[0].mxu0
    %v1924 = vpop.f32.mrb[0].mxu0
    %v1925 = vadd.f32 %v856, %v1924
    %v1926 = vpop.f32.mrb[0].mxu0
    %1927 = vmatprep.mubr.bf16.mxu0 0
    %1928 = vmatmul.mubr.bf16.gmra.mrb[0].mxu0 %v1699
    %v1929 = vpop.f32.mrb[0].mxu0
    %v1930 = vadd.f32 %v861, %v1929
    %v1931 = vpop.f32.mrb[0].mxu0
    %v1932 = vpop.f32.mrb[0].mxu0
    %v1933 = vadd.f32 %v864, %v1932
    %v1934 = vpop.f32.mrb[0].mxu0
    %1935 = vmatprep.mubr.bf16.mxu0 0
    %1936 = vmatmul.mubr.bf16.gmra.mrb[0].mxu0 %v1702
    %v1937 = vpop.f32.mrb[0].mxu0
    %v1938 = vadd.f32 %v869, %v1937
    %v1939 = vpop.f32.mrb[0].mxu0
    %v1940 = vpop.f32.mrb[0].mxu0
    %v1941 = vadd.f32 %v872, %v1940
    %v1942 = vpop.f32.mrb[0].mxu0
    %1943 = vmatprep.mubr.bf16.mxu0 0
    %1944 = vmatmul.mubr.bf16.gmra.mrb[0].mxu0 %v1705
    %v1945 = vpop.f32.mrb[0].mxu0
    %v1946 = vadd.f32 %v877, %v1945
    %v1947 = vpop.f32.mrb[0].mxu0
    %v1948 = vpop.f32.mrb[0].mxu0
    %v1949 = vadd.f32 %v880, %v1948
    %v1950 = vpop.f32.mrb[0].mxu0
    %1951 = vmatprep.mubr.bf16.mxu0 0
    %1952 = vmatmul.mubr.bf16.gmra.mrb[0].mxu0 %v1708
    %v1953 = vpop.f32.mrb[0].mxu0
    %v1954 = vadd.f32 %v885, %v1953
    %v1955 = vpop.f32.mrb[0].mxu0
    %v1956 = vpop.f32.mrb[0].mxu0
    %v1957 = vadd.f32 %v888, %v1956
    %v1958 = vpop.f32.mrb[0].mxu0
    %1959 = vmatprep.mubr.bf16.mxu0 0
    %1960 = vmatmul.mubr.bf16.gmra.mrb[0].mxu0 %v1711
    %v1961 = vpop.f32.mrb[0].mxu0
    %v1962 = vadd.f32 %v893, %v1961
    %v1963 = vpop.f32.mrb[0].mxu0
    %v1964 = vpop.f32.mrb[0].mxu0
    %v1965 = vadd.f32 %v896, %v1964
    %v1966 = vpop.f32.mrb[0].mxu0
    %1967 = vmatprep.mubr.bf16.mxu0 0
    %1968 = vmatmul.mubr.bf16.gmra.mrb[0].mxu0 %v1714
    %v1969 = vpop.f32.mrb[0].mxu0
    %v1970 = vadd.f32 %v901, %v1969
    %v1971 = vpop.f32.mrb[0].mxu0
    %v1972 = vpop.f32.mrb[0].mxu0
    %v1973 = vadd.f32 %v904, %v1972
    %v1974 = vpop.f32.mrb[0].mxu0
    %1975 = vmatprep.mubr.bf16.mxu0 0
    %1976 = vmatmul.mubr.bf16.gmra.mrb[0].mxu0 %v1717
    %v1977 = vpop.f32.mrb[0].mxu0
    %v1978 = vadd.f32 %v909, %v1977
    %v1979 = vpop.f32.mrb[0].mxu0
    %v1980 = vpop.f32.mrb[0].mxu0
    %v1981 = vadd.f32 %v912, %v1980
    %v1982 = vpop.f32.mrb[0].mxu0
    %1983 = vmatprep.mubr.bf16.mxu0 0
    %1984 = vmatmul.mubr.bf16.gmra.mrb[0].mxu0 %v1720
    %v1985 = vpop.f32.mrb[0].mxu0
    %v1986 = vadd.f32 %v917, %v1985
    %v1987 = vpop.f32.mrb[0].mxu0
    %v1988 = vpop.f32.mrb[0].mxu0
    %v1989 = vadd.f32 %v920, %v1988
    %v1990 = vpop.f32.mrb[0].mxu0
    %1991 = vmatprep.mubr.bf16.mxu0 0
    %1992 = vmatmul.mubr.bf16.gmra.mrb[0].mxu0 %v1723
    %v1993 = vpop.f32.mrb[0].mxu0
    %v1994 = vadd.f32 %v925, %v1993
    %v1995 = vpop.f32.mrb[0].mxu0
    %v1996 = vpop.f32.mrb[0].mxu0
    %v1997 = vadd.f32 %v928, %v1996
    %v1998 = vpop.f32.mrb[0].mxu0
    %1999 = vmatprep.mubr.bf16.mxu0 0
    %2000 = vmatmul.mubr.bf16.gmra.mrb[0].mxu0 %v1726
    %v2001 = vpop.f32.mrb[0].mxu0
    %v2002 = vadd.f32 %v933, %v2001
    %v2003 = vpop.f32.mrb[0].mxu0
    %v2004 = vpop.f32.mrb[0].mxu0
    %v2005 = vadd.f32 %v936, %v2004
    %v2006 = vpop.f32.mrb[0].mxu0
    %2007 = vmatprep.mubr.bf16.mxu0 0
    %2008 = vmatmul.mubr.bf16.gmra.mrb[0].mxu0 %v1729
    %v2009 = vpop.f32.mrb[0].mxu0
    %v2010 = vadd.f32 %v941, %v2009
    %v2011 = vpop.f32.mrb[0].mxu0
    %v2012 = vpop.f32.mrb[0].mxu0
    %v2013 = vadd.f32 %v944, %v2012
    %v2014 = vpop.f32.mrb[0].mxu0
    %2015 = vmatprep.mubr.bf16.mxu0 0
    %2016 = vmatmul.mubr.bf16.gmra.mrb[0].mxu0 %v1732
    %v2017 = vpop.f32.mrb[0].mxu0
    %v2018 = vadd.f32 %v949, %v2017
    %v2019 = vpop.f32.mrb[0].mxu0
    %v2020 = vpop.f32.mrb[0].mxu0
    %v2021 = vadd.f32 %v952, %v2020
    %v2022 = vpop.f32.mrb[0].mxu0
    %2023 = vmatprep.mubr.bf16.mxu0 0
    %2024 = vmatmul.mubr.bf16.gmra.mrb[0].mxu0 %v1735
    %v2025 = vpop.f32.mrb[0].mxu0
    %v2026 = vadd.f32 %v957, %v2025
    %v2027 = vpop.f32.mrb[0].mxu0
    %v2028 = vpop.f32.mrb[0].mxu0
    %v2029 = vadd.f32 %v960, %v2028
    %v2030 = vpop.f32.mrb[0].mxu0
    %2031 = vmatprep.mubr.bf16.mxu0 0
    %2032 = vmatmul.mubr.bf16.gmra.mrb[0].mxu0 %v1738
    %v2033 = vpop.f32.mrb[0].mxu0
    %v2034 = vadd.f32 %v965, %v2033
    %v2035 = vpop.f32.mrb[0].mxu0
    %v2036 = vpop.f32.mrb[0].mxu0
    %v2037 = vadd.f32 %v968, %v2036
    %v2038 = vpop.f32.mrb[0].mxu0
    %2039 = vmatprep.mubr.bf16.mxu0 0
    %2040 = vmatmul.mubr.bf16.gmra.mrb[0].mxu0 %v1741
    %v2041 = vpop.f32.mrb[0].mxu0
    %v2042 = vadd.f32 %v973, %v2041
    %v2043 = vpop.f32.mrb[0].mxu0
    %v2044 = vpop.f32.mrb[0].mxu0
    %v2045 = vadd.f32 %v976, %v2044
    %v2046 = vpop.f32.mrb[0].mxu0
    %2047 = vmatprep.mubr.bf16.mxu0 0
    %2048 = vmatmul.mubr.bf16.gmra.mrb[0].mxu0 %v1744
    %v2049 = vpop.f32.mrb[0].mxu0
    %v2050 = vadd.f32 %v981, %v2049
    %v2051 = vpop.f32.mrb[0].mxu0
    %v2052 = vpop.f32.mrb[0].mxu0
    %v2053 = vadd.f32 %v984, %v2052
    %v2054 = vpop.f32.mrb[0].mxu0
    %2055 = vmatprep.mubr.bf16.mxu0 0
    %2056 = vmatmul.mubr.bf16.gmra.mrb[0].mxu0 %v1747
    %v2057 = vpop.f32.mrb[0].mxu0
    %v2058 = vadd.f32 %v989, %v2057
    %v2059 = vpop.f32.mrb[0].mxu0
    %v2060 = vpop.f32.mrb[0].mxu0
    %v2061 = vadd.f32 %v992, %v2060
    %v2062 = vpop.f32.mrb[0].mxu0
    %2063 = vmatprep.mubr.bf16.mxu0 0
    %2064 = vmatmul.mubr.bf16.gmra.mrb[0].mxu0 %v1750
    %v2065 = vpop.f32.mrb[0].mxu0
    %v2066 = vadd.f32 %v997, %v2065
    %v2067 = vpop.f32.mrb[0].mxu0
    %v2068 = vpop.f32.mrb[0].mxu0
    %v2069 = vadd.f32 %v1000, %v2068
    %v2070 = vpop.f32.mrb[0].mxu0
    %2071 = vmatprep.mubr.bf16.mxu0 0
    %2072 = vmatmul.mubr.bf16.gmra.mrb[0].mxu0 %v1753
    %v2073 = vpop.f32.mrb[0].mxu0
    %v2074 = vadd.f32 %v1005, %v2073
    %v2075 = vpop.f32.mrb[0].mxu0
    %v2076 = vpop.f32.mrb[0].mxu0
    %v2077 = vadd.f32 %v1008, %v2076
    %v2078 = vpop.f32.mrb[0].mxu0
    %2079 = vmatprep.mubr.bf16.mxu0 0
    %2080 = vmatmul.mubr.bf16.gmra.mrb[0].mxu0 %v1756
    %v2081 = vpop.f32.mrb[0].mxu0
    %v2082 = vadd.f32 %v1013, %v2081
    %v2083 = vpop.f32.mrb[0].mxu0
    %v2084 = vpop.f32.mrb[0].mxu0
    %v2085 = vadd.f32 %v1016, %v2084
    %v2086 = vpop.f32.mrb[0].mxu0
    %2087 = vmatprep.mubr.bf16.mxu0 0
    %2088 = vmatmul.mubr.bf16.gmra.mrb[0].mxu0 %v1759
    %v2089 = vpop.f32.mrb[0].mxu0
    %v2090 = vadd.f32 %v1021, %v2089
    %v2091 = vpop.f32.mrb[0].mxu0
    %v2092 = vpop.f32.mrb[0].mxu0
    %v2093 = vadd.f32 %v1024, %v2092
    %v2094 = vpop.f32.mrb[0].mxu0
    %2095 = vmatprep.mubr.bf16.mxu0 0
    %2096 = vmatmul.mubr.bf16.gmra.mrb[0].mxu0 %v1762
    %v2097 = vpop.f32.mrb[0].mxu0
    %v2098 = vadd.f32 %v1029, %v2097
    %v2099 = vpop.f32.mrb[0].mxu0
    %v2100 = vpop.f32.mrb[0].mxu0
    %v2101 = vadd.f32 %v1032, %v2100
    %v2102 = vpop.f32.mrb[0].mxu0
    %2103 = vmatprep.mubr.bf16.mxu0 0
    %2104 = vmatmul.mubr.bf16.gmra.mrb[0].mxu0 %v1765
    %v2105 = vpop.f32.mrb[0].mxu0
    %v2106 = vadd.f32 %v1037, %v2105
    %v2107 = vpop.f32.mrb[0].mxu0
    %v2108 = vpop.f32.mrb[0].mxu0
    %v2109 = vadd.f32 %v1040, %v2108
    %v2110 = vpop.f32.mrb[0].mxu0
    %2111 = vmatprep.mubr.bf16.mxu0 0
    %2112 = vmatmul.mubr.bf16.gmra.mrb[0].mxu0 %v1768
    %v2113 = vpop.f32.mrb[0].mxu0
    %v2114 = vadd.f32 %v1045, %v2113
    %v2115 = vpop.f32.mrb[0].mxu0
    %v2116 = vpop.f32.mrb[0].mxu0
    %v2117 = vadd.f32 %v1048, %v2116
    %v2118 = vpop.f32.mrb[0].mxu0
    %2119 = vmatprep.mubr.bf16.mxu0 0
    %2120 = vmatmul.mubr.bf16.gmra.mrb[0].mxu0 %v1771
    %v2121 = vpop.f32.mrb[0].mxu0
    %v2122 = vadd.f32 %v1053, %v2121
    %v2123 = vpop.f32.mrb[0].mxu0
    %v2124 = vpop.f32.mrb[0].mxu0
    %v2125 = vadd.f32 %v1056, %v2124
    %v2126 = vpop.f32.mrb[0].mxu0
    %2127 = vmatprep.mubr.bf16.mxu0 0
    %2128 = vmatmul.mubr.bf16.gmra.mrb[0].mxu0 %v1774
    %v2129 = vpop.f32.mrb[0].mxu0
    %v2130 = vadd.f32 %v1061, %v2129
    %v2131 = vpop.f32.mrb[0].mxu0
    %v2132 = vpop.f32.mrb[0].mxu0
    %v2133 = vadd.f32 %v1064, %v2132
    %v2134 = vpop.f32.mrb[0].mxu0
    %2135 = vmatprep.mubr.bf16.mxu0 0
    %2136 = vmatmul.mubr.bf16.gmra.mrb[0].mxu0 %v1777
    %v2137 = vpop.f32.mrb[0].mxu0
    %v2138 = vadd.f32 %v1069, %v2137
    %v2139 = vpop.f32.mrb[0].mxu0
    %v2140 = vpop.f32.mrb[0].mxu0
    %v2141 = vadd.f32 %v1072, %v2140
    %v2142 = vpop.f32.mrb[0].mxu0
    %2143 = vmatprep.mubr.bf16.mxu0 0
    %2144 = vmatmul.mubr.bf16.gmra.mrb[0].mxu0 %v1780
    %v2145 = vpop.f32.mrb[0].mxu0
    %v2146 = vadd.f32 %v1077, %v2145
    %v2147 = vpop.f32.mrb[0].mxu0
    %v2148 = vpop.f32.mrb[0].mxu0
    %v2149 = vadd.f32 %v1080, %v2148
    %v2150 = vpop.f32.mrb[0].mxu0
    %2151 = vmatprep.mubr.bf16.mxu0 0
    %2152 = vmatmul.mubr.bf16.gmra.mrb[0].mxu0 %v1783
    %v2153 = vpop.f32.mrb[0].mxu0
    %v2154 = vadd.f32 %v1085, %v2153
    %v2155 = vpop.f32.mrb[0].mxu0
    %v2156 = vpop.f32.mrb[0].mxu0
    %v2157 = vadd.f32 %v1088, %v2156
    %v2158 = vpop.f32.mrb[0].mxu0
    %2159 = vmatprep.mubr.bf16.mxu0 0
    %2160 = vmatmul.mubr.bf16.gmra.mrb[0].mxu0 %v1786
    %v2161 = vpop.f32.mrb[0].mxu0
    %v2162 = vadd.f32 %v1093, %v2161
    %v2163 = vpop.f32.mrb[0].mxu0
    %v2164 = vpop.f32.mrb[0].mxu0
    %v2165 = vadd.f32 %v1096, %v2164
    %v2166 = vpop.f32.mrb[0].mxu0
    %2167 = vmatprep.mubr.bf16.mxu0 0
    %2168 = vmatmul.mubr.bf16.gmra.mrb[0].mxu0 %v1789
    %v2169 = vpop.f32.mrb[0].mxu0
    %v2170 = vadd.f32 %v1101, %v2169
    %v2171 = vpop.f32.mrb[0].mxu0
    %v2172 = vpop.f32.mrb[0].mxu0
    %v2173 = vadd.f32 %v1104, %v2172
    %v2174 = vpop.f32.mrb[0].mxu0
    %2175 = vmatprep.mubr.bf16.mxu0 0
    %2176 = vmatmul.mubr.bf16.gmra.mrb[0].mxu0 %v1792
    %v2177 = vpop.f32.mrb[0].mxu0
    %v2178 = vadd.f32 %v1109, %v2177
    %v2179 = vpop.f32.mrb[0].mxu0
    %v2180 = vpop.f32.mrb[0].mxu0
    %v2181 = vadd.f32 %v1112, %v2180
    %v2182 = vpop.f32.mrb[0].mxu0
    %2183 = vmatprep.mubr.bf16.mxu0 0
    %2184 = vmatmul.mubr.bf16.gmra.mrb[0].mxu0 %v1795
    %v2185 = vpop.f32.mrb[0].mxu0
    %v2186 = vadd.f32 %v1117, %v2185
    %v2187 = vpop.f32.mrb[0].mxu0
    %v2188 = vpop.f32.mrb[0].mxu0
    %v2189 = vadd.f32 %v1120, %v2188
    %v2190 = vpop.f32.mrb[0].mxu0
    %2191 = vmatprep.mubr.bf16.mxu0 0
    %2192 = vmatmul.mubr.bf16.gmra.mrb[0].mxu0 %v1798
    %v2193 = vpop.f32.mrb[0].mxu0
    %v2194 = vadd.f32 %v1125, %v2193
    %v2195 = vpop.f32.mrb[0].mxu0
    %v2196 = vpop.f32.mrb[0].mxu0
    %v2197 = vadd.f32 %v1128, %v2196
    %v2198 = vpop.f32.mrb[0].mxu0
    %2199 = vmatprep.mubr.bf16.mxu0 0
    %2200 = vmatmul.mubr.bf16.gmra.mrb[0].mxu0 %v1801
    %v2201 = vpop.f32.mrb[0].mxu0
    %v2202 = vadd.f32 %v1133, %v2201
    %v2203 = vpop.f32.mrb[0].mxu0
    %v2204 = vpop.f32.mrb[0].mxu0
    %v2205 = vadd.f32 %v1136, %v2204
    %v2206 = vpop.f32.mrb[0].mxu0
    %2207 = vmatprep.mubr.bf16.mxu0 0
    %2208 = vmatmul.mubr.bf16.gmra.mrb[0].mxu0 %v1804
    %v2209 = vpop.f32.mrb[0].mxu0
    %v2210 = vadd.f32 %v1141, %v2209
    %v2211 = vpop.f32.mrb[0].mxu0
    %v2212 = vpop.f32.mrb[0].mxu0
    %v2213 = vadd.f32 %v1144, %v2212
    %v2214 = vpop.f32.mrb[0].mxu0
    %2215 = vmatprep.mubr.bf16.mxu0 0
    %2216 = vmatmul.mubr.bf16.gmra.mrb[0].mxu0 %v1807
    %v2217 = vpop.f32.mrb[0].mxu0
    %v2218 = vadd.f32 %v1149, %v2217
    %v2219 = vpop.f32.mrb[0].mxu0
    %v2220 = vpop.f32.mrb[0].mxu0
    %v2221 = vadd.f32 %v1152, %v2220
    %v2222 = vpop.f32.mrb[0].mxu0
    %2223 = vmatprep.mubr.bf16.mxu0 0
    %2224 = vmatmul.mubr.bf16.gmra.mrb[0].mxu0 %v1810
    %v2225 = vpop.f32.mrb[0].mxu0
    %v2226 = vadd.f32 %v1157, %v2225
    %v2227 = vpop.f32.mrb[0].mxu0
    %v2228 = vpop.f32.mrb[0].mxu0
    %v2229 = vadd.f32 %v1160, %v2228
    %v2230 = vpop.f32.mrb[0].mxu0
    %2231 = vmatprep.mubr.bf16.mxu0 0
    %2232 = vmatmul.mubr.bf16.gmra.mrb[0].mxu0 %v1813
    %v2233 = vpop.f32.mrb[0].mxu0
    %v2234 = vadd.f32 %v1165, %v2233
    %v2235 = vpop.f32.mrb[0].mxu0
    %v2236 = vpop.f32.mrb[0].mxu0
    %v2237 = vadd.f32 %v1168, %v2236
    %v2238 = vpop.f32.mrb[0].mxu0
    %2239 = vmatprep.mubr.bf16.mxu0 0
    %2240 = vmatmul.mubr.bf16.gmra.mrb[0].mxu0 %v1816
    %v2241 = vpop.f32.mrb[0].mxu0
    %v2242 = vadd.f32 %v1173, %v2241
    %v2243 = vpop.f32.mrb[0].mxu0
    %v2244 = vpop.f32.mrb[0].mxu0
    %v2245 = vadd.f32 %v1176, %v2244
    %v2246 = vpop.f32.mrb[0].mxu0
    %2247 = vmatprep.mubr.bf16.mxu0 0
    %2248 = vmatmul.mubr.bf16.gmra.mrb[0].mxu0 %v1819
    %v2249 = vpop.f32.mrb[0].mxu0
    %v2250 = vadd.f32 %v1181, %v2249
    %v2251 = vpop.f32.mrb[0].mxu0
    %v2252 = vpop.f32.mrb[0].mxu0
    %v2253 = vadd.f32 %v1184, %v2252
    %v2254 = vpop.f32.mrb[0].mxu0
    %2255 = vmatprep.mubr.bf16.mxu0 0
    %2256 = vmatmul.mubr.bf16.gmra.mrb[0].mxu0 %v1822
    %v2257 = vpop.f32.mrb[0].mxu0
    %v2258 = vadd.f32 %v1189, %v2257
    %v2259 = vpop.f32.mrb[0].mxu0
    %v2260 = vpop.f32.mrb[0].mxu0
    %v2261 = vadd.f32 %v1192, %v2260
    %v2262 = vpop.f32.mrb[0].mxu0
    %2263 = vmatprep.mubr.bf16.mxu0 0
    %2264 = vmatmul.mubr.bf16.gmra.mrb[0].mxu0 %v1825
    %v2265 = vpop.f32.mrb[0].mxu0
    %v2266 = vadd.f32 %v1197, %v2265
    %v2267 = vpop.f32.mrb[0].mxu0
    %v2268 = vpop.f32.mrb[0].mxu0
    %v2269 = vadd.f32 %v1200, %v2268
    %v2270 = vpop.f32.mrb[0].mxu0
    %2271 = vmatprep.mubr.bf16.mxu0 0
    %2272 = vmatmul.mubr.bf16.gmra.mrb[0].mxu0 %v1828
    %v2273 = vpop.f32.mrb[0].mxu0
    %v2274 = vadd.f32 %v1205, %v2273
    %v2275 = vpop.f32.mrb[0].mxu0
    %v2276 = vpop.f32.mrb[0].mxu0
    %v2277 = vadd.f32 %v1208, %v2276
    %v2278 = vpop.f32.mrb[0].mxu0
    %2279 = vmatprep.mubr.bf16.mxu0 0
    %2280 = vmatmul.mubr.bf16.gmra.mrb[0].mxu0 %v1831
    %v2281 = vpop.f32.mrb[0].mxu0
    %v2282 = vadd.f32 %v1213, %v2281
    %v2283 = vpop.f32.mrb[0].mxu0
    %v2284 = vpop.f32.mrb[0].mxu0
    %v2285 = vadd.f32 %v1216, %v2284
    %v2286 = vpop.f32.mrb[0].mxu0
    %2287 = vmatprep.mubr.bf16.mxu0 0
    %2288 = vmatmul.mubr.bf16.gmra.mrb[0].mxu0 %v1834
    %v2289 = vpop.f32.mrb[0].mxu0
    %v2290 = vadd.f32 %v1221, %v2289
    %v2291 = vpop.f32.mrb[0].mxu0
    %v2292 = vpop.f32.mrb[0].mxu0
    %v2293 = vadd.f32 %v1224, %v2292
    %v2294 = vpop.f32.mrb[0].mxu0
    %2295 = vmatprep.mubr.bf16.mxu0 0
    %2296 = vmatmul.mubr.bf16.gmra.mrb[0].mxu0 %v1837
    %v2297 = vpop.f32.mrb[0].mxu0
    %v2298 = vadd.f32 %v1229, %v2297
    %v2299 = vpop.f32.mrb[0].mxu0
    %v2300 = vpop.f32.mrb[0].mxu0
    %v2301 = vadd.f32 %v1232, %v2300
    %v2302 = vpop.f32.mrb[0].mxu0
    %2303 = vmatprep.mubr.bf16.mxu0 0
    %2304 = vmatmul.mubr.bf16.gmra.mrb[0].mxu0 %v1840
    %v2305 = vpop.f32.mrb[0].mxu0
    %v2306 = vadd.f32 %v1237, %v2305
    %v2307 = vpop.f32.mrb[0].mxu0
    %v2308 = vpop.f32.mrb[0].mxu0
    %v2309 = vadd.f32 %v1240, %v2308
    %v2310 = vpop.f32.mrb[0].mxu0
    %2311 = vmatprep.mubr.bf16.mxu0 0
    %2312 = vmatmul.mubr.bf16.gmra.mrb[0].mxu0 %v1843
    %v2313 = vpop.f32.mrb[0].mxu0
    %v2314 = vadd.f32 %v1245, %v2313
    %v2315 = vpop.f32.mrb[0].mxu0
    %v2316 = vpop.f32.mrb[0].mxu0
    %v2317 = vadd.f32 %v1248, %v2316
    %v2318 = vpop.f32.mrb[0].mxu0
    %2319 = vmatprep.mubr.bf16.mxu0 0
    %2320 = vmatmul.mubr.bf16.gmra.mrb[0].mxu0 %v1846
    %v2321 = vpop.f32.mrb[0].mxu0
    %v2322 = vadd.f32 %v1253, %v2321
    %v2323 = vpop.f32.mrb[0].mxu0
    %v2324 = vpop.f32.mrb[0].mxu0
    %v2325 = vadd.f32 %v1256, %v2324
    %v2326 = vpop.f32.mrb[0].mxu0
    %2327 = vmatprep.mubr.bf16.mxu0 0
    %2328 = vmatmul.mubr.bf16.gmra.mrb[0].mxu0 %v1849
    %v2329 = vpop.f32.mrb[0].mxu0
    %v2330 = vadd.f32 %v1261, %v2329
    %v2331 = vpop.f32.mrb[0].mxu0
    %v2332 = vpop.f32.mrb[0].mxu0
    %v2333 = vadd.f32 %v1264, %v2332
    %v2334 = vpop.f32.mrb[0].mxu0
    %2335 = vmatprep.mubr.bf16.mxu0 0
    %2336 = vmatmul.mubr.bf16.gmra.mrb[0].mxu0 %v1852
    %v2337 = vpop.f32.mrb[0].mxu0
    %v2338 = vadd.f32 %v1269, %v2337
    %v2339 = vpop.f32.mrb[0].mxu0
    %v2340 = vpop.f32.mrb[0].mxu0
    %v2341 = vadd.f32 %v1272, %v2340
    %v2342 = vpop.f32.mrb[0].mxu0
    %2343 = vmatprep.mubr.bf16.mxu0 0
    %2344 = vmatmul.mubr.bf16.gmra.mrb[0].mxu0 %v1855
    %v2345 = vpop.f32.mrb[0].mxu0
    %v2346 = vadd.f32 %v1277, %v2345
    %v2347 = vpop.f32.mrb[0].mxu0
    %v2348 = vpop.f32.mrb[0].mxu0
    %v2349 = vadd.f32 %v1280, %v2348
    %v2350 = vpop.f32.mrb[0].mxu0
    %2351 = vmatprep.mubr.bf16.mxu0 0
    %2352 = vmatmul.mubr.bf16.gmra.mrb[0].mxu0 %v1858
    %v2353 = vpop.f32.mrb[0].mxu0
    %v2354 = vadd.f32 %v1285, %v2353
    %v2355 = vpop.f32.mrb[0].mxu0
    %v2356 = vpop.f32.mrb[0].mxu0
    %v2357 = vadd.f32 %v1288, %v2356
    %v2358 = vpop.f32.mrb[0].mxu0
    %2359 = vmatprep.mubr.bf16.mxu0 0
    %2360 = vmatmul.mubr.bf16.gmra.mrb[0].mxu0 %v1861
    %v2361 = vpop.f32.mrb[0].mxu0
    %v2362 = vadd.f32 %v1293, %v2361
    %v2363 = vpop.f32.mrb[0].mxu0
    %v2364 = vpop.f32.mrb[0].mxu0
    %v2365 = vadd.f32 %v1296, %v2364
    %v2366 = vpop.f32.mrb[0].mxu0
    %2367 = vmatprep.mubr.bf16.mxu0 0
    %2368 = vmatmul.mubr.bf16.gmra.mrb[0].mxu0 %v1864
    %v2369 = vpop.f32.mrb[0].mxu0
    %v2370 = vadd.f32 %v1301, %v2369
    %v2371 = vpop.f32.mrb[0].mxu0
    %v2372 = vpop.f32.mrb[0].mxu0
    %v2373 = vadd.f32 %v1304, %v2372
    %v2374 = vpop.f32.mrb[0].mxu0
    %2375 = vmatprep.mubr.bf16.mxu0 0
    %2376 = vmatmul.mubr.bf16.gmra.mrb[0].mxu0 %v1867
    %v2377 = vpop.f32.mrb[0].mxu0
    %v2378 = vadd.f32 %v1309, %v2377
    %v2379 = vpop.f32.mrb[0].mxu0
    %v2380 = vpop.f32.mrb[0].mxu0
    %v2381 = vadd.f32 %v1312, %v2380
    %v2382 = vpop.f32.mrb[0].mxu0
    %2383 = vmatprep.mubr.bf16.mxu0 0
    %2384 = vmatmul.mubr.bf16.gmra.mrb[0].mxu0 %v1870
    %v2385 = vpop.f32.mrb[0].mxu0
    %v2386 = vadd.f32 %v1317, %v2385
    %v2387 = vpop.f32.mrb[0].mxu0
    %v2388 = vpop.f32.mrb[0].mxu0
    %v2389 = vadd.f32 %v1320, %v2388
    %v2390 = vpop.f32.mrb[0].mxu0
    %2391 = vmatprep.mubr.bf16.mxu0 0
    %2392 = vmatmul.mubr.bf16.gmra.mrb[0].mxu0 %v1873
    %v2393 = vpop.f32.mrb[0].mxu0
    %v2394 = vadd.f32 %v1325, %v2393
    %v2395 = vpop.f32.mrb[0].mxu0
    %v2396 = vpop.f32.mrb[0].mxu0
    %v2397 = vadd.f32 %v1328, %v2396
    %v2398 = vpop.f32.mrb[0].mxu0
    %2399 = vmatprep.mubr.bf16.mxu0 0
    %2400 = vmatmul.mubr.bf16.gmra.mrb[0].mxu0 %v1876
    %v2401 = vpop.f32.mrb[0].mxu0
    %v2402 = vadd.f32 %v1333, %v2401
    %v2403 = vpop.f32.mrb[0].mxu0
    %v2404 = vpop.f32.mrb[0].mxu0
    %v2405 = vadd.f32 %v1336, %v2404
    %v2406 = vpop.f32.mrb[0].mxu0
    %2407 = vmatprep.mubr.bf16.mxu0 0
    %2408 = vmatmul.mubr.bf16.gmra.mrb[0].mxu0 %v1879
    %v2409 = vpop.f32.mrb[0].mxu0
    %v2410 = vadd.f32 %v1341, %v2409
    %v2411 = vpop.f32.mrb[0].mxu0
    %v2412 = vpop.f32.mrb[0].mxu0
    %v2413 = vadd.f32 %v1344, %v2412
    %v2414 = vpop.f32.mrb[0].mxu0
    %2415 = vmatprep.mubr.bf16.mxu0 0
    %2416 = vmatmul.mubr.bf16.gmra.mrb[0].mxu0 %v1882
    %v2417 = vpop.f32.mrb[0].mxu0
    %v2418 = vadd.f32 %v1349, %v2417
    %v2419 = vpop.f32.mrb[0].mxu0
    %v2420 = vpop.f32.mrb[0].mxu0
    %v2421 = vadd.f32 %v1352, %v2420
    %v2422 = vpop.f32.mrb[0].mxu0
    %2423 = vmatprep.mubr.bf16.mxu0 0
    %2424 = vmatmul.mubr.bf16.gmra.mrb[0].mxu0 %v1885
    %v2425 = vpop.f32.mrb[0].mxu0
    %v2426 = vadd.f32 %v1357, %v2425
    %v2427 = vpop.f32.mrb[0].mxu0
    %v2428 = vpop.f32.mrb[0].mxu0
    %v2429 = vadd.f32 %v1360, %v2428
    %v2430 = vpop.f32.mrb[0].mxu0
    %2431 = vdwg.mxu0
    %v2432 = vld [vmem:[%s4] sm:$0x1]
    %v2434 = vlaneseq
    %v2435 = vshrl.u32 %v2434, 7
    %v2436 = vsub.s32 0, %v2435
    %v2437 = vrot.slane %v2432, %v2436
    %v2439 = vadd.f32 %v1922, %v2437
    %v2440 = vadd.f32 %v1925, %v2437
    %v2441 = vadd.f32 %v1930, %v2437
    %v2442 = vadd.f32 %v1933, %v2437
    %v2443 = vadd.f32 %v1938, %v2437
    %v2444 = vadd.f32 %v1941, %v2437
    %v2445 = vadd.f32 %v1946, %v2437
    %v2446 = vadd.f32 %v1949, %v2437
    %v2447 = vadd.f32 %v1954, %v2437
    %v2448 = vadd.f32 %v1957, %v2437
    %v2449 = vadd.f32 %v1962, %v2437
    %v2450 = vadd.f32 %v1965, %v2437
    %v2451 = vadd.f32 %v1970, %v2437
    %v2452 = vadd.f32 %v1973, %v2437
    %v2453 = vadd.f32 %v1978, %v2437
    %v2454 = vadd.f32 %v1981, %v2437
    %v2455 = vadd.f32 %v1986, %v2437
    %v2456 = vadd.f32 %v1989, %v2437
    %v2457 = vadd.f32 %v1994, %v2437
    %v2458 = vadd.f32 %v1997, %v2437
    %v2459 = vadd.f32 %v2002, %v2437
    %v2460 = vadd.f32 %v2005, %v2437
    %v2461 = vadd.f32 %v2010, %v2437
    %v2462 = vadd.f32 %v2013, %v2437
    %v2463 = vadd.f32 %v2018, %v2437
    %v2464 = vadd.f32 %v2021, %v2437
    %v2465 = vadd.f32 %v2026, %v2437
    %v2466 = vadd.f32 %v2029, %v2437
    %v2467 = vadd.f32 %v2034, %v2437
    %v2468 = vadd.f32 %v2037, %v2437
    %v2469 = vadd.f32 %v2042, %v2437
    %v2470 = vadd.f32 %v2045, %v2437
    %v2471 = vadd.f32 %v2050, %v2437
    %v2472 = vadd.f32 %v2053, %v2437
    %v2473 = vadd.f32 %v2058, %v2437
    %v2474 = vadd.f32 %v2061, %v2437
    %v2475 = vadd.f32 %v2066, %v2437
    %v2476 = vadd.f32 %v2069, %v2437
    %v2477 = vadd.f32 %v2074, %v2437
    %v2478 = vadd.f32 %v2077, %v2437
    %v2479 = vadd.f32 %v2082, %v2437
    %v2480 = vadd.f32 %v2085, %v2437
    %v2481 = vadd.f32 %v2090, %v2437
    %v2482 = vadd.f32 %v2093, %v2437
    %v2483 = vadd.f32 %v2098, %v2437
    %v2484 = vadd.f32 %v2101, %v2437
    %v2485 = vadd.f32 %v2106, %v2437
    %v2486 = vadd.f32 %v2109, %v2437
    %v2487 = vadd.f32 %v2114, %v2437
    %v2488 = vadd.f32 %v2117, %v2437
    %v2489 = vadd.f32 %v2122, %v2437
    %v2490 = vadd.f32 %v2125, %v2437
    %v2491 = vadd.f32 %v2130, %v2437
    %v2492 = vadd.f32 %v2133, %v2437
    %v2493 = vadd.f32 %v2138, %v2437
    %v2494 = vadd.f32 %v2141, %v2437
    %v2495 = vadd.f32 %v2146, %v2437
    %v2496 = vadd.f32 %v2149, %v2437
    %v2497 = vadd.f32 %v2154, %v2437
    %v2498 = vadd.f32 %v2157, %v2437
    %v2499 = vadd.f32 %v2162, %v2437
    %v2500 = vadd.f32 %v2165, %v2437
    %v2501 = vadd.f32 %v2170, %v2437
    %v2502 = vadd.f32 %v2173, %v2437
    %v2503 = vadd.f32 %v2178, %v2437
    %v2504 = vadd.f32 %v2181, %v2437
    %v2505 = vadd.f32 %v2186, %v2437
    %v2506 = vadd.f32 %v2189, %v2437
    %v2507 = vadd.f32 %v2194, %v2437
    %v2508 = vadd.f32 %v2197, %v2437
    %v2509 = vadd.f32 %v2202, %v2437
    %v2510 = vadd.f32 %v2205, %v2437
    %v2511 = vadd.f32 %v2210, %v2437
    %v2512 = vadd.f32 %v2213, %v2437
    %v2513 = vadd.f32 %v2218, %v2437
    %v2514 = vadd.f32 %v2221, %v2437
    %v2515 = vadd.f32 %v2226, %v2437
    %v2516 = vadd.f32 %v2229, %v2437
    %v2517 = vadd.f32 %v2234, %v2437
    %v2518 = vadd.f32 %v2237, %v2437
    %v2519 = vadd.f32 %v2242, %v2437
    %v2520 = vadd.f32 %v2245, %v2437
    %v2521 = vadd.f32 %v2250, %v2437
    %v2522 = vadd.f32 %v2253, %v2437
    %v2523 = vadd.f32 %v2258, %v2437
    %v2524 = vadd.f32 %v2261, %v2437
    %v2525 = vadd.f32 %v2266, %v2437
    %v2526 = vadd.f32 %v2269, %v2437
    %v2527 = vadd.f32 %v2274, %v2437
    %v2528 = vadd.f32 %v2277, %v2437
    %v2529 = vadd.f32 %v2282, %v2437
    %v2530 = vadd.f32 %v2285, %v2437
    %v2531 = vadd.f32 %v2290, %v2437
    %v2532 = vadd.f32 %v2293, %v2437
    %v2533 = vadd.f32 %v2298, %v2437
    %v2534 = vadd.f32 %v2301, %v2437
    %v2535 = vadd.f32 %v2306, %v2437
    %v2536 = vadd.f32 %v2309, %v2437
    %v2537 = vadd.f32 %v2314, %v2437
    %v2538 = vadd.f32 %v2317, %v2437
    %v2539 = vadd.f32 %v2322, %v2437
    %v2540 = vadd.f32 %v2325, %v2437
    %v2541 = vadd.f32 %v2330, %v2437
    %v2542 = vadd.f32 %v2333, %v2437
    %v2543 = vadd.f32 %v2338, %v2437
    %v2544 = vadd.f32 %v2341, %v2437
    %v2545 = vadd.f32 %v2346, %v2437
    %v2546 = vadd.f32 %v2349, %v2437
    %v2547 = vadd.f32 %v2354, %v2437
    %v2548 = vadd.f32 %v2357, %v2437
    %v2549 = vadd.f32 %v2362, %v2437
    %v2550 = vadd.f32 %v2365, %v2437
    %v2551 = vadd.f32 %v2370, %v2437
    %v2552 = vadd.f32 %v2373, %v2437
    %v2553 = vadd.f32 %v2378, %v2437
    %v2554 = vadd.f32 %v2381, %v2437
    %v2555 = vadd.f32 %v2386, %v2437
    %v2556 = vadd.f32 %v2389, %v2437
    %v2557 = vadd.f32 %v2394, %v2437
    %v2558 = vadd.f32 %v2397, %v2437
    %v2559 = vadd.f32 %v2402, %v2437
    %v2560 = vadd.f32 %v2405, %v2437
    %v2561 = vadd.f32 %v2410, %v2437
    %v2562 = vadd.f32 %v2413, %v2437
    %v2563 = vadd.f32 %v2418, %v2437
    %v2564 = vadd.f32 %v2421, %v2437
    %v2565 = vadd.f32 %v2426, %v2437
    %v2566 = vadd.f32 %v2429, %v2437
    %v2567 = vmax.f32 %v2439, 0.0
    %v2568 = vmax.f32 %v2440, 0.0
    %v2569 = vmax.f32 %v2441, 0.0
    %v2570 = vmax.f32 %v2442, 0.0
    %v2571 = vmax.f32 %v2443, 0.0
    %v2572 = vmax.f32 %v2444, 0.0
    %v2573 = vmax.f32 %v2445, 0.0
    %v2574 = vmax.f32 %v2446, 0.0
    %v2575 = vmax.f32 %v2447, 0.0
    %v2576 = vmax.f32 %v2448, 0.0
    %v2577 = vmax.f32 %v2449, 0.0
    %v2578 = vmax.f32 %v2450, 0.0
    %v2579 = vmax.f32 %v2451, 0.0
    %v2580 = vmax.f32 %v2452, 0.0
    %v2581 = vmax.f32 %v2453, 0.0
    %v2582 = vmax.f32 %v2454, 0.0
    %v2583 = vmax.f32 %v2455, 0.0
    %v2584 = vmax.f32 %v2456, 0.0
    %v2585 = vmax.f32 %v2457, 0.0
    %v2586 = vmax.f32 %v2458, 0.0
    %v2587 = vmax.f32 %v2459, 0.0
    %v2588 = vmax.f32 %v2460, 0.0
    %v2589 = vmax.f32 %v2461, 0.0
    %v2590 = vmax.f32 %v2462, 0.0
    %v2591 = vmax.f32 %v2463, 0.0
    %v2592 = vmax.f32 %v2464, 0.0
    %v2593 = vmax.f32 %v2465, 0.0
    %v2594 = vmax.f32 %v2466, 0.0
    %v2595 = vmax.f32 %v2467, 0.0
    %v2596 = vmax.f32 %v2468, 0.0
    %v2597 = vmax.f32 %v2469, 0.0
    %v2598 = vmax.f32 %v2470, 0.0
    %v2599 = vmax.f32 %v2471, 0.0
    %v2600 = vmax.f32 %v2472, 0.0
    %v2601 = vmax.f32 %v2473, 0.0
    %v2602 = vmax.f32 %v2474, 0.0
    %v2603 = vmax.f32 %v2475, 0.0
    %v2604 = vmax.f32 %v2476, 0.0
    %v2605 = vmax.f32 %v2477, 0.0
    %v2606 = vmax.f32 %v2478, 0.0
    %v2607 = vmax.f32 %v2479, 0.0
    %v2608 = vmax.f32 %v2480, 0.0
    %v2609 = vmax.f32 %v2481, 0.0
    %v2610 = vmax.f32 %v2482, 0.0
    %v2611 = vmax.f32 %v2483, 0.0
    %v2612 = vmax.f32 %v2484, 0.0
    %v2613 = vmax.f32 %v2485, 0.0
    %v2614 = vmax.f32 %v2486, 0.0
    %v2615 = vmax.f32 %v2487, 0.0
    %v2616 = vmax.f32 %v2488, 0.0
    %v2617 = vmax.f32 %v2489, 0.0
    %v2618 = vmax.f32 %v2490, 0.0
    %v2619 = vmax.f32 %v2491, 0.0
    %v2620 = vmax.f32 %v2492, 0.0
    %v2621 = vmax.f32 %v2493, 0.0
    %v2622 = vmax.f32 %v2494, 0.0
    %v2623 = vmax.f32 %v2495, 0.0
    %v2624 = vmax.f32 %v2496, 0.0
    %v2625 = vmax.f32 %v2497, 0.0
    %v2626 = vmax.f32 %v2498, 0.0
    %v2627 = vmax.f32 %v2499, 0.0
    %v2628 = vmax.f32 %v2500, 0.0
    %v2629 = vmax.f32 %v2501, 0.0
    %v2630 = vmax.f32 %v2502, 0.0
    %v2631 = vmax.f32 %v2503, 0.0
    %v2632 = vmax.f32 %v2504, 0.0
    %v2633 = vmax.f32 %v2505, 0.0
    %v2634 = vmax.f32 %v2506, 0.0
    %v2635 = vmax.f32 %v2507, 0.0
    %v2636 = vmax.f32 %v2508, 0.0
    %v2637 = vmax.f32 %v2509, 0.0
    %v2638 = vmax.f32 %v2510, 0.0
    %v2639 = vmax.f32 %v2511, 0.0
    %v2640 = vmax.f32 %v2512, 0.0
    %v2641 = vmax.f32 %v2513, 0.0
    %v2642 = vmax.f32 %v2514, 0.0
    %v2643 = vmax.f32 %v2515, 0.0
    %v2644 = vmax.f32 %v2516, 0.0
    %v2645 = vmax.f32 %v2517, 0.0
    %v2646 = vmax.f32 %v2518, 0.0
    %v2647 = vmax.f32 %v2519, 0.0
    %v2648 = vmax.f32 %v2520, 0.0
    %v2649 = vmax.f32 %v2521, 0.0
    %v2650 = vmax.f32 %v2522, 0.0
    %v2651 = vmax.f32 %v2523, 0.0
    %v2652 = vmax.f32 %v2524, 0.0
    %v2653 = vmax.f32 %v2525, 0.0
    %v2654 = vmax.f32 %v2526, 0.0
    %v2655 = vmax.f32 %v2527, 0.0
    %v2656 = vmax.f32 %v2528, 0.0
    %v2657 = vmax.f32 %v2529, 0.0
    %v2658 = vmax.f32 %v2530, 0.0
    %v2659 = vmax.f32 %v2531, 0.0
    %v2660 = vmax.f32 %v2532, 0.0
    %v2661 = vmax.f32 %v2533, 0.0
    %v2662 = vmax.f32 %v2534, 0.0
    %v2663 = vmax.f32 %v2535, 0.0
    %v2664 = vmax.f32 %v2536, 0.0
    %v2665 = vmax.f32 %v2537, 0.0
    %v2666 = vmax.f32 %v2538, 0.0
    %v2667 = vmax.f32 %v2539, 0.0
    %v2668 = vmax.f32 %v2540, 0.0
    %v2669 = vmax.f32 %v2541, 0.0
    %v2670 = vmax.f32 %v2542, 0.0
    %v2671 = vmax.f32 %v2543, 0.0
    %v2672 = vmax.f32 %v2544, 0.0
    %v2673 = vmax.f32 %v2545, 0.0
    %v2674 = vmax.f32 %v2546, 0.0
    %v2675 = vmax.f32 %v2547, 0.0
    %v2676 = vmax.f32 %v2548, 0.0
    %v2677 = vmax.f32 %v2549, 0.0
    %v2678 = vmax.f32 %v2550, 0.0
    %v2679 = vmax.f32 %v2551, 0.0
    %v2680 = vmax.f32 %v2552, 0.0
    %v2681 = vmax.f32 %v2553, 0.0
    %v2682 = vmax.f32 %v2554, 0.0
    %v2683 = vmax.f32 %v2555, 0.0
    %v2684 = vmax.f32 %v2556, 0.0
    %v2685 = vmax.f32 %v2557, 0.0
    %v2686 = vmax.f32 %v2558, 0.0
    %v2687 = vmax.f32 %v2559, 0.0
    %v2688 = vmax.f32 %v2560, 0.0
    %v2689 = vmax.f32 %v2561, 0.0
    %v2690 = vmax.f32 %v2562, 0.0
    %v2691 = vmax.f32 %v2563, 0.0
    %v2692 = vmax.f32 %v2564, 0.0
    %v2693 = vmax.f32 %v2565, 0.0
    %v2694 = vmax.f32 %v2566, 0.0
    %v2695 = vld [vmem:[%s5] sm:$0x1]
    %v2697 = vlaneseq
    %v2698 = vshrl.u32 %v2697, 7
    %v2699 = vsub.s32 0, %v2698
    %v2700 = vrot.slane %v2695, %v2699
    %v2702 = vmul.f32 %v2567, %v2700
    %v2703 = vmul.f32 %v2568, %v2700
    %v2704 = vmul.f32 %v2569, %v2700
    %v2705 = vmul.f32 %v2570, %v2700
    %v2706 = vmul.f32 %v2571, %v2700
    %v2707 = vmul.f32 %v2572, %v2700
    %v2708 = vmul.f32 %v2573, %v2700
    %v2709 = vmul.f32 %v2574, %v2700
    %v2710 = vmul.f32 %v2575, %v2700
    %v2711 = vmul.f32 %v2576, %v2700
    %v2712 = vmul.f32 %v2577, %v2700
    %v2713 = vmul.f32 %v2578, %v2700
    %v2714 = vmul.f32 %v2579, %v2700
    %v2715 = vmul.f32 %v2580, %v2700
    %v2716 = vmul.f32 %v2581, %v2700
    %v2717 = vmul.f32 %v2582, %v2700
    %v2718 = vmul.f32 %v2583, %v2700
    %v2719 = vmul.f32 %v2584, %v2700
    %v2720 = vmul.f32 %v2585, %v2700
    %v2721 = vmul.f32 %v2586, %v2700
    %v2722 = vmul.f32 %v2587, %v2700
    %v2723 = vmul.f32 %v2588, %v2700
    %v2724 = vmul.f32 %v2589, %v2700
    %v2725 = vmul.f32 %v2590, %v2700
    %v2726 = vmul.f32 %v2591, %v2700
    %v2727 = vmul.f32 %v2592, %v2700
    %v2728 = vmul.f32 %v2593, %v2700
    %v2729 = vmul.f32 %v2594, %v2700
    %v2730 = vmul.f32 %v2595, %v2700
    %v2731 = vmul.f32 %v2596, %v2700
    %v2732 = vmul.f32 %v2597, %v2700
    %v2733 = vmul.f32 %v2598, %v2700
    %v2734 = vmul.f32 %v2599, %v2700
    %v2735 = vmul.f32 %v2600, %v2700
    %v2736 = vmul.f32 %v2601, %v2700
    %v2737 = vmul.f32 %v2602, %v2700
    %v2738 = vmul.f32 %v2603, %v2700
    %v2739 = vmul.f32 %v2604, %v2700
    %v2740 = vmul.f32 %v2605, %v2700
    %v2741 = vmul.f32 %v2606, %v2700
    %v2742 = vmul.f32 %v2607, %v2700
    %v2743 = vmul.f32 %v2608, %v2700
    %v2744 = vmul.f32 %v2609, %v2700
    %v2745 = vmul.f32 %v2610, %v2700
    %v2746 = vmul.f32 %v2611, %v2700
    %v2747 = vmul.f32 %v2612, %v2700
    %v2748 = vmul.f32 %v2613, %v2700
    %v2749 = vmul.f32 %v2614, %v2700
    %v2750 = vmul.f32 %v2615, %v2700
    %v2751 = vmul.f32 %v2616, %v2700
    %v2752 = vmul.f32 %v2617, %v2700
    %v2753 = vmul.f32 %v2618, %v2700
    %v2754 = vmul.f32 %v2619, %v2700
    %v2755 = vmul.f32 %v2620, %v2700
    %v2756 = vmul.f32 %v2621, %v2700
    %v2757 = vmul.f32 %v2622, %v2700
    %v2758 = vmul.f32 %v2623, %v2700
    %v2759 = vmul.f32 %v2624, %v2700
    %v2760 = vmul.f32 %v2625, %v2700
    %v2761 = vmul.f32 %v2626, %v2700
    %v2762 = vmul.f32 %v2627, %v2700
    %v2763 = vmul.f32 %v2628, %v2700
    %v2764 = vmul.f32 %v2629, %v2700
    %v2765 = vmul.f32 %v2630, %v2700
    %v2766 = vmul.f32 %v2631, %v2700
    %v2767 = vmul.f32 %v2632, %v2700
    %v2768 = vmul.f32 %v2633, %v2700
    %v2769 = vmul.f32 %v2634, %v2700
    %v2770 = vmul.f32 %v2635, %v2700
    %v2771 = vmul.f32 %v2636, %v2700
    %v2772 = vmul.f32 %v2637, %v2700
    %v2773 = vmul.f32 %v2638, %v2700
    %v2774 = vmul.f32 %v2639, %v2700
    %v2775 = vmul.f32 %v2640, %v2700
    %v2776 = vmul.f32 %v2641, %v2700
    %v2777 = vmul.f32 %v2642, %v2700
    %v2778 = vmul.f32 %v2643, %v2700
    %v2779 = vmul.f32 %v2644, %v2700
    %v2780 = vmul.f32 %v2645, %v2700
    %v2781 = vmul.f32 %v2646, %v2700
    %v2782 = vmul.f32 %v2647, %v2700
    %v2783 = vmul.f32 %v2648, %v2700
    %v2784 = vmul.f32 %v2649, %v2700
    %v2785 = vmul.f32 %v2650, %v2700
    %v2786 = vmul.f32 %v2651, %v2700
    %v2787 = vmul.f32 %v2652, %v2700
    %v2788 = vmul.f32 %v2653, %v2700
    %v2789 = vmul.f32 %v2654, %v2700
    %v2790 = vmul.f32 %v2655, %v2700
    %v2791 = vmul.f32 %v2656, %v2700
    %v2792 = vmul.f32 %v2657, %v2700
    %v2793 = vmul.f32 %v2658, %v2700
    %v2794 = vmul.f32 %v2659, %v2700
    %v2795 = vmul.f32 %v2660, %v2700
    %v2796 = vmul.f32 %v2661, %v2700
    %v2797 = vmul.f32 %v2662, %v2700
    %v2798 = vmul.f32 %v2663, %v2700
    %v2799 = vmul.f32 %v2664, %v2700
    %v2800 = vmul.f32 %v2665, %v2700
    %v2801 = vmul.f32 %v2666, %v2700
    %v2802 = vmul.f32 %v2667, %v2700
    %v2803 = vmul.f32 %v2668, %v2700
    %v2804 = vmul.f32 %v2669, %v2700
    %v2805 = vmul.f32 %v2670, %v2700
    %v2806 = vmul.f32 %v2671, %v2700
    %v2807 = vmul.f32 %v2672, %v2700
    %v2808 = vmul.f32 %v2673, %v2700
    %v2809 = vmul.f32 %v2674, %v2700
    %v2810 = vmul.f32 %v2675, %v2700
    %v2811 = vmul.f32 %v2676, %v2700
    %v2812 = vmul.f32 %v2677, %v2700
    %v2813 = vmul.f32 %v2678, %v2700
    %v2814 = vmul.f32 %v2679, %v2700
    %v2815 = vmul.f32 %v2680, %v2700
    %v2816 = vmul.f32 %v2681, %v2700
    %v2817 = vmul.f32 %v2682, %v2700
    %v2818 = vmul.f32 %v2683, %v2700
    %v2819 = vmul.f32 %v2684, %v2700
    %v2820 = vmul.f32 %v2685, %v2700
    %v2821 = vmul.f32 %v2686, %v2700
    %v2822 = vmul.f32 %v2687, %v2700
    %v2823 = vmul.f32 %v2688, %v2700
    %v2824 = vmul.f32 %v2689, %v2700
    %v2825 = vmul.f32 %v2690, %v2700
    %v2826 = vmul.f32 %v2691, %v2700
    %v2827 = vmul.f32 %v2692, %v2700
    %v2828 = vmul.f32 %v2693, %v2700
    %v2829 = vmul.f32 %v2694, %v2700
    %v2830 = vsel %vm625, %v2702, 0.0
    %2831 = vadd.xlane.f32.xlu0 %v2830
    %v2832 = vpop.xlane.xlu0 %2831
    %v2833 = vsel %vm625, %v2703, 0.0
    %2834 = vadd.xlane.f32.xlu0 %v2833
    %v2835 = vpop.xlane.xlu0 %2834
    %v2836 = vsel %vm625, %v2704, 0.0
    %2837 = vadd.xlane.f32.xlu0 %v2836
    %v2838 = vpop.xlane.xlu0 %2837
    %v2839 = vsel %vm625, %v2705, 0.0
    %2840 = vadd.xlane.f32.xlu0 %v2839
    %v2841 = vpop.xlane.xlu0 %2840
    %v2842 = vsel %vm625, %v2706, 0.0
    %2843 = vadd.xlane.f32.xlu0 %v2842
    %v2844 = vpop.xlane.xlu0 %2843
    %v2845 = vsel %vm625, %v2707, 0.0
    %2846 = vadd.xlane.f32.xlu0 %v2845
    %v2847 = vpop.xlane.xlu0 %2846
    %v2848 = vsel %vm625, %v2708, 0.0
    %2849 = vadd.xlane.f32.xlu0 %v2848
    %v2850 = vpop.xlane.xlu0 %2849
    %v2851 = vsel %vm625, %v2709, 0.0
    %2852 = vadd.xlane.f32.xlu0 %v2851
    %v2853 = vpop.xlane.xlu0 %2852
    %v2854 = vsel %vm625, %v2710, 0.0
    %2855 = vadd.xlane.f32.xlu0 %v2854
    %v2856 = vpop.xlane.xlu0 %2855
    %v2857 = vsel %vm625, %v2711, 0.0
    %2858 = vadd.xlane.f32.xlu0 %v2857
    %v2859 = vpop.xlane.xlu0 %2858
    %v2860 = vsel %vm625, %v2712, 0.0
    %2861 = vadd.xlane.f32.xlu0 %v2860
    %v2862 = vpop.xlane.xlu0 %2861
    %v2863 = vsel %vm625, %v2713, 0.0
    %2864 = vadd.xlane.f32.xlu0 %v2863
    %v2865 = vpop.xlane.xlu0 %2864
    %v2866 = vsel %vm625, %v2714, 0.0
    %2867 = vadd.xlane.f32.xlu0 %v2866
    %v2868 = vpop.xlane.xlu0 %2867
    %v2869 = vsel %vm625, %v2715, 0.0
    %2870 = vadd.xlane.f32.xlu0 %v2869
    %v2871 = vpop.xlane.xlu0 %2870
    %v2872 = vsel %vm625, %v2716, 0.0
    %2873 = vadd.xlane.f32.xlu0 %v2872
    %v2874 = vpop.xlane.xlu0 %2873
    %v2875 = vsel %vm625, %v2717, 0.0
    %2876 = vadd.xlane.f32.xlu0 %v2875
    %v2877 = vpop.xlane.xlu0 %2876
    %v2878 = vsel %vm625, %v2718, 0.0
    %2879 = vadd.xlane.f32.xlu0 %v2878
    %v2880 = vpop.xlane.xlu0 %2879
    %v2881 = vsel %vm625, %v2719, 0.0
    %2882 = vadd.xlane.f32.xlu0 %v2881
    %v2883 = vpop.xlane.xlu0 %2882
    %v2884 = vsel %vm625, %v2720, 0.0
    %2885 = vadd.xlane.f32.xlu0 %v2884
    %v2886 = vpop.xlane.xlu0 %2885
    %v2887 = vsel %vm625, %v2721, 0.0
    %2888 = vadd.xlane.f32.xlu0 %v2887
    %v2889 = vpop.xlane.xlu0 %2888
    %v2890 = vsel %vm625, %v2722, 0.0
    %2891 = vadd.xlane.f32.xlu0 %v2890
    %v2892 = vpop.xlane.xlu0 %2891
    %v2893 = vsel %vm625, %v2723, 0.0
    %2894 = vadd.xlane.f32.xlu0 %v2893
    %v2895 = vpop.xlane.xlu0 %2894
    %v2896 = vsel %vm625, %v2724, 0.0
    %2897 = vadd.xlane.f32.xlu0 %v2896
    %v2898 = vpop.xlane.xlu0 %2897
    %v2899 = vsel %vm625, %v2725, 0.0
    %2900 = vadd.xlane.f32.xlu0 %v2899
    %v2901 = vpop.xlane.xlu0 %2900
    %v2902 = vsel %vm625, %v2726, 0.0
    %2903 = vadd.xlane.f32.xlu0 %v2902
    %v2904 = vpop.xlane.xlu0 %2903
    %v2905 = vsel %vm625, %v2727, 0.0
    %2906 = vadd.xlane.f32.xlu0 %v2905
    %v2907 = vpop.xlane.xlu0 %2906
    %v2908 = vsel %vm625, %v2728, 0.0
    %2909 = vadd.xlane.f32.xlu0 %v2908
    %v2910 = vpop.xlane.xlu0 %2909
    %v2911 = vsel %vm625, %v2729, 0.0
    %2912 = vadd.xlane.f32.xlu0 %v2911
    %v2913 = vpop.xlane.xlu0 %2912
    %v2914 = vsel %vm625, %v2730, 0.0
    %2915 = vadd.xlane.f32.xlu0 %v2914
    %v2916 = vpop.xlane.xlu0 %2915
    %v2917 = vsel %vm625, %v2731, 0.0
    %2918 = vadd.xlane.f32.xlu0 %v2917
    %v2919 = vpop.xlane.xlu0 %2918
    %v2920 = vsel %vm625, %v2732, 0.0
    %2921 = vadd.xlane.f32.xlu0 %v2920
    %v2922 = vpop.xlane.xlu0 %2921
    %v2923 = vsel %vm625, %v2733, 0.0
    %2924 = vadd.xlane.f32.xlu0 %v2923
    %v2925 = vpop.xlane.xlu0 %2924
    %v2926 = vsel %vm625, %v2734, 0.0
    %2927 = vadd.xlane.f32.xlu0 %v2926
    %v2928 = vpop.xlane.xlu0 %2927
    %v2929 = vsel %vm625, %v2735, 0.0
    %2930 = vadd.xlane.f32.xlu0 %v2929
    %v2931 = vpop.xlane.xlu0 %2930
    %v2932 = vsel %vm625, %v2736, 0.0
    %2933 = vadd.xlane.f32.xlu0 %v2932
    %v2934 = vpop.xlane.xlu0 %2933
    %v2935 = vsel %vm625, %v2737, 0.0
    %2936 = vadd.xlane.f32.xlu0 %v2935
    %v2937 = vpop.xlane.xlu0 %2936
    %v2938 = vsel %vm625, %v2738, 0.0
    %2939 = vadd.xlane.f32.xlu0 %v2938
    %v2940 = vpop.xlane.xlu0 %2939
    %v2941 = vsel %vm625, %v2739, 0.0
    %2942 = vadd.xlane.f32.xlu0 %v2941
    %v2943 = vpop.xlane.xlu0 %2942
    %v2944 = vsel %vm625, %v2740, 0.0
    %2945 = vadd.xlane.f32.xlu0 %v2944
    %v2946 = vpop.xlane.xlu0 %2945
    %v2947 = vsel %vm625, %v2741, 0.0
    %2948 = vadd.xlane.f32.xlu0 %v2947
    %v2949 = vpop.xlane.xlu0 %2948
    %v2950 = vsel %vm625, %v2742, 0.0
    %2951 = vadd.xlane.f32.xlu0 %v2950
    %v2952 = vpop.xlane.xlu0 %2951
    %v2953 = vsel %vm625, %v2743, 0.0
    %2954 = vadd.xlane.f32.xlu0 %v2953
    %v2955 = vpop.xlane.xlu0 %2954
    %v2956 = vsel %vm625, %v2744, 0.0
    %2957 = vadd.xlane.f32.xlu0 %v2956
    %v2958 = vpop.xlane.xlu0 %2957
    %v2959 = vsel %vm625, %v2745, 0.0
    %2960 = vadd.xlane.f32.xlu0 %v2959
    %v2961 = vpop.xlane.xlu0 %2960
    %v2962 = vsel %vm625, %v2746, 0.0
    %2963 = vadd.xlane.f32.xlu0 %v2962
    %v2964 = vpop.xlane.xlu0 %2963
    %v2965 = vsel %vm625, %v2747, 0.0
    %2966 = vadd.xlane.f32.xlu0 %v2965
    %v2967 = vpop.xlane.xlu0 %2966
    %v2968 = vsel %vm625, %v2748, 0.0
    %2969 = vadd.xlane.f32.xlu0 %v2968
    %v2970 = vpop.xlane.xlu0 %2969
    %v2971 = vsel %vm625, %v2749, 0.0
    %2972 = vadd.xlane.f32.xlu0 %v2971
    %v2973 = vpop.xlane.xlu0 %2972
    %v2974 = vsel %vm625, %v2750, 0.0
    %2975 = vadd.xlane.f32.xlu0 %v2974
    %v2976 = vpop.xlane.xlu0 %2975
    %v2977 = vsel %vm625, %v2751, 0.0
    %2978 = vadd.xlane.f32.xlu0 %v2977
    %v2979 = vpop.xlane.xlu0 %2978
    %v2980 = vsel %vm625, %v2752, 0.0
    %2981 = vadd.xlane.f32.xlu0 %v2980
    %v2982 = vpop.xlane.xlu0 %2981
    %v2983 = vsel %vm625, %v2753, 0.0
    %2984 = vadd.xlane.f32.xlu0 %v2983
    %v2985 = vpop.xlane.xlu0 %2984
    %v2986 = vsel %vm625, %v2754, 0.0
    %2987 = vadd.xlane.f32.xlu0 %v2986
    %v2988 = vpop.xlane.xlu0 %2987
    %v2989 = vsel %vm625, %v2755, 0.0
    %2990 = vadd.xlane.f32.xlu0 %v2989
    %v2991 = vpop.xlane.xlu0 %2990
    %v2992 = vsel %vm625, %v2756, 0.0
    %2993 = vadd.xlane.f32.xlu0 %v2992
    %v2994 = vpop.xlane.xlu0 %2993
    %v2995 = vsel %vm625, %v2757, 0.0
    %2996 = vadd.xlane.f32.xlu0 %v2995
    %v2997 = vpop.xlane.xlu0 %2996
    %v2998 = vsel %vm625, %v2758, 0.0
    %2999 = vadd.xlane.f32.xlu0 %v2998
    %v3000 = vpop.xlane.xlu0 %2999
    %v3001 = vsel %vm625, %v2759, 0.0
    %3002 = vadd.xlane.f32.xlu0 %v3001
    %v3003 = vpop.xlane.xlu0 %3002
    %v3004 = vsel %vm625, %v2760, 0.0
    %3005 = vadd.xlane.f32.xlu0 %v3004
    %v3006 = vpop.xlane.xlu0 %3005
    %v3007 = vsel %vm625, %v2761, 0.0
    %3008 = vadd.xlane.f32.xlu0 %v3007
    %v3009 = vpop.xlane.xlu0 %3008
    %v3010 = vsel %vm625, %v2762, 0.0
    %3011 = vadd.xlane.f32.xlu0 %v3010
    %v3012 = vpop.xlane.xlu0 %3011
    %v3013 = vsel %vm625, %v2763, 0.0
    %3014 = vadd.xlane.f32.xlu0 %v3013
    %v3015 = vpop.xlane.xlu0 %3014
    %v3016 = vsel %vm625, %v2764, 0.0
    %3017 = vadd.xlane.f32.xlu0 %v3016
    %v3018 = vpop.xlane.xlu0 %3017
    %v3019 = vsel %vm625, %v2765, 0.0
    %3020 = vadd.xlane.f32.xlu0 %v3019
    %v3021 = vpop.xlane.xlu0 %3020
    %v3022 = vsel %vm625, %v2766, 0.0
    %3023 = vadd.xlane.f32.xlu0 %v3022
    %v3024 = vpop.xlane.xlu0 %3023
    %v3025 = vsel %vm625, %v2767, 0.0
    %3026 = vadd.xlane.f32.xlu0 %v3025
    %v3027 = vpop.xlane.xlu0 %3026
    %v3028 = vsel %vm625, %v2768, 0.0
    %3029 = vadd.xlane.f32.xlu0 %v3028
    %v3030 = vpop.xlane.xlu0 %3029
    %v3031 = vsel %vm625, %v2769, 0.0
    %3032 = vadd.xlane.f32.xlu0 %v3031
    %v3033 = vpop.xlane.xlu0 %3032
    %v3034 = vsel %vm625, %v2770, 0.0
    %3035 = vadd.xlane.f32.xlu0 %v3034
    %v3036 = vpop.xlane.xlu0 %3035
    %v3037 = vsel %vm625, %v2771, 0.0
    %3038 = vadd.xlane.f32.xlu0 %v3037
    %v3039 = vpop.xlane.xlu0 %3038
    %v3040 = vsel %vm625, %v2772, 0.0
    %3041 = vadd.xlane.f32.xlu0 %v3040
    %v3042 = vpop.xlane.xlu0 %3041
    %v3043 = vsel %vm625, %v2773, 0.0
    %3044 = vadd.xlane.f32.xlu0 %v3043
    %v3045 = vpop.xlane.xlu0 %3044
    %v3046 = vsel %vm625, %v2774, 0.0
    %3047 = vadd.xlane.f32.xlu0 %v3046
    %v3048 = vpop.xlane.xlu0 %3047
    %v3049 = vsel %vm625, %v2775, 0.0
    %3050 = vadd.xlane.f32.xlu0 %v3049
    %v3051 = vpop.xlane.xlu0 %3050
    %v3052 = vsel %vm625, %v2776, 0.0
    %3053 = vadd.xlane.f32.xlu0 %v3052
    %v3054 = vpop.xlane.xlu0 %3053
    %v3055 = vsel %vm625, %v2777, 0.0
    %3056 = vadd.xlane.f32.xlu0 %v3055
    %v3057 = vpop.xlane.xlu0 %3056
    %v3058 = vsel %vm625, %v2778, 0.0
    %3059 = vadd.xlane.f32.xlu0 %v3058
    %v3060 = vpop.xlane.xlu0 %3059
    %v3061 = vsel %vm625, %v2779, 0.0
    %3062 = vadd.xlane.f32.xlu0 %v3061
    %v3063 = vpop.xlane.xlu0 %3062
    %v3064 = vsel %vm625, %v2780, 0.0
    %3065 = vadd.xlane.f32.xlu0 %v3064
    %v3066 = vpop.xlane.xlu0 %3065
    %v3067 = vsel %vm625, %v2781, 0.0
    %3068 = vadd.xlane.f32.xlu0 %v3067
    %v3069 = vpop.xlane.xlu0 %3068
    %v3070 = vsel %vm625, %v2782, 0.0
    %3071 = vadd.xlane.f32.xlu0 %v3070
    %v3072 = vpop.xlane.xlu0 %3071
    %v3073 = vsel %vm625, %v2783, 0.0
    %3074 = vadd.xlane.f32.xlu0 %v3073
    %v3075 = vpop.xlane.xlu0 %3074
    %v3076 = vsel %vm625, %v2784, 0.0
    %3077 = vadd.xlane.f32.xlu0 %v3076
    %v3078 = vpop.xlane.xlu0 %3077
    %v3079 = vsel %vm625, %v2785, 0.0
    %3080 = vadd.xlane.f32.xlu0 %v3079
    %v3081 = vpop.xlane.xlu0 %3080
    %v3082 = vsel %vm625, %v2786, 0.0
    %3083 = vadd.xlane.f32.xlu0 %v3082
    %v3084 = vpop.xlane.xlu0 %3083
    %v3085 = vsel %vm625, %v2787, 0.0
    %3086 = vadd.xlane.f32.xlu0 %v3085
    %v3087 = vpop.xlane.xlu0 %3086
    %v3088 = vsel %vm625, %v2788, 0.0
    %3089 = vadd.xlane.f32.xlu0 %v3088
    %v3090 = vpop.xlane.xlu0 %3089
    %v3091 = vsel %vm625, %v2789, 0.0
    %3092 = vadd.xlane.f32.xlu0 %v3091
    %v3093 = vpop.xlane.xlu0 %3092
    %v3094 = vsel %vm625, %v2790, 0.0
    %3095 = vadd.xlane.f32.xlu0 %v3094
    %v3096 = vpop.xlane.xlu0 %3095
    %v3097 = vsel %vm625, %v2791, 0.0
    %3098 = vadd.xlane.f32.xlu0 %v3097
    %v3099 = vpop.xlane.xlu0 %3098
    %v3100 = vsel %vm625, %v2792, 0.0
    %3101 = vadd.xlane.f32.xlu0 %v3100
    %v3102 = vpop.xlane.xlu0 %3101
    %v3103 = vsel %vm625, %v2793, 0.0
    %3104 = vadd.xlane.f32.xlu0 %v3103
    %v3105 = vpop.xlane.xlu0 %3104
    %v3106 = vsel %vm625, %v2794, 0.0
    %3107 = vadd.xlane.f32.xlu0 %v3106
    %v3108 = vpop.xlane.xlu0 %3107
    %v3109 = vsel %vm625, %v2795, 0.0
    %3110 = vadd.xlane.f32.xlu0 %v3109
    %v3111 = vpop.xlane.xlu0 %3110
    %v3112 = vsel %vm625, %v2796, 0.0
    %3113 = vadd.xlane.f32.xlu0 %v3112
    %v3114 = vpop.xlane.xlu0 %3113
    %v3115 = vsel %vm625, %v2797, 0.0
    %3116 = vadd.xlane.f32.xlu0 %v3115
    %v3117 = vpop.xlane.xlu0 %3116
    %v3118 = vsel %vm625, %v2798, 0.0
    %3119 = vadd.xlane.f32.xlu0 %v3118
    %v3120 = vpop.xlane.xlu0 %3119
    %v3121 = vsel %vm625, %v2799, 0.0
    %3122 = vadd.xlane.f32.xlu0 %v3121
    %v3123 = vpop.xlane.xlu0 %3122
    %v3124 = vsel %vm625, %v2800, 0.0
    %3125 = vadd.xlane.f32.xlu0 %v3124
    %v3126 = vpop.xlane.xlu0 %3125
    %v3127 = vsel %vm625, %v2801, 0.0
    %3128 = vadd.xlane.f32.xlu0 %v3127
    %v3129 = vpop.xlane.xlu0 %3128
    %v3130 = vsel %vm625, %v2802, 0.0
    %3131 = vadd.xlane.f32.xlu0 %v3130
    %v3132 = vpop.xlane.xlu0 %3131
    %v3133 = vsel %vm625, %v2803, 0.0
    %3134 = vadd.xlane.f32.xlu0 %v3133
    %v3135 = vpop.xlane.xlu0 %3134
    %v3136 = vsel %vm625, %v2804, 0.0
    %3137 = vadd.xlane.f32.xlu0 %v3136
    %v3138 = vpop.xlane.xlu0 %3137
    %v3139 = vsel %vm625, %v2805, 0.0
    %3140 = vadd.xlane.f32.xlu0 %v3139
    %v3141 = vpop.xlane.xlu0 %3140
    %v3142 = vsel %vm625, %v2806, 0.0
    %3143 = vadd.xlane.f32.xlu0 %v3142
    %v3144 = vpop.xlane.xlu0 %3143
    %v3145 = vsel %vm625, %v2807, 0.0
    %3146 = vadd.xlane.f32.xlu0 %v3145
    %v3147 = vpop.xlane.xlu0 %3146
    %v3148 = vsel %vm625, %v2808, 0.0
    %3149 = vadd.xlane.f32.xlu0 %v3148
    %v3150 = vpop.xlane.xlu0 %3149
    %v3151 = vsel %vm625, %v2809, 0.0
    %3152 = vadd.xlane.f32.xlu0 %v3151
    %v3153 = vpop.xlane.xlu0 %3152
    %v3154 = vsel %vm625, %v2810, 0.0
    %3155 = vadd.xlane.f32.xlu0 %v3154
    %v3156 = vpop.xlane.xlu0 %3155
    %v3157 = vsel %vm625, %v2811, 0.0
    %3158 = vadd.xlane.f32.xlu0 %v3157
    %v3159 = vpop.xlane.xlu0 %3158
    %v3160 = vsel %vm625, %v2812, 0.0
    %3161 = vadd.xlane.f32.xlu0 %v3160
    %v3162 = vpop.xlane.xlu0 %3161
    %v3163 = vsel %vm625, %v2813, 0.0
    %3164 = vadd.xlane.f32.xlu0 %v3163
    %v3165 = vpop.xlane.xlu0 %3164
    %v3166 = vsel %vm625, %v2814, 0.0
    %3167 = vadd.xlane.f32.xlu0 %v3166
    %v3168 = vpop.xlane.xlu0 %3167
    %v3169 = vsel %vm625, %v2815, 0.0
    %3170 = vadd.xlane.f32.xlu0 %v3169
    %v3171 = vpop.xlane.xlu0 %3170
    %v3172 = vsel %vm625, %v2816, 0.0
    %3173 = vadd.xlane.f32.xlu0 %v3172
    %v3174 = vpop.xlane.xlu0 %3173
    %v3175 = vsel %vm625, %v2817, 0.0
    %3176 = vadd.xlane.f32.xlu0 %v3175
    %v3177 = vpop.xlane.xlu0 %3176
    %v3178 = vsel %vm625, %v2818, 0.0
    %3179 = vadd.xlane.f32.xlu0 %v3178
    %v3180 = vpop.xlane.xlu0 %3179
    %v3181 = vsel %vm625, %v2819, 0.0
    %3182 = vadd.xlane.f32.xlu0 %v3181
    %v3183 = vpop.xlane.xlu0 %3182
    %v3184 = vsel %vm625, %v2820, 0.0
    %3185 = vadd.xlane.f32.xlu0 %v3184
    %v3186 = vpop.xlane.xlu0 %3185
    %v3187 = vsel %vm625, %v2821, 0.0
    %3188 = vadd.xlane.f32.xlu0 %v3187
    %v3189 = vpop.xlane.xlu0 %3188
    %v3190 = vsel %vm625, %v2822, 0.0
    %3191 = vadd.xlane.f32.xlu0 %v3190
    %v3192 = vpop.xlane.xlu0 %3191
    %v3193 = vsel %vm625, %v2823, 0.0
    %3194 = vadd.xlane.f32.xlu0 %v3193
    %v3195 = vpop.xlane.xlu0 %3194
    %v3196 = vsel %vm625, %v2824, 0.0
    %3197 = vadd.xlane.f32.xlu0 %v3196
    %v3198 = vpop.xlane.xlu0 %3197
    %v3199 = vsel %vm625, %v2825, 0.0
    %3200 = vadd.xlane.f32.xlu0 %v3199
    %v3201 = vpop.xlane.xlu0 %3200
    %v3202 = vsel %vm625, %v2826, 0.0
    %3203 = vadd.xlane.f32.xlu0 %v3202
    %v3204 = vpop.xlane.xlu0 %3203
    %v3205 = vsel %vm625, %v2827, 0.0
    %3206 = vadd.xlane.f32.xlu0 %v3205
    %v3207 = vpop.xlane.xlu0 %3206
    %v3208 = vsel %vm625, %v2828, 0.0
    %3209 = vadd.xlane.f32.xlu0 %v3208
    %v3210 = vpop.xlane.xlu0 %3209
    %v3211 = vsel %vm625, %v2829, 0.0
    %3212 = vadd.xlane.f32.xlu0 %v3211
    %v3213 = vpop.xlane.xlu0 %3212
    %s3214 = sld [smem:[#allocation2]]
    %v3215 = vstv %s3214
    %v3216 = vadd.f32 %v2832, %v3215
    %v3217 = vadd.f32 %v2835, %v3215
    %v3218 = vadd.f32 %v2838, %v3215
    %v3219 = vadd.f32 %v2841, %v3215
    %v3220 = vadd.f32 %v2844, %v3215
    %v3221 = vadd.f32 %v2847, %v3215
    %v3222 = vadd.f32 %v2850, %v3215
    %v3223 = vadd.f32 %v2853, %v3215
    %v3224 = vadd.f32 %v2856, %v3215
    %v3225 = vadd.f32 %v2859, %v3215
    %v3226 = vadd.f32 %v2862, %v3215
    %v3227 = vadd.f32 %v2865, %v3215
    %v3228 = vadd.f32 %v2868, %v3215
    %v3229 = vadd.f32 %v2871, %v3215
    %v3230 = vadd.f32 %v2874, %v3215
    %v3231 = vadd.f32 %v2877, %v3215
    %v3232 = vadd.f32 %v2880, %v3215
    %v3233 = vadd.f32 %v2883, %v3215
    %v3234 = vadd.f32 %v2886, %v3215
    %v3235 = vadd.f32 %v2889, %v3215
    %v3236 = vadd.f32 %v2892, %v3215
    %v3237 = vadd.f32 %v2895, %v3215
    %v3238 = vadd.f32 %v2898, %v3215
    %v3239 = vadd.f32 %v2901, %v3215
    %v3240 = vadd.f32 %v2904, %v3215
    %v3241 = vadd.f32 %v2907, %v3215
    %v3242 = vadd.f32 %v2910, %v3215
    %v3243 = vadd.f32 %v2913, %v3215
    %v3244 = vadd.f32 %v2916, %v3215
    %v3245 = vadd.f32 %v2919, %v3215
    %v3246 = vadd.f32 %v2922, %v3215
    %v3247 = vadd.f32 %v2925, %v3215
    %v3248 = vadd.f32 %v2928, %v3215
    %v3249 = vadd.f32 %v2931, %v3215
    %v3250 = vadd.f32 %v2934, %v3215
    %v3251 = vadd.f32 %v2937, %v3215
    %v3252 = vadd.f32 %v2940, %v3215
    %v3253 = vadd.f32 %v2943, %v3215
    %v3254 = vadd.f32 %v2946, %v3215
    %v3255 = vadd.f32 %v2949, %v3215
    %v3256 = vadd.f32 %v2952, %v3215
    %v3257 = vadd.f32 %v2955, %v3215
    %v3258 = vadd.f32 %v2958, %v3215
    %v3259 = vadd.f32 %v2961, %v3215
    %v3260 = vadd.f32 %v2964, %v3215
    %v3261 = vadd.f32 %v2967, %v3215
    %v3262 = vadd.f32 %v2970, %v3215
    %v3263 = vadd.f32 %v2973, %v3215
    %v3264 = vadd.f32 %v2976, %v3215
    %v3265 = vadd.f32 %v2979, %v3215
    %v3266 = vadd.f32 %v2982, %v3215
    %v3267 = vadd.f32 %v2985, %v3215
    %v3268 = vadd.f32 %v2988, %v3215
    %v3269 = vadd.f32 %v2991, %v3215
    %v3270 = vadd.f32 %v2994, %v3215
    %v3271 = vadd.f32 %v2997, %v3215
    %v3272 = vadd.f32 %v3000, %v3215
    %v3273 = vadd.f32 %v3003, %v3215
    %v3274 = vadd.f32 %v3006, %v3215
    %v3275 = vadd.f32 %v3009, %v3215
    %v3276 = vadd.f32 %v3012, %v3215
    %v3277 = vadd.f32 %v3015, %v3215
    %v3278 = vadd.f32 %v3018, %v3215
    %v3279 = vadd.f32 %v3021, %v3215
    %v3280 = vadd.f32 %v3024, %v3215
    %v3281 = vadd.f32 %v3027, %v3215
    %v3282 = vadd.f32 %v3030, %v3215
    %v3283 = vadd.f32 %v3033, %v3215
    %v3284 = vadd.f32 %v3036, %v3215
    %v3285 = vadd.f32 %v3039, %v3215
    %v3286 = vadd.f32 %v3042, %v3215
    %v3287 = vadd.f32 %v3045, %v3215
    %v3288 = vadd.f32 %v3048, %v3215
    %v3289 = vadd.f32 %v3051, %v3215
    %v3290 = vadd.f32 %v3054, %v3215
    %v3291 = vadd.f32 %v3057, %v3215
    %v3292 = vadd.f32 %v3060, %v3215
    %v3293 = vadd.f32 %v3063, %v3215
    %v3294 = vadd.f32 %v3066, %v3215
    %v3295 = vadd.f32 %v3069, %v3215
    %v3296 = vadd.f32 %v3072, %v3215
    %v3297 = vadd.f32 %v3075, %v3215
    %v3298 = vadd.f32 %v3078, %v3215
    %v3299 = vadd.f32 %v3081, %v3215
    %v3300 = vadd.f32 %v3084, %v3215
    %v3301 = vadd.f32 %v3087, %v3215
    %v3302 = vadd.f32 %v3090, %v3215
    %v3303 = vadd.f32 %v3093, %v3215
    %v3304 = vadd.f32 %v3096, %v3215
    %v3305 = vadd.f32 %v3099, %v3215
    %v3306 = vadd.f32 %v3102, %v3215
    %v3307 = vadd.f32 %v3105, %v3215
    %v3308 = vadd.f32 %v3108, %v3215
    %v3309 = vadd.f32 %v3111, %v3215
    %v3310 = vadd.f32 %v3114, %v3215
    %v3311 = vadd.f32 %v3117, %v3215
    %v3312 = vadd.f32 %v3120, %v3215
    %v3313 = vadd.f32 %v3123, %v3215
    %v3314 = vadd.f32 %v3126, %v3215
    %v3315 = vadd.f32 %v3129, %v3215
    %v3316 = vadd.f32 %v3132, %v3215
    %v3317 = vadd.f32 %v3135, %v3215
    %v3318 = vadd.f32 %v3138, %v3215
    %v3319 = vadd.f32 %v3141, %v3215
    %v3320 = vadd.f32 %v3144, %v3215
    %v3321 = vadd.f32 %v3147, %v3215
    %v3322 = vadd.f32 %v3150, %v3215
    %v3323 = vadd.f32 %v3153, %v3215
    %v3324 = vadd.f32 %v3156, %v3215
    %v3325 = vadd.f32 %v3159, %v3215
    %v3326 = vadd.f32 %v3162, %v3215
    %v3327 = vadd.f32 %v3165, %v3215
    %v3328 = vadd.f32 %v3168, %v3215
    %v3329 = vadd.f32 %v3171, %v3215
    %v3330 = vadd.f32 %v3174, %v3215
    %v3331 = vadd.f32 %v3177, %v3215
    %v3332 = vadd.f32 %v3180, %v3215
    %v3333 = vadd.f32 %v3183, %v3215
    %v3334 = vadd.f32 %v3186, %v3215
    %v3335 = vadd.f32 %v3189, %v3215
    %v3336 = vadd.f32 %v3192, %v3215
    %v3337 = vadd.f32 %v3195, %v3215
    %v3338 = vadd.f32 %v3198, %v3215
    %v3339 = vadd.f32 %v3201, %v3215
    %v3340 = vadd.f32 %v3204, %v3215
    %v3341 = vadd.f32 %v3207, %v3215
    %v3342 = vadd.f32 %v3210, %v3215
    %v3343 = vadd.f32 %v3213, %v3215
    %v3344 = vxor.u32 %v3216, 2147483648
    %v3345 = vxor.u32 %v3217, 2147483648
    %v3346 = vxor.u32 %v3218, 2147483648
    %v3347 = vxor.u32 %v3219, 2147483648
    %v3348 = vxor.u32 %v3220, 2147483648
    %v3349 = vxor.u32 %v3221, 2147483648
    %v3350 = vxor.u32 %v3222, 2147483648
    %v3351 = vxor.u32 %v3223, 2147483648
    %v3352 = vxor.u32 %v3224, 2147483648
    %v3353 = vxor.u32 %v3225, 2147483648
    %v3354 = vxor.u32 %v3226, 2147483648
    %v3355 = vxor.u32 %v3227, 2147483648
    %v3356 = vxor.u32 %v3228, 2147483648
    %v3357 = vxor.u32 %v3229, 2147483648
    %v3358 = vxor.u32 %v3230, 2147483648
    %v3359 = vxor.u32 %v3231, 2147483648
    %v3360 = vxor.u32 %v3232, 2147483648
    %v3361 = vxor.u32 %v3233, 2147483648
    %v3362 = vxor.u32 %v3234, 2147483648
    %v3363 = vxor.u32 %v3235, 2147483648
    %v3364 = vxor.u32 %v3236, 2147483648
    %v3365 = vxor.u32 %v3237, 2147483648
    %v3366 = vxor.u32 %v3238, 2147483648
    %v3367 = vxor.u32 %v3239, 2147483648
    %v3368 = vxor.u32 %v3240, 2147483648
    %v3369 = vxor.u32 %v3241, 2147483648
    %v3370 = vxor.u32 %v3242, 2147483648
    %v3371 = vxor.u32 %v3243, 2147483648
    %v3372 = vxor.u32 %v3244, 2147483648
    %v3373 = vxor.u32 %v3245, 2147483648
    %v3374 = vxor.u32 %v3246, 2147483648
    %v3375 = vxor.u32 %v3247, 2147483648
    %v3376 = vxor.u32 %v3248, 2147483648
    %v3377 = vxor.u32 %v3249, 2147483648
    %v3378 = vxor.u32 %v3250, 2147483648
    %v3379 = vxor.u32 %v3251, 2147483648
    %v3380 = vxor.u32 %v3252, 2147483648
    %v3381 = vxor.u32 %v3253, 2147483648
    %v3382 = vxor.u32 %v3254, 2147483648
    %v3383 = vxor.u32 %v3255, 2147483648
    %v3384 = vxor.u32 %v3256, 2147483648
    %v3385 = vxor.u32 %v3257, 2147483648
    %v3386 = vxor.u32 %v3258, 2147483648
    %v3387 = vxor.u32 %v3259, 2147483648
    %v3388 = vxor.u32 %v3260, 2147483648
    %v3389 = vxor.u32 %v3261, 2147483648
    %v3390 = vxor.u32 %v3262, 2147483648
    %v3391 = vxor.u32 %v3263, 2147483648
    %v3392 = vxor.u32 %v3264, 2147483648
    %v3393 = vxor.u32 %v3265, 2147483648
    %v3394 = vxor.u32 %v3266, 2147483648
    %v3395 = vxor.u32 %v3267, 2147483648
    %v3396 = vxor.u32 %v3268, 2147483648
    %v3397 = vxor.u32 %v3269, 2147483648
    %v3398 = vxor.u32 %v3270, 2147483648
    %v3399 = vxor.u32 %v3271, 2147483648
    %v3400 = vxor.u32 %v3272, 2147483648
    %v3401 = vxor.u32 %v3273, 2147483648
    %v3402 = vxor.u32 %v3274, 2147483648
    %v3403 = vxor.u32 %v3275, 2147483648
    %v3404 = vxor.u32 %v3276, 2147483648
    %v3405 = vxor.u32 %v3277, 2147483648
    %v3406 = vxor.u32 %v3278, 2147483648
    %v3407 = vxor.u32 %v3279, 2147483648
    %v3408 = vxor.u32 %v3280, 2147483648
    %v3409 = vxor.u32 %v3281, 2147483648
    %v3410 = vxor.u32 %v3282, 2147483648
    %v3411 = vxor.u32 %v3283, 2147483648
    %v3412 = vxor.u32 %v3284, 2147483648
    %v3413 = vxor.u32 %v3285, 2147483648
    %v3414 = vxor.u32 %v3286, 2147483648
    %v3415 = vxor.u32 %v3287, 2147483648
    %v3416 = vxor.u32 %v3288, 2147483648
    %v3417 = vxor.u32 %v3289, 2147483648
    %v3418 = vxor.u32 %v3290, 2147483648
    %v3419 = vxor.u32 %v3291, 2147483648
    %v3420 = vxor.u32 %v3292, 2147483648
    %v3421 = vxor.u32 %v3293, 2147483648
    %v3422 = vxor.u32 %v3294, 2147483648
    %v3423 = vxor.u32 %v3295, 2147483648
    %v3424 = vxor.u32 %v3296, 2147483648
    %v3425 = vxor.u32 %v3297, 2147483648
    %v3426 = vxor.u32 %v3298, 2147483648
    %v3427 = vxor.u32 %v3299, 2147483648
    %v3428 = vxor.u32 %v3300, 2147483648
    %v3429 = vxor.u32 %v3301, 2147483648
    %v3430 = vxor.u32 %v3302, 2147483648
    %v3431 = vxor.u32 %v3303, 2147483648
    %v3432 = vxor.u32 %v3304, 2147483648
    %v3433 = vxor.u32 %v3305, 2147483648
    %v3434 = vxor.u32 %v3306, 2147483648
    %v3435 = vxor.u32 %v3307, 2147483648
    %v3436 = vxor.u32 %v3308, 2147483648
    %v3437 = vxor.u32 %v3309, 2147483648
    %v3438 = vxor.u32 %v3310, 2147483648
    %v3439 = vxor.u32 %v3311, 2147483648
    %v3440 = vxor.u32 %v3312, 2147483648
    %v3441 = vxor.u32 %v3313, 2147483648
    %v3442 = vxor.u32 %v3314, 2147483648
    %v3443 = vxor.u32 %v3315, 2147483648
    %v3444 = vxor.u32 %v3316, 2147483648
    %v3445 = vxor.u32 %v3317, 2147483648
    %v3446 = vxor.u32 %v3318, 2147483648
    %v3447 = vxor.u32 %v3319, 2147483648
    %v3448 = vxor.u32 %v3320, 2147483648
    %v3449 = vxor.u32 %v3321, 2147483648
    %v3450 = vxor.u32 %v3322, 2147483648
    %v3451 = vxor.u32 %v3323, 2147483648
    %v3452 = vxor.u32 %v3324, 2147483648
    %v3453 = vxor.u32 %v3325, 2147483648
    %v3454 = vxor.u32 %v3326, 2147483648
    %v3455 = vxor.u32 %v3327, 2147483648
    %v3456 = vxor.u32 %v3328, 2147483648
    %v3457 = vxor.u32 %v3329, 2147483648
    %v3458 = vxor.u32 %v3330, 2147483648
    %v3459 = vxor.u32 %v3331, 2147483648
    %v3460 = vxor.u32 %v3332, 2147483648
    %v3461 = vxor.u32 %v3333, 2147483648
    %v3462 = vxor.u32 %v3334, 2147483648
    %v3463 = vxor.u32 %v3335, 2147483648
    %v3464 = vxor.u32 %v3336, 2147483648
    %v3465 = vxor.u32 %v3337, 2147483648
    %v3466 = vxor.u32 %v3338, 2147483648
    %v3467 = vxor.u32 %v3339, 2147483648
    %v3468 = vxor.u32 %v3340, 2147483648
    %v3469 = vxor.u32 %v3341, 2147483648
    %v3470 = vxor.u32 %v3342, 2147483648
    %v3471 = vxor.u32 %v3343, 2147483648
    %v3472 = vmul.f32 %v3344, 1.442695
    %v3473 = vpow.pop %v3472
    %v3474 = vmul.f32 %v3345, 1.442695
    %v3475 = vpow.pop %v3474
    %v3476 = vmul.f32 %v3346, 1.442695
    %v3477 = vpow.pop %v3476
    %v3478 = vmul.f32 %v3347, 1.442695
    %v3479 = vpow.pop %v3478
    %v3480 = vmul.f32 %v3348, 1.442695
    %v3481 = vpow.pop %v3480
    %v3482 = vmul.f32 %v3349, 1.442695
    %v3483 = vpow.pop %v3482
    %v3484 = vmul.f32 %v3350, 1.442695
    %v3485 = vpow.pop %v3484
    %v3486 = vmul.f32 %v3351, 1.442695
    %v3487 = vpow.pop %v3486
    %v3488 = vmul.f32 %v3352, 1.442695
    %v3489 = vpow.pop %v3488
    %v3490 = vmul.f32 %v3353, 1.442695
    %v3491 = vpow.pop %v3490
    %v3492 = vmul.f32 %v3354, 1.442695
    %v3493 = vpow.pop %v3492
    %v3494 = vmul.f32 %v3355, 1.442695
    %v3495 = vpow.pop %v3494
    %v3496 = vmul.f32 %v3356, 1.442695
    %v3497 = vpow.pop %v3496
    %v3498 = vmul.f32 %v3357, 1.442695
    %v3499 = vpow.pop %v3498
    %v3500 = vmul.f32 %v3358, 1.442695
    %v3501 = vpow.pop %v3500
    %v3502 = vmul.f32 %v3359, 1.442695
    %v3503 = vpow.pop %v3502
    %v3504 = vmul.f32 %v3360, 1.442695
    %v3505 = vpow.pop %v3504
    %v3506 = vmul.f32 %v3361, 1.442695
    %v3507 = vpow.pop %v3506
    %v3508 = vmul.f32 %v3362, 1.442695
    %v3509 = vpow.pop %v3508
    %v3510 = vmul.f32 %v3363, 1.442695
    %v3511 = vpow.pop %v3510
    %v3512 = vmul.f32 %v3364, 1.442695
    %v3513 = vpow.pop %v3512
    %v3514 = vmul.f32 %v3365, 1.442695
    %v3515 = vpow.pop %v3514
    %v3516 = vmul.f32 %v3366, 1.442695
    %v3517 = vpow.pop %v3516
    %v3518 = vmul.f32 %v3367, 1.442695
    %v3519 = vpow.pop %v3518
    %v3520 = vmul.f32 %v3368, 1.442695
    %v3521 = vpow.pop %v3520
    %v3522 = vmul.f32 %v3369, 1.442695
    %v3523 = vpow.pop %v3522
    %v3524 = vmul.f32 %v3370, 1.442695
    %v3525 = vpow.pop %v3524
    %v3526 = vmul.f32 %v3371, 1.442695
    %v3527 = vpow.pop %v3526
    %v3528 = vmul.f32 %v3372, 1.442695
    %v3529 = vpow.pop %v3528
    %v3530 = vmul.f32 %v3373, 1.442695
    %v3531 = vpow.pop %v3530
    %v3532 = vmul.f32 %v3374, 1.442695
    %v3533 = vpow.pop %v3532
    %v3534 = vmul.f32 %v3375, 1.442695
    %v3535 = vpow.pop %v3534
    %v3536 = vmul.f32 %v3376, 1.442695
    %v3537 = vpow.pop %v3536
    %v3538 = vmul.f32 %v3377, 1.442695
    %v3539 = vpow.pop %v3538
    %v3540 = vmul.f32 %v3378, 1.442695
    %v3541 = vpow.pop %v3540
    %v3542 = vmul.f32 %v3379, 1.442695
    %v3543 = vpow.pop %v3542
    %v3544 = vmul.f32 %v3380, 1.442695
    %v3545 = vpow.pop %v3544
    %v3546 = vmul.f32 %v3381, 1.442695
    %v3547 = vpow.pop %v3546
    %v3548 = vmul.f32 %v3382, 1.442695
    %v3549 = vpow.pop %v3548
    %v3550 = vmul.f32 %v3383, 1.442695
    %v3551 = vpow.pop %v3550
    %v3552 = vmul.f32 %v3384, 1.442695
    %v3553 = vpow.pop %v3552
    %v3554 = vmul.f32 %v3385, 1.442695
    %v3555 = vpow.pop %v3554
    %v3556 = vmul.f32 %v3386, 1.442695
    %v3557 = vpow.pop %v3556
    %v3558 = vmul.f32 %v3387, 1.442695
    %v3559 = vpow.pop %v3558
    %v3560 = vmul.f32 %v3388, 1.442695
    %v3561 = vpow.pop %v3560
    %v3562 = vmul.f32 %v3389, 1.442695
    %v3563 = vpow.pop %v3562
    %v3564 = vmul.f32 %v3390, 1.442695
    %v3565 = vpow.pop %v3564
    %v3566 = vmul.f32 %v3391, 1.442695
    %v3567 = vpow.pop %v3566
    %v3568 = vmul.f32 %v3392, 1.442695
    %v3569 = vpow.pop %v3568
    %v3570 = vmul.f32 %v3393, 1.442695
    %v3571 = vpow.pop %v3570
    %v3572 = vmul.f32 %v3394, 1.442695
    %v3573 = vpow.pop %v3572
    %v3574 = vmul.f32 %v3395, 1.442695
    %v3575 = vpow.pop %v3574
    %v3576 = vmul.f32 %v3396, 1.442695
    %v3577 = vpow.pop %v3576
    %v3578 = vmul.f32 %v3397, 1.442695
    %v3579 = vpow.pop %v3578
    %v3580 = vmul.f32 %v3398, 1.442695
    %v3581 = vpow.pop %v3580
    %v3582 = vmul.f32 %v3399, 1.442695
    %v3583 = vpow.pop %v3582
    %v3584 = vmul.f32 %v3400, 1.442695
    %v3585 = vpow.pop %v3584
    %v3586 = vmul.f32 %v3401, 1.442695
    %v3587 = vpow.pop %v3586
    %v3588 = vmul.f32 %v3402, 1.442695
    %v3589 = vpow.pop %v3588
    %v3590 = vmul.f32 %v3403, 1.442695
    %v3591 = vpow.pop %v3590
    %v3592 = vmul.f32 %v3404, 1.442695
    %v3593 = vpow.pop %v3592
    %v3594 = vmul.f32 %v3405, 1.442695
    %v3595 = vpow.pop %v3594
    %v3596 = vmul.f32 %v3406, 1.442695
    %v3597 = vpow.pop %v3596
    %v3598 = vmul.f32 %v3407, 1.442695
    %v3599 = vpow.pop %v3598
    %v3600 = vmul.f32 %v3408, 1.442695
    %v3601 = vpow.pop %v3600
    %v3602 = vmul.f32 %v3409, 1.442695
    %v3603 = vpow.pop %v3602
    %v3604 = vmul.f32 %v3410, 1.442695
    %v3605 = vpow.pop %v3604
    %v3606 = vmul.f32 %v3411, 1.442695
    %v3607 = vpow.pop %v3606
    %v3608 = vmul.f32 %v3412, 1.442695
    %v3609 = vpow.pop %v3608
    %v3610 = vmul.f32 %v3413, 1.442695
    %v3611 = vpow.pop %v3610
    %v3612 = vmul.f32 %v3414, 1.442695
    %v3613 = vpow.pop %v3612
    %v3614 = vmul.f32 %v3415, 1.442695
    %v3615 = vpow.pop %v3614
    %v3616 = vmul.f32 %v3416, 1.442695
    %v3617 = vpow.pop %v3616
    %v3618 = vmul.f32 %v3417, 1.442695
    %v3619 = vpow.pop %v3618
    %v3620 = vmul.f32 %v3418, 1.442695
    %v3621 = vpow.pop %v3620
    %v3622 = vmul.f32 %v3419, 1.442695
    %v3623 = vpow.pop %v3622
    %v3624 = vmul.f32 %v3420, 1.442695
    %v3625 = vpow.pop %v3624
    %v3626 = vmul.f32 %v3421, 1.442695
    %v3627 = vpow.pop %v3626
    %v3628 = vmul.f32 %v3422, 1.442695
    %v3629 = vpow.pop %v3628
    %v3630 = vmul.f32 %v3423, 1.442695
    %v3631 = vpow.pop %v3630
    %v3632 = vmul.f32 %v3424, 1.442695
    %v3633 = vpow.pop %v3632
    %v3634 = vmul.f32 %v3425, 1.442695
    %v3635 = vpow.pop %v3634
    %v3636 = vmul.f32 %v3426, 1.442695
    %v3637 = vpow.pop %v3636
    %v3638 = vmul.f32 %v3427, 1.442695
    %v3639 = vpow.pop %v3638
    %v3640 = vmul.f32 %v3428, 1.442695
    %v3641 = vpow.pop %v3640
    %v3642 = vmul.f32 %v3429, 1.442695
    %v3643 = vpow.pop %v3642
    %v3644 = vmul.f32 %v3430, 1.442695
    %v3645 = vpow.pop %v3644
    %v3646 = vmul.f32 %v3431, 1.442695
    %v3647 = vpow.pop %v3646
    %v3648 = vmul.f32 %v3432, 1.442695
    %v3649 = vpow.pop %v3648
    %v3650 = vmul.f32 %v3433, 1.442695
    %v3651 = vpow.pop %v3650
    %v3652 = vmul.f32 %v3434, 1.442695
    %v3653 = vpow.pop %v3652
    %v3654 = vmul.f32 %v3435, 1.442695
    %v3655 = vpow.pop %v3654
    %v3656 = vmul.f32 %v3436, 1.442695
    %v3657 = vpow.pop %v3656
    %v3658 = vmul.f32 %v3437, 1.442695
    %v3659 = vpow.pop %v3658
    %v3660 = vmul.f32 %v3438, 1.442695
    %v3661 = vpow.pop %v3660
    %v3662 = vmul.f32 %v3439, 1.442695
    %v3663 = vpow.pop %v3662
    %v3664 = vmul.f32 %v3440, 1.442695
    %v3665 = vpow.pop %v3664
    %v3666 = vmul.f32 %v3441, 1.442695
    %v3667 = vpow.pop %v3666
    %v3668 = vmul.f32 %v3442, 1.442695
    %v3669 = vpow.pop %v3668
    %v3670 = vmul.f32 %v3443, 1.442695
    %v3671 = vpow.pop %v3670
    %v3672 = vmul.f32 %v3444, 1.442695
    %v3673 = vpow.pop %v3672
    %v3674 = vmul.f32 %v3445, 1.442695
    %v3675 = vpow.pop %v3674
    %v3676 = vmul.f32 %v3446, 1.442695
    %v3677 = vpow.pop %v3676
    %v3678 = vmul.f32 %v3447, 1.442695
    %v3679 = vpow.pop %v3678
    %v3680 = vmul.f32 %v3448, 1.442695
    %v3681 = vpow.pop %v3680
    %v3682 = vmul.f32 %v3449, 1.442695
    %v3683 = vpow.pop %v3682
    %v3684 = vmul.f32 %v3450, 1.442695
    %v3685 = vpow.pop %v3684
    %v3686 = vmul.f32 %v3451, 1.442695
    %v3687 = vpow.pop %v3686
    %v3688 = vmul.f32 %v3452, 1.442695
    %v3689 = vpow.pop %v3688
    %v3690 = vmul.f32 %v3453, 1.442695
    %v3691 = vpow.pop %v3690
    %v3692 = vmul.f32 %v3454, 1.442695
    %v3693 = vpow.pop %v3692
    %v3694 = vmul.f32 %v3455, 1.442695
    %v3695 = vpow.pop %v3694
    %v3696 = vmul.f32 %v3456, 1.442695
    %v3697 = vpow.pop %v3696
    %v3698 = vmul.f32 %v3457, 1.442695
    %v3699 = vpow.pop %v3698
    %v3700 = vmul.f32 %v3458, 1.442695
    %v3701 = vpow.pop %v3700
    %v3702 = vmul.f32 %v3459, 1.442695
    %v3703 = vpow.pop %v3702
    %v3704 = vmul.f32 %v3460, 1.442695
    %v3705 = vpow.pop %v3704
    %v3706 = vmul.f32 %v3461, 1.442695
    %v3707 = vpow.pop %v3706
    %v3708 = vmul.f32 %v3462, 1.442695
    %v3709 = vpow.pop %v3708
    %v3710 = vmul.f32 %v3463, 1.442695
    %v3711 = vpow.pop %v3710
    %v3712 = vmul.f32 %v3464, 1.442695
    %v3713 = vpow.pop %v3712
    %v3714 = vmul.f32 %v3465, 1.442695
    %v3715 = vpow.pop %v3714
    %v3716 = vmul.f32 %v3466, 1.442695
    %v3717 = vpow.pop %v3716
    %v3718 = vmul.f32 %v3467, 1.442695
    %v3719 = vpow.pop %v3718
    %v3720 = vmul.f32 %v3468, 1.442695
    %v3721 = vpow.pop %v3720
    %v3722 = vmul.f32 %v3469, 1.442695
    %v3723 = vpow.pop %v3722
    %v3724 = vmul.f32 %v3470, 1.442695
    %v3725 = vpow.pop %v3724
    %v3726 = vmul.f32 %v3471, 1.442695
    %v3727 = vpow.pop %v3726
    %v3728 = vadd.f32 %v3473, 1.0
    %v3729 = vadd.f32 %v3475, 1.0
    %v3730 = vadd.f32 %v3477, 1.0
    %v3731 = vadd.f32 %v3479, 1.0
    %v3732 = vadd.f32 %v3481, 1.0
    %v3733 = vadd.f32 %v3483, 1.0
    %v3734 = vadd.f32 %v3485, 1.0
    %v3735 = vadd.f32 %v3487, 1.0
    %v3736 = vadd.f32 %v3489, 1.0
    %v3737 = vadd.f32 %v3491, 1.0
    %v3738 = vadd.f32 %v3493, 1.0
    %v3739 = vadd.f32 %v3495, 1.0
    %v3740 = vadd.f32 %v3497, 1.0
    %v3741 = vadd.f32 %v3499, 1.0
    %v3742 = vadd.f32 %v3501, 1.0
    %v3743 = vadd.f32 %v3503, 1.0
    %v3744 = vadd.f32 %v3505, 1.0
    %v3745 = vadd.f32 %v3507, 1.0
    %v3746 = vadd.f32 %v3509, 1.0
    %v3747 = vadd.f32 %v3511, 1.0
    %v3748 = vadd.f32 %v3513, 1.0
    %v3749 = vadd.f32 %v3515, 1.0
    %v3750 = vadd.f32 %v3517, 1.0
    %v3751 = vadd.f32 %v3519, 1.0
    %v3752 = vadd.f32 %v3521, 1.0
    %v3753 = vadd.f32 %v3523, 1.0
    %v3754 = vadd.f32 %v3525, 1.0
    %v3755 = vadd.f32 %v3527, 1.0
    %v3756 = vadd.f32 %v3529, 1.0
    %v3757 = vadd.f32 %v3531, 1.0
    %v3758 = vadd.f32 %v3533, 1.0
    %v3759 = vadd.f32 %v3535, 1.0
    %v3760 = vadd.f32 %v3537, 1.0
    %v3761 = vadd.f32 %v3539, 1.0
    %v3762 = vadd.f32 %v3541, 1.0
    %v3763 = vadd.f32 %v3543, 1.0
    %v3764 = vadd.f32 %v3545, 1.0
    %v3765 = vadd.f32 %v3547, 1.0
    %v3766 = vadd.f32 %v3549, 1.0
    %v3767 = vadd.f32 %v3551, 1.0
    %v3768 = vadd.f32 %v3553, 1.0
    %v3769 = vadd.f32 %v3555, 1.0
    %v3770 = vadd.f32 %v3557, 1.0
    %v3771 = vadd.f32 %v3559, 1.0
    %v3772 = vadd.f32 %v3561, 1.0
    %v3773 = vadd.f32 %v3563, 1.0
    %v3774 = vadd.f32 %v3565, 1.0
    %v3775 = vadd.f32 %v3567, 1.0
    %v3776 = vadd.f32 %v3569, 1.0
    %v3777 = vadd.f32 %v3571, 1.0
    %v3778 = vadd.f32 %v3573, 1.0
    %v3779 = vadd.f32 %v3575, 1.0
    %v3780 = vadd.f32 %v3577, 1.0
    %v3781 = vadd.f32 %v3579, 1.0
    %v3782 = vadd.f32 %v3581, 1.0
    %v3783 = vadd.f32 %v3583, 1.0
    %v3784 = vadd.f32 %v3585, 1.0
    %v3785 = vadd.f32 %v3587, 1.0
    %v3786 = vadd.f32 %v3589, 1.0
    %v3787 = vadd.f32 %v3591, 1.0
    %v3788 = vadd.f32 %v3593, 1.0
    %v3789 = vadd.f32 %v3595, 1.0
    %v3790 = vadd.f32 %v3597, 1.0
    %v3791 = vadd.f32 %v3599, 1.0
    %v3792 = vadd.f32 %v3601, 1.0
    %v3793 = vadd.f32 %v3603, 1.0
    %v3794 = vadd.f32 %v3605, 1.0
    %v3795 = vadd.f32 %v3607, 1.0
    %v3796 = vadd.f32 %v3609, 1.0
    %v3797 = vadd.f32 %v3611, 1.0
    %v3798 = vadd.f32 %v3613, 1.0
    %v3799 = vadd.f32 %v3615, 1.0
    %v3800 = vadd.f32 %v3617, 1.0
    %v3801 = vadd.f32 %v3619, 1.0
    %v3802 = vadd.f32 %v3621, 1.0
    %v3803 = vadd.f32 %v3623, 1.0
    %v3804 = vadd.f32 %v3625, 1.0
    %v3805 = vadd.f32 %v3627, 1.0
    %v3806 = vadd.f32 %v3629, 1.0
    %v3807 = vadd.f32 %v3631, 1.0
    %v3808 = vadd.f32 %v3633, 1.0
    %v3809 = vadd.f32 %v3635, 1.0
    %v3810 = vadd.f32 %v3637, 1.0
    %v3811 = vadd.f32 %v3639, 1.0
    %v3812 = vadd.f32 %v3641, 1.0
    %v3813 = vadd.f32 %v3643, 1.0
    %v3814 = vadd.f32 %v3645, 1.0
    %v3815 = vadd.f32 %v3647, 1.0
    %v3816 = vadd.f32 %v3649, 1.0
    %v3817 = vadd.f32 %v3651, 1.0
    %v3818 = vadd.f32 %v3653, 1.0
    %v3819 = vadd.f32 %v3655, 1.0
    %v3820 = vadd.f32 %v3657, 1.0
    %v3821 = vadd.f32 %v3659, 1.0
    %v3822 = vadd.f32 %v3661, 1.0
    %v3823 = vadd.f32 %v3663, 1.0
    %v3824 = vadd.f32 %v3665, 1.0
    %v3825 = vadd.f32 %v3667, 1.0
    %v3826 = vadd.f32 %v3669, 1.0
    %v3827 = vadd.f32 %v3671, 1.0
    %v3828 = vadd.f32 %v3673, 1.0
    %v3829 = vadd.f32 %v3675, 1.0
    %v3830 = vadd.f32 %v3677, 1.0
    %v3831 = vadd.f32 %v3679, 1.0
    %v3832 = vadd.f32 %v3681, 1.0
    %v3833 = vadd.f32 %v3683, 1.0
    %v3834 = vadd.f32 %v3685, 1.0
    %v3835 = vadd.f32 %v3687, 1.0
    %v3836 = vadd.f32 %v3689, 1.0
    %v3837 = vadd.f32 %v3691, 1.0
    %v3838 = vadd.f32 %v3693, 1.0
    %v3839 = vadd.f32 %v3695, 1.0
    %v3840 = vadd.f32 %v3697, 1.0
    %v3841 = vadd.f32 %v3699, 1.0
    %v3842 = vadd.f32 %v3701, 1.0
    %v3843 = vadd.f32 %v3703, 1.0
    %v3844 = vadd.f32 %v3705, 1.0
    %v3845 = vadd.f32 %v3707, 1.0
    %v3846 = vadd.f32 %v3709, 1.0
    %v3847 = vadd.f32 %v3711, 1.0
    %v3848 = vadd.f32 %v3713, 1.0
    %v3849 = vadd.f32 %v3715, 1.0
    %v3850 = vadd.f32 %v3717, 1.0
    %v3851 = vadd.f32 %v3719, 1.0
    %v3852 = vadd.f32 %v3721, 1.0
    %v3853 = vadd.f32 %v3723, 1.0
    %v3854 = vadd.f32 %v3725, 1.0
    %v3855 = vadd.f32 %v3727, 1.0
    %v3856 = vrcp.pop %v3728
    %v3857 = vmul.f32 1.0, %v3856
    %v3858 = vrcp.pop %v3729
    %v3859 = vmul.f32 1.0, %v3858
    %v3860 = vrcp.pop %v3730
    %v3861 = vmul.f32 1.0, %v3860
    %v3862 = vrcp.pop %v3731
    %v3863 = vmul.f32 1.0, %v3862
    %v3864 = vrcp.pop %v3732
    %v3865 = vmul.f32 1.0, %v3864
    %v3866 = vrcp.pop %v3733
    %v3867 = vmul.f32 1.0, %v3866
    %v3868 = vrcp.pop %v3734
    %v3869 = vmul.f32 1.0, %v3868
    %v3870 = vrcp.pop %v3735
    %v3871 = vmul.f32 1.0, %v3870
    %v3872 = vrcp.pop %v3736
    %v3873 = vmul.f32 1.0, %v3872
    %v3874 = vrcp.pop %v3737
    %v3875 = vmul.f32 1.0, %v3874
    %v3876 = vrcp.pop %v3738
    %v3877 = vmul.f32 1.0, %v3876
    %v3878 = vrcp.pop %v3739
    %v3879 = vmul.f32 1.0, %v3878
    %v3880 = vrcp.pop %v3740
    %v3881 = vmul.f32 1.0, %v3880
    %v3882 = vrcp.pop %v3741
    %v3883 = vmul.f32 1.0, %v3882
    %v3884 = vrcp.pop %v3742
    %v3885 = vmul.f32 1.0, %v3884
    %v3886 = vrcp.pop %v3743
    %v3887 = vmul.f32 1.0, %v3886
    %v3888 = vrcp.pop %v3744
    %v3889 = vmul.f32 1.0, %v3888
    %v3890 = vrcp.pop %v3745
    %v3891 = vmul.f32 1.0, %v3890
    %v3892 = vrcp.pop %v3746
    %v3893 = vmul.f32 1.0, %v3892
    %v3894 = vrcp.pop %v3747
    %v3895 = vmul.f32 1.0, %v3894
    %v3896 = vrcp.pop %v3748
    %v3897 = vmul.f32 1.0, %v3896
    %v3898 = vrcp.pop %v3749
    %v3899 = vmul.f32 1.0, %v3898
    %v3900 = vrcp.pop %v3750
    %v3901 = vmul.f32 1.0, %v3900
    %v3902 = vrcp.pop %v3751
    %v3903 = vmul.f32 1.0, %v3902
    %v3904 = vrcp.pop %v3752
    %v3905 = vmul.f32 1.0, %v3904
    %v3906 = vrcp.pop %v3753
    %v3907 = vmul.f32 1.0, %v3906
    %v3908 = vrcp.pop %v3754
    %v3909 = vmul.f32 1.0, %v3908
    %v3910 = vrcp.pop %v3755
    %v3911 = vmul.f32 1.0, %v3910
    %v3912 = vrcp.pop %v3756
    %v3913 = vmul.f32 1.0, %v3912
    %v3914 = vrcp.pop %v3757
    %v3915 = vmul.f32 1.0, %v3914
    %v3916 = vrcp.pop %v3758
    %v3917 = vmul.f32 1.0, %v3916
    %v3918 = vrcp.pop %v3759
    %v3919 = vmul.f32 1.0, %v3918
    %v3920 = vrcp.pop %v3760
    %v3921 = vmul.f32 1.0, %v3920
    %v3922 = vrcp.pop %v3761
    %v3923 = vmul.f32 1.0, %v3922
    %v3924 = vrcp.pop %v3762
    %v3925 = vmul.f32 1.0, %v3924
    %v3926 = vrcp.pop %v3763
    %v3927 = vmul.f32 1.0, %v3926
    %v3928 = vrcp.pop %v3764
    %v3929 = vmul.f32 1.0, %v3928
    %v3930 = vrcp.pop %v3765
    %v3931 = vmul.f32 1.0, %v3930
    %v3932 = vrcp.pop %v3766
    %v3933 = vmul.f32 1.0, %v3932
    %v3934 = vrcp.pop %v3767
    %v3935 = vmul.f32 1.0, %v3934
    %v3936 = vrcp.pop %v3768
    %v3937 = vmul.f32 1.0, %v3936
    %v3938 = vrcp.pop %v3769
    %v3939 = vmul.f32 1.0, %v3938
    %v3940 = vrcp.pop %v3770
    %v3941 = vmul.f32 1.0, %v3940
    %v3942 = vrcp.pop %v3771
    %v3943 = vmul.f32 1.0, %v3942
    %v3944 = vrcp.pop %v3772
    %v3945 = vmul.f32 1.0, %v3944
    %v3946 = vrcp.pop %v3773
    %v3947 = vmul.f32 1.0, %v3946
    %v3948 = vrcp.pop %v3774
    %v3949 = vmul.f32 1.0, %v3948
    %v3950 = vrcp.pop %v3775
    %v3951 = vmul.f32 1.0, %v3950
    %v3952 = vrcp.pop %v3776
    %v3953 = vmul.f32 1.0, %v3952
    %v3954 = vrcp.pop %v3777
    %v3955 = vmul.f32 1.0, %v3954
    %v3956 = vrcp.pop %v3778
    %v3957 = vmul.f32 1.0, %v3956
    %v3958 = vrcp.pop %v3779
    %v3959 = vmul.f32 1.0, %v3958
    %v3960 = vrcp.pop %v3780
    %v3961 = vmul.f32 1.0, %v3960
    %v3962 = vrcp.pop %v3781
    %v3963 = vmul.f32 1.0, %v3962
    %v3964 = vrcp.pop %v3782
    %v3965 = vmul.f32 1.0, %v3964
    %v3966 = vrcp.pop %v3783
    %v3967 = vmul.f32 1.0, %v3966
    %v3968 = vrcp.pop %v3784
    %v3969 = vmul.f32 1.0, %v3968
    %v3970 = vrcp.pop %v3785
    %v3971 = vmul.f32 1.0, %v3970
    %v3972 = vrcp.pop %v3786
    %v3973 = vmul.f32 1.0, %v3972
    %v3974 = vrcp.pop %v3787
    %v3975 = vmul.f32 1.0, %v3974
    %v3976 = vrcp.pop %v3788
    %v3977 = vmul.f32 1.0, %v3976
    %v3978 = vrcp.pop %v3789
    %v3979 = vmul.f32 1.0, %v3978
    %v3980 = vrcp.pop %v3790
    %v3981 = vmul.f32 1.0, %v3980
    %v3982 = vrcp.pop %v3791
    %v3983 = vmul.f32 1.0, %v3982
    %v3984 = vrcp.pop %v3792
    %v3985 = vmul.f32 1.0, %v3984
    %v3986 = vrcp.pop %v3793
    %v3987 = vmul.f32 1.0, %v3986
    %v3988 = vrcp.pop %v3794
    %v3989 = vmul.f32 1.0, %v3988
    %v3990 = vrcp.pop %v3795
    %v3991 = vmul.f32 1.0, %v3990
    %v3992 = vrcp.pop %v3796
    %v3993 = vmul.f32 1.0, %v3992
    %v3994 = vrcp.pop %v3797
    %v3995 = vmul.f32 1.0, %v3994
    %v3996 = vrcp.pop %v3798
    %v3997 = vmul.f32 1.0, %v3996
    %v3998 = vrcp.pop %v3799
    %v3999 = vmul.f32 1.0, %v3998
    %v4000 = vrcp.pop %v3800
    %v4001 = vmul.f32 1.0, %v4000
    %v4002 = vrcp.pop %v3801
    %v4003 = vmul.f32 1.0, %v4002
    %v4004 = vrcp.pop %v3802
    %v4005 = vmul.f32 1.0, %v4004
    %v4006 = vrcp.pop %v3803
    %v4007 = vmul.f32 1.0, %v4006
    %v4008 = vrcp.pop %v3804
    %v4009 = vmul.f32 1.0, %v4008
    %v4010 = vrcp.pop %v3805
    %v4011 = vmul.f32 1.0, %v4010
    %v4012 = vrcp.pop %v3806
    %v4013 = vmul.f32 1.0, %v4012
    %v4014 = vrcp.pop %v3807
    %v4015 = vmul.f32 1.0, %v4014
    %v4016 = vrcp.pop %v3808
    %v4017 = vmul.f32 1.0, %v4016
    %v4018 = vrcp.pop %v3809
    %v4019 = vmul.f32 1.0, %v4018
    %v4020 = vrcp.pop %v3810
    %v4021 = vmul.f32 1.0, %v4020
    %v4022 = vrcp.pop %v3811
    %v4023 = vmul.f32 1.0, %v4022
    %v4024 = vrcp.pop %v3812
    %v4025 = vmul.f32 1.0, %v4024
    %v4026 = vrcp.pop %v3813
    %v4027 = vmul.f32 1.0, %v4026
    %v4028 = vrcp.pop %v3814
    %v4029 = vmul.f32 1.0, %v4028
    %v4030 = vrcp.pop %v3815
    %v4031 = vmul.f32 1.0, %v4030
    %v4032 = vrcp.pop %v3816
    %v4033 = vmul.f32 1.0, %v4032
    %v4034 = vrcp.pop %v3817
    %v4035 = vmul.f32 1.0, %v4034
    %v4036 = vrcp.pop %v3818
    %v4037 = vmul.f32 1.0, %v4036
    %v4038 = vrcp.pop %v3819
    %v4039 = vmul.f32 1.0, %v4038
    %v4040 = vrcp.pop %v3820
    %v4041 = vmul.f32 1.0, %v4040
    %v4042 = vrcp.pop %v3821
    %v4043 = vmul.f32 1.0, %v4042
    %v4044 = vrcp.pop %v3822
    %v4045 = vmul.f32 1.0, %v4044
    %v4046 = vrcp.pop %v3823
    %v4047 = vmul.f32 1.0, %v4046
    %v4048 = vrcp.pop %v3824
    %v4049 = vmul.f32 1.0, %v4048
    %v4050 = vrcp.pop %v3825
    %v4051 = vmul.f32 1.0, %v4050
    %v4052 = vrcp.pop %v3826
    %v4053 = vmul.f32 1.0, %v4052
    %v4054 = vrcp.pop %v3827
    %v4055 = vmul.f32 1.0, %v4054
    %v4056 = vrcp.pop %v3828
    %v4057 = vmul.f32 1.0, %v4056
    %v4058 = vrcp.pop %v3829
    %v4059 = vmul.f32 1.0, %v4058
    %v4060 = vrcp.pop %v3830
    %v4061 = vmul.f32 1.0, %v4060
    %v4062 = vrcp.pop %v3831
    %v4063 = vmul.f32 1.0, %v4062
    %v4064 = vrcp.pop %v3832
    %v4065 = vmul.f32 1.0, %v4064
    %v4066 = vrcp.pop %v3833
    %v4067 = vmul.f32 1.0, %v4066
    %v4068 = vrcp.pop %v3834
    %v4069 = vmul.f32 1.0, %v4068
    %v4070 = vrcp.pop %v3835
    %v4071 = vmul.f32 1.0, %v4070
    %v4072 = vrcp.pop %v3836
    %v4073 = vmul.f32 1.0, %v4072
    %v4074 = vrcp.pop %v3837
    %v4075 = vmul.f32 1.0, %v4074
    %v4076 = vrcp.pop %v3838
    %v4077 = vmul.f32 1.0, %v4076
    %v4078 = vrcp.pop %v3839
    %v4079 = vmul.f32 1.0, %v4078
    %v4080 = vrcp.pop %v3840
    %v4081 = vmul.f32 1.0, %v4080
    %v4082 = vrcp.pop %v3841
    %v4083 = vmul.f32 1.0, %v4082
    %v4084 = vrcp.pop %v3842
    %v4085 = vmul.f32 1.0, %v4084
    %v4086 = vrcp.pop %v3843
    %v4087 = vmul.f32 1.0, %v4086
    %v4088 = vrcp.pop %v3844
    %v4089 = vmul.f32 1.0, %v4088
    %v4090 = vrcp.pop %v3845
    %v4091 = vmul.f32 1.0, %v4090
    %v4092 = vrcp.pop %v3846
    %v4093 = vmul.f32 1.0, %v4092
    %v4094 = vrcp.pop %v3847
    %v4095 = vmul.f32 1.0, %v4094
    %v4096 = vrcp.pop %v3848
    %v4097 = vmul.f32 1.0, %v4096
    %v4098 = vrcp.pop %v3849
    %v4099 = vmul.f32 1.0, %v4098
    %v4100 = vrcp.pop %v3850
    %v4101 = vmul.f32 1.0, %v4100
    %v4102 = vrcp.pop %v3851
    %v4103 = vmul.f32 1.0, %v4102
    %v4104 = vrcp.pop %v3852
    %v4105 = vmul.f32 1.0, %v4104
    %v4106 = vrcp.pop %v3853
    %v4107 = vmul.f32 1.0, %v4106
    %v4108 = vrcp.pop %v3854
    %v4109 = vmul.f32 1.0, %v4108
    %v4110 = vrcp.pop %v3855
    %v4111 = vmul.f32 1.0, %v4110
    %v4128 = vlaneseq
    %v4129 = vand.u32 %v4128, 127
    %v4130 = vlaneseq
    %v4131 = vshrl.u32 %v4130, 7
    %v4132 = vsub.s32 %v4129, %v4131
    %v4133 = vrot.slane %v3857, %v4132
    %v4134 = vadd.s32 %v4129, 4294967288
    %v4135 = vlaneseq
    %v4136 = vshrl.u32 %v4135, 7
    %v4137 = vsub.s32 %v4134, %v4136
    %v4138 = vrot.slane %v3859, %v4137
    %vm4139 = vcmask 130112
    %v4140 = vsel %vm4139, %v4138, %v4133
    %v4141 = vadd.s32 %v4129, 4294967280
    %v4142 = vlaneseq
    %v4143 = vshrl.u32 %v4142, 7
    %v4144 = vsub.s32 %v4141, %v4143
    %v4145 = vrot.slane %v3861, %v4144
    %vm4146 = vcmask 195712
    %v4147 = vsel %vm4146, %v4145, %v4140
    %v4148 = vadd.s32 %v4129, 4294967272
    %v4149 = vlaneseq
    %v4150 = vshrl.u32 %v4149, 7
    %v4151 = vsub.s32 %v4148, %v4150
    %v4152 = vrot.slane %v3863, %v4151
    %vm4153 = vcmask 261312
    %v4154 = vsel %vm4153, %v4152, %v4147
    %v4155 = vadd.s32 %v4129, 4294967264
    %v4156 = vlaneseq
    %v4157 = vshrl.u32 %v4156, 7
    %v4158 = vsub.s32 %v4155, %v4157
    %v4159 = vrot.slane %v3865, %v4158
    %vm4160 = vcmask 326912
    %v4161 = vsel %vm4160, %v4159, %v4154
    %v4162 = vadd.s32 %v4129, 4294967256
    %v4163 = vlaneseq
    %v4164 = vshrl.u32 %v4163, 7
    %v4165 = vsub.s32 %v4162, %v4164
    %v4166 = vrot.slane %v3867, %v4165
    %vm4167 = vcmask 392512
    %v4168 = vsel %vm4167, %v4166, %v4161
    %v4169 = vadd.s32 %v4129, 4294967248
    %v4170 = vlaneseq
    %v4171 = vshrl.u32 %v4170, 7
    %v4172 = vsub.s32 %v4169, %v4171
    %v4173 = vrot.slane %v3869, %v4172
    %vm4174 = vcmask 458112
    %v4175 = vsel %vm4174, %v4173, %v4168
    %v4176 = vadd.s32 %v4129, 4294967240
    %v4177 = vlaneseq
    %v4178 = vshrl.u32 %v4177, 7
    %v4179 = vsub.s32 %v4176, %v4178
    %v4180 = vrot.slane %v3871, %v4179
    %vm4181 = vcmask 523712
    %v4182 = vsel %vm4181, %v4180, %v4175
    %v4183 = vadd.s32 %v4129, 4294967232
    %v4184 = vlaneseq
    %v4185 = vshrl.u32 %v4184, 7
    %v4186 = vsub.s32 %v4183, %v4185
    %v4187 = vrot.slane %v3873, %v4186
    %vm4188 = vcmask 589312
    %v4189 = vsel %vm4188, %v4187, %v4182
    %v4190 = vadd.s32 %v4129, 4294967224
    %v4191 = vlaneseq
    %v4192 = vshrl.u32 %v4191, 7
    %v4193 = vsub.s32 %v4190, %v4192
    %v4194 = vrot.slane %v3875, %v4193
    %vm4195 = vcmask 654912
    %v4196 = vsel %vm4195, %v4194, %v4189
    %v4197 = vadd.s32 %v4129, 4294967216
    %v4198 = vlaneseq
    %v4199 = vshrl.u32 %v4198, 7
    %v4200 = vsub.s32 %v4197, %v4199
    %v4201 = vrot.slane %v3877, %v4200
    %vm4202 = vcmask 720512
    %v4203 = vsel %vm4202, %v4201, %v4196
    %v4204 = vadd.s32 %v4129, 4294967208
    %v4205 = vlaneseq
    %v4206 = vshrl.u32 %v4205, 7
    %v4207 = vsub.s32 %v4204, %v4206
    %v4208 = vrot.slane %v3879, %v4207
    %vm4209 = vcmask 786112
    %v4210 = vsel %vm4209, %v4208, %v4203
    %v4211 = vadd.s32 %v4129, 4294967200
    %v4212 = vlaneseq
    %v4213 = vshrl.u32 %v4212, 7
    %v4214 = vsub.s32 %v4211, %v4213
    %v4215 = vrot.slane %v3881, %v4214
    %vm4216 = vcmask 851712
    %v4217 = vsel %vm4216, %v4215, %v4210
    %v4218 = vadd.s32 %v4129, 4294967192
    %v4219 = vlaneseq
    %v4220 = vshrl.u32 %v4219, 7
    %v4221 = vsub.s32 %v4218, %v4220
    %v4222 = vrot.slane %v3883, %v4221
    %vm4223 = vcmask 917312
    %v4224 = vsel %vm4223, %v4222, %v4217
    %v4225 = vadd.s32 %v4129, 4294967184
    %v4226 = vlaneseq
    %v4227 = vshrl.u32 %v4226, 7
    %v4228 = vsub.s32 %v4225, %v4227
    %v4229 = vrot.slane %v3885, %v4228
    %vm4230 = vcmask 982912
    %v4231 = vsel %vm4230, %v4229, %v4224
    %v4232 = vadd.s32 %v4129, 4294967176
    %v4233 = vlaneseq
    %v4234 = vshrl.u32 %v4233, 7
    %v4235 = vsub.s32 %v4232, %v4234
    %v4236 = vrot.slane %v3887, %v4235
    %vm4237 = vcmask 1048512
    %v4238 = vsel %vm4237, %v4236, %v4231
    %4239 = vst [vmem:[#allocation3] ss:$8 sm:$0x1] %v4238
    %4240 = vst [vmem:[#allocation3] ss:$8 sm:$0x0] %v4238
    %v4257 = vlaneseq
    %v4258 = vshrl.u32 %v4257, 7
    %v4259 = vsub.s32 %v4129, %v4258
    %v4260 = vrot.slane %v3889, %v4259
    %v4261 = vlaneseq
    %v4262 = vshrl.u32 %v4261, 7
    %v4263 = vsub.s32 %v4134, %v4262
    %v4264 = vrot.slane %v3891, %v4263
    %v4265 = vsel %vm4139, %v4264, %v4260
    %v4266 = vlaneseq
    %v4267 = vshrl.u32 %v4266, 7
    %v4268 = vsub.s32 %v4141, %v4267
    %v4269 = vrot.slane %v3893, %v4268
    %v4270 = vsel %vm4146, %v4269, %v4265
    %v4271 = vlaneseq
    %v4272 = vshrl.u32 %v4271, 7
    %v4273 = vsub.s32 %v4148, %v4272
    %v4274 = vrot.slane %v3895, %v4273
    %v4275 = vsel %vm4153, %v4274, %v4270
    %v4276 = vlaneseq
    %v4277 = vshrl.u32 %v4276, 7
    %v4278 = vsub.s32 %v4155, %v4277
    %v4279 = vrot.slane %v3897, %v4278
    %v4280 = vsel %vm4160, %v4279, %v4275
    %v4281 = vlaneseq
    %v4282 = vshrl.u32 %v4281, 7
    %v4283 = vsub.s32 %v4162, %v4282
    %v4284 = vrot.slane %v3899, %v4283
    %v4285 = vsel %vm4167, %v4284, %v4280
    %v4286 = vlaneseq
    %v4287 = vshrl.u32 %v4286, 7
    %v4288 = vsub.s32 %v4169, %v4287
    %v4289 = vrot.slane %v3901, %v4288
    %v4290 = vsel %vm4174, %v4289, %v4285
    %v4291 = vlaneseq
    %v4292 = vshrl.u32 %v4291, 7
    %v4293 = vsub.s32 %v4176, %v4292
    %v4294 = vrot.slane %v3903, %v4293
    %v4295 = vsel %vm4181, %v4294, %v4290
    %v4296 = vlaneseq
    %v4297 = vshrl.u32 %v4296, 7
    %v4298 = vsub.s32 %v4183, %v4297
    %v4299 = vrot.slane %v3905, %v4298
    %v4300 = vsel %vm4188, %v4299, %v4295
    %v4301 = vlaneseq
    %v4302 = vshrl.u32 %v4301, 7
    %v4303 = vsub.s32 %v4190, %v4302
    %v4304 = vrot.slane %v3907, %v4303
    %v4305 = vsel %vm4195, %v4304, %v4300
    %v4306 = vlaneseq
    %v4307 = vshrl.u32 %v4306, 7
    %v4308 = vsub.s32 %v4197, %v4307
    %v4309 = vrot.slane %v3909, %v4308
    %v4310 = vsel %vm4202, %v4309, %v4305
    %v4311 = vlaneseq
    %v4312 = vshrl.u32 %v4311, 7
    %v4313 = vsub.s32 %v4204, %v4312
    %v4314 = vrot.slane %v3911, %v4313
    %v4315 = vsel %vm4209, %v4314, %v4310
    %v4316 = vlaneseq
    %v4317 = vshrl.u32 %v4316, 7
    %v4318 = vsub.s32 %v4211, %v4317
    %v4319 = vrot.slane %v3913, %v4318
    %v4320 = vsel %vm4216, %v4319, %v4315
    %v4321 = vlaneseq
    %v4322 = vshrl.u32 %v4321, 7
    %v4323 = vsub.s32 %v4218, %v4322
    %v4324 = vrot.slane %v3915, %v4323
    %v4325 = vsel %vm4223, %v4324, %v4320
    %v4326 = vlaneseq
    %v4327 = vshrl.u32 %v4326, 7
    %v4328 = vsub.s32 %v4225, %v4327
    %v4329 = vrot.slane %v3917, %v4328
    %v4330 = vsel %vm4230, %v4329, %v4325
    %v4331 = vlaneseq
    %v4332 = vshrl.u32 %v4331, 7
    %v4333 = vsub.s32 %v4232, %v4332
    %v4334 = vrot.slane %v3919, %v4333
    %v4335 = vsel %vm4237, %v4334, %v4330
    %s4336 = scalar_lea.vmem [#allocation3], 1
    %4337 = vst [vmem:[%s4336] ss:$8 sm:$0x1] %v4335
    %4338 = vst [vmem:[%s4336] ss:$8 sm:$0x0] %v4335
    %v4355 = vlaneseq
    %v4356 = vshrl.u32 %v4355, 7
    %v4357 = vsub.s32 %v4129, %v4356
    %v4358 = vrot.slane %v3921, %v4357
    %v4359 = vlaneseq
    %v4360 = vshrl.u32 %v4359, 7
    %v4361 = vsub.s32 %v4134, %v4360
    %v4362 = vrot.slane %v3923, %v4361
    %v4363 = vsel %vm4139, %v4362, %v4358
    %v4364 = vlaneseq
    %v4365 = vshrl.u32 %v4364, 7
    %v4366 = vsub.s32 %v4141, %v4365
    %v4367 = vrot.slane %v3925, %v4366
    %v4368 = vsel %vm4146, %v4367, %v4363
    %v4369 = vlaneseq
    %v4370 = vshrl.u32 %v4369, 7
    %v4371 = vsub.s32 %v4148, %v4370
    %v4372 = vrot.slane %v3927, %v4371
    %v4373 = vsel %vm4153, %v4372, %v4368
    %v4374 = vlaneseq
    %v4375 = vshrl.u32 %v4374, 7
    %v4376 = vsub.s32 %v4155, %v4375
    %v4377 = vrot.slane %v3929, %v4376
    %v4378 = vsel %vm4160, %v4377, %v4373
    %v4379 = vlaneseq
    %v4380 = vshrl.u32 %v4379, 7
    %v4381 = vsub.s32 %v4162, %v4380
    %v4382 = vrot.slane %v3931, %v4381
    %v4383 = vsel %vm4167, %v4382, %v4378
    %v4384 = vlaneseq
    %v4385 = vshrl.u32 %v4384, 7
    %v4386 = vsub.s32 %v4169, %v4385
    %v4387 = vrot.slane %v3933, %v4386
    %v4388 = vsel %vm4174, %v4387, %v4383
    %v4389 = vlaneseq
    %v4390 = vshrl.u32 %v4389, 7
    %v4391 = vsub.s32 %v4176, %v4390
    %v4392 = vrot.slane %v3935, %v4391
    %v4393 = vsel %vm4181, %v4392, %v4388
    %v4394 = vlaneseq
    %v4395 = vshrl.u32 %v4394, 7
    %v4396 = vsub.s32 %v4183, %v4395
    %v4397 = vrot.slane %v3937, %v4396
    %v4398 = vsel %vm4188, %v4397, %v4393
    %v4399 = vlaneseq
    %v4400 = vshrl.u32 %v4399, 7
    %v4401 = vsub.s32 %v4190, %v4400
    %v4402 = vrot.slane %v3939, %v4401
    %v4403 = vsel %vm4195, %v4402, %v4398
    %v4404 = vlaneseq
    %v4405 = vshrl.u32 %v4404, 7
    %v4406 = vsub.s32 %v4197, %v4405
    %v4407 = vrot.slane %v3941, %v4406
    %v4408 = vsel %vm4202, %v4407, %v4403
    %v4409 = vlaneseq
    %v4410 = vshrl.u32 %v4409, 7
    %v4411 = vsub.s32 %v4204, %v4410
    %v4412 = vrot.slane %v3943, %v4411
    %v4413 = vsel %vm4209, %v4412, %v4408
    %v4414 = vlaneseq
    %v4415 = vshrl.u32 %v4414, 7
    %v4416 = vsub.s32 %v4211, %v4415
    %v4417 = vrot.slane %v3945, %v4416
    %v4418 = vsel %vm4216, %v4417, %v4413
    %v4419 = vlaneseq
    %v4420 = vshrl.u32 %v4419, 7
    %v4421 = vsub.s32 %v4218, %v4420
    %v4422 = vrot.slane %v3947, %v4421
    %v4423 = vsel %vm4223, %v4422, %v4418
    %v4424 = vlaneseq
    %v4425 = vshrl.u32 %v4424, 7
    %v4426 = vsub.s32 %v4225, %v4425
    %v4427 = vrot.slane %v3949, %v4426
    %v4428 = vsel %vm4230, %v4427, %v4423
    %v4429 = vlaneseq
    %v4430 = vshrl.u32 %v4429, 7
    %v4431 = vsub.s32 %v4232, %v4430
    %v4432 = vrot.slane %v3951, %v4431
    %v4433 = vsel %vm4237, %v4432, %v4428
    %s4434 = scalar_lea.vmem [#allocation3], 2
    %4435 = vst [vmem:[%s4434] ss:$8 sm:$0x1] %v4433
    %4436 = vst [vmem:[%s4434] ss:$8 sm:$0x0] %v4433
    %v4453 = vlaneseq
    %v4454 = vshrl.u32 %v4453, 7
    %v4455 = vsub.s32 %v4129, %v4454
    %v4456 = vrot.slane %v3953, %v4455
    %v4457 = vlaneseq
    %v4458 = vshrl.u32 %v4457, 7
    %v4459 = vsub.s32 %v4134, %v4458
    %v4460 = vrot.slane %v3955, %v4459
    %v4461 = vsel %vm4139, %v4460, %v4456
    %v4462 = vlaneseq
    %v4463 = vshrl.u32 %v4462, 7
    %v4464 = vsub.s32 %v4141, %v4463
    %v4465 = vrot.slane %v3957, %v4464
    %v4466 = vsel %vm4146, %v4465, %v4461
    %v4467 = vlaneseq
    %v4468 = vshrl.u32 %v4467, 7
    %v4469 = vsub.s32 %v4148, %v4468
    %v4470 = vrot.slane %v3959, %v4469
    %v4471 = vsel %vm4153, %v4470, %v4466
    %v4472 = vlaneseq
    %v4473 = vshrl.u32 %v4472, 7
    %v4474 = vsub.s32 %v4155, %v4473
    %v4475 = vrot.slane %v3961, %v4474
    %v4476 = vsel %vm4160, %v4475, %v4471
    %v4477 = vlaneseq
    %v4478 = vshrl.u32 %v4477, 7
    %v4479 = vsub.s32 %v4162, %v4478
    %v4480 = vrot.slane %v3963, %v4479
    %v4481 = vsel %vm4167, %v4480, %v4476
    %v4482 = vlaneseq
    %v4483 = vshrl.u32 %v4482, 7
    %v4484 = vsub.s32 %v4169, %v4483
    %v4485 = vrot.slane %v3965, %v4484
    %v4486 = vsel %vm4174, %v4485, %v4481
    %v4487 = vlaneseq
    %v4488 = vshrl.u32 %v4487, 7
    %v4489 = vsub.s32 %v4176, %v4488
    %v4490 = vrot.slane %v3967, %v4489
    %v4491 = vsel %vm4181, %v4490, %v4486
    %v4492 = vlaneseq
    %v4493 = vshrl.u32 %v4492, 7
    %v4494 = vsub.s32 %v4183, %v4493
    %v4495 = vrot.slane %v3969, %v4494
    %v4496 = vsel %vm4188, %v4495, %v4491
    %v4497 = vlaneseq
    %v4498 = vshrl.u32 %v4497, 7
    %v4499 = vsub.s32 %v4190, %v4498
    %v4500 = vrot.slane %v3971, %v4499
    %v4501 = vsel %vm4195, %v4500, %v4496
    %v4502 = vlaneseq
    %v4503 = vshrl.u32 %v4502, 7
    %v4504 = vsub.s32 %v4197, %v4503
    %v4505 = vrot.slane %v3973, %v4504
    %v4506 = vsel %vm4202, %v4505, %v4501
    %v4507 = vlaneseq
    %v4508 = vshrl.u32 %v4507, 7
    %v4509 = vsub.s32 %v4204, %v4508
    %v4510 = vrot.slane %v3975, %v4509
    %v4511 = vsel %vm4209, %v4510, %v4506
    %v4512 = vlaneseq
    %v4513 = vshrl.u32 %v4512, 7
    %v4514 = vsub.s32 %v4211, %v4513
    %v4515 = vrot.slane %v3977, %v4514
    %v4516 = vsel %vm4216, %v4515, %v4511
    %v4517 = vlaneseq
    %v4518 = vshrl.u32 %v4517, 7
    %v4519 = vsub.s32 %v4218, %v4518
    %v4520 = vrot.slane %v3979, %v4519
    %v4521 = vsel %vm4223, %v4520, %v4516
    %v4522 = vlaneseq
    %v4523 = vshrl.u32 %v4522, 7
    %v4524 = vsub.s32 %v4225, %v4523
    %v4525 = vrot.slane %v3981, %v4524
    %v4526 = vsel %vm4230, %v4525, %v4521
    %v4527 = vlaneseq
    %v4528 = vshrl.u32 %v4527, 7
    %v4529 = vsub.s32 %v4232, %v4528
    %v4530 = vrot.slane %v3983, %v4529
    %v4531 = vsel %vm4237, %v4530, %v4526
    %s4532 = scalar_lea.vmem [#allocation3], 3
    %4533 = vst [vmem:[%s4532] ss:$8 sm:$0x1] %v4531
    %4534 = vst [vmem:[%s4532] ss:$8 sm:$0x0] %v4531
    %v4551 = vlaneseq
    %v4552 = vshrl.u32 %v4551, 7
    %v4553 = vsub.s32 %v4129, %v4552
    %v4554 = vrot.slane %v3985, %v4553
    %v4555 = vlaneseq
    %v4556 = vshrl.u32 %v4555, 7
    %v4557 = vsub.s32 %v4134, %v4556
    %v4558 = vrot.slane %v3987, %v4557
    %v4559 = vsel %vm4139, %v4558, %v4554
    %v4560 = vlaneseq
    %v4561 = vshrl.u32 %v4560, 7
    %v4562 = vsub.s32 %v4141, %v4561
    %v4563 = vrot.slane %v3989, %v4562
    %v4564 = vsel %vm4146, %v4563, %v4559
    %v4565 = vlaneseq
    %v4566 = vshrl.u32 %v4565, 7
    %v4567 = vsub.s32 %v4148, %v4566
    %v4568 = vrot.slane %v3991, %v4567
    %v4569 = vsel %vm4153, %v4568, %v4564
    %v4570 = vlaneseq
    %v4571 = vshrl.u32 %v4570, 7
    %v4572 = vsub.s32 %v4155, %v4571
    %v4573 = vrot.slane %v3993, %v4572
    %v4574 = vsel %vm4160, %v4573, %v4569
    %v4575 = vlaneseq
    %v4576 = vshrl.u32 %v4575, 7
    %v4577 = vsub.s32 %v4162, %v4576
    %v4578 = vrot.slane %v3995, %v4577
    %v4579 = vsel %vm4167, %v4578, %v4574
    %v4580 = vlaneseq
    %v4581 = vshrl.u32 %v4580, 7
    %v4582 = vsub.s32 %v4169, %v4581
    %v4583 = vrot.slane %v3997, %v4582
    %v4584 = vsel %vm4174, %v4583, %v4579
    %v4585 = vlaneseq
    %v4586 = vshrl.u32 %v4585, 7
    %v4587 = vsub.s32 %v4176, %v4586
    %v4588 = vrot.slane %v3999, %v4587
    %v4589 = vsel %vm4181, %v4588, %v4584
    %v4590 = vlaneseq
    %v4591 = vshrl.u32 %v4590, 7
    %v4592 = vsub.s32 %v4183, %v4591
    %v4593 = vrot.slane %v4001, %v4592
    %v4594 = vsel %vm4188, %v4593, %v4589
    %v4595 = vlaneseq
    %v4596 = vshrl.u32 %v4595, 7
    %v4597 = vsub.s32 %v4190, %v4596
    %v4598 = vrot.slane %v4003, %v4597
    %v4599 = vsel %vm4195, %v4598, %v4594
    %v4600 = vlaneseq
    %v4601 = vshrl.u32 %v4600, 7
    %v4602 = vsub.s32 %v4197, %v4601
    %v4603 = vrot.slane %v4005, %v4602
    %v4604 = vsel %vm4202, %v4603, %v4599
    %v4605 = vlaneseq
    %v4606 = vshrl.u32 %v4605, 7
    %v4607 = vsub.s32 %v4204, %v4606
    %v4608 = vrot.slane %v4007, %v4607
    %v4609 = vsel %vm4209, %v4608, %v4604
    %v4610 = vlaneseq
    %v4611 = vshrl.u32 %v4610, 7
    %v4612 = vsub.s32 %v4211, %v4611
    %v4613 = vrot.slane %v4009, %v4612
    %v4614 = vsel %vm4216, %v4613, %v4609
    %v4615 = vlaneseq
    %v4616 = vshrl.u32 %v4615, 7
    %v4617 = vsub.s32 %v4218, %v4616
    %v4618 = vrot.slane %v4011, %v4617
    %v4619 = vsel %vm4223, %v4618, %v4614
    %v4620 = vlaneseq
    %v4621 = vshrl.u32 %v4620, 7
    %v4622 = vsub.s32 %v4225, %v4621
    %v4623 = vrot.slane %v4013, %v4622
    %v4624 = vsel %vm4230, %v4623, %v4619
    %v4625 = vlaneseq
    %v4626 = vshrl.u32 %v4625, 7
    %v4627 = vsub.s32 %v4232, %v4626
    %v4628 = vrot.slane %v4015, %v4627
    %v4629 = vsel %vm4237, %v4628, %v4624
    %s4630 = scalar_lea.vmem [#allocation3], 4
    %4631 = vst [vmem:[%s4630] ss:$8 sm:$0x1] %v4629
    %4632 = vst [vmem:[%s4630] ss:$8 sm:$0x0] %v4629
    %v4649 = vlaneseq
    %v4650 = vshrl.u32 %v4649, 7
    %v4651 = vsub.s32 %v4129, %v4650
    %v4652 = vrot.slane %v4017, %v4651
    %v4653 = vlaneseq
    %v4654 = vshrl.u32 %v4653, 7
    %v4655 = vsub.s32 %v4134, %v4654
    %v4656 = vrot.slane %v4019, %v4655
    %v4657 = vsel %vm4139, %v4656, %v4652
    %v4658 = vlaneseq
    %v4659 = vshrl.u32 %v4658, 7
    %v4660 = vsub.s32 %v4141, %v4659
    %v4661 = vrot.slane %v4021, %v4660
    %v4662 = vsel %vm4146, %v4661, %v4657
    %v4663 = vlaneseq
    %v4664 = vshrl.u32 %v4663, 7
    %v4665 = vsub.s32 %v4148, %v4664
    %v4666 = vrot.slane %v4023, %v4665
    %v4667 = vsel %vm4153, %v4666, %v4662
    %v4668 = vlaneseq
    %v4669 = vshrl.u32 %v4668, 7
    %v4670 = vsub.s32 %v4155, %v4669
    %v4671 = vrot.slane %v4025, %v4670
    %v4672 = vsel %vm4160, %v4671, %v4667
    %v4673 = vlaneseq
    %v4674 = vshrl.u32 %v4673, 7
    %v4675 = vsub.s32 %v4162, %v4674
    %v4676 = vrot.slane %v4027, %v4675
    %v4677 = vsel %vm4167, %v4676, %v4672
    %v4678 = vlaneseq
    %v4679 = vshrl.u32 %v4678, 7
    %v4680 = vsub.s32 %v4169, %v4679
    %v4681 = vrot.slane %v4029, %v4680
    %v4682 = vsel %vm4174, %v4681, %v4677
    %v4683 = vlaneseq
    %v4684 = vshrl.u32 %v4683, 7
    %v4685 = vsub.s32 %v4176, %v4684
    %v4686 = vrot.slane %v4031, %v4685
    %v4687 = vsel %vm4181, %v4686, %v4682
    %v4688 = vlaneseq
    %v4689 = vshrl.u32 %v4688, 7
    %v4690 = vsub.s32 %v4183, %v4689
    %v4691 = vrot.slane %v4033, %v4690
    %v4692 = vsel %vm4188, %v4691, %v4687
    %v4693 = vlaneseq
    %v4694 = vshrl.u32 %v4693, 7
    %v4695 = vsub.s32 %v4190, %v4694
    %v4696 = vrot.slane %v4035, %v4695
    %v4697 = vsel %vm4195, %v4696, %v4692
    %v4698 = vlaneseq
    %v4699 = vshrl.u32 %v4698, 7
    %v4700 = vsub.s32 %v4197, %v4699
    %v4701 = vrot.slane %v4037, %v4700
    %v4702 = vsel %vm4202, %v4701, %v4697
    %v4703 = vlaneseq
    %v4704 = vshrl.u32 %v4703, 7
    %v4705 = vsub.s32 %v4204, %v4704
    %v4706 = vrot.slane %v4039, %v4705
    %v4707 = vsel %vm4209, %v4706, %v4702
    %v4708 = vlaneseq
    %v4709 = vshrl.u32 %v4708, 7
    %v4710 = vsub.s32 %v4211, %v4709
    %v4711 = vrot.slane %v4041, %v4710
    %v4712 = vsel %vm4216, %v4711, %v4707
    %v4713 = vlaneseq
    %v4714 = vshrl.u32 %v4713, 7
    %v4715 = vsub.s32 %v4218, %v4714
    %v4716 = vrot.slane %v4043, %v4715
    %v4717 = vsel %vm4223, %v4716, %v4712
    %v4718 = vlaneseq
    %v4719 = vshrl.u32 %v4718, 7
    %v4720 = vsub.s32 %v4225, %v4719
    %v4721 = vrot.slane %v4045, %v4720
    %v4722 = vsel %vm4230, %v4721, %v4717
    %v4723 = vlaneseq
    %v4724 = vshrl.u32 %v4723, 7
    %v4725 = vsub.s32 %v4232, %v4724
    %v4726 = vrot.slane %v4047, %v4725
    %v4727 = vsel %vm4237, %v4726, %v4722
    %s4728 = scalar_lea.vmem [#allocation3], 5
    %4729 = vst [vmem:[%s4728] ss:$8 sm:$0x1] %v4727
    %4730 = vst [vmem:[%s4728] ss:$8 sm:$0x0] %v4727
    %v4747 = vlaneseq
    %v4748 = vshrl.u32 %v4747, 7
    %v4749 = vsub.s32 %v4129, %v4748
    %v4750 = vrot.slane %v4049, %v4749
    %v4751 = vlaneseq
    %v4752 = vshrl.u32 %v4751, 7
    %v4753 = vsub.s32 %v4134, %v4752
    %v4754 = vrot.slane %v4051, %v4753
    %v4755 = vsel %vm4139, %v4754, %v4750
    %v4756 = vlaneseq
    %v4757 = vshrl.u32 %v4756, 7
    %v4758 = vsub.s32 %v4141, %v4757
    %v4759 = vrot.slane %v4053, %v4758
    %v4760 = vsel %vm4146, %v4759, %v4755
    %v4761 = vlaneseq
    %v4762 = vshrl.u32 %v4761, 7
    %v4763 = vsub.s32 %v4148, %v4762
    %v4764 = vrot.slane %v4055, %v4763
    %v4765 = vsel %vm4153, %v4764, %v4760
    %v4766 = vlaneseq
    %v4767 = vshrl.u32 %v4766, 7
    %v4768 = vsub.s32 %v4155, %v4767
    %v4769 = vrot.slane %v4057, %v4768
    %v4770 = vsel %vm4160, %v4769, %v4765
    %v4771 = vlaneseq
    %v4772 = vshrl.u32 %v4771, 7
    %v4773 = vsub.s32 %v4162, %v4772
    %v4774 = vrot.slane %v4059, %v4773
    %v4775 = vsel %vm4167, %v4774, %v4770
    %v4776 = vlaneseq
    %v4777 = vshrl.u32 %v4776, 7
    %v4778 = vsub.s32 %v4169, %v4777
    %v4779 = vrot.slane %v4061, %v4778
    %v4780 = vsel %vm4174, %v4779, %v4775
    %v4781 = vlaneseq
    %v4782 = vshrl.u32 %v4781, 7
    %v4783 = vsub.s32 %v4176, %v4782
    %v4784 = vrot.slane %v4063, %v4783
    %v4785 = vsel %vm4181, %v4784, %v4780
    %v4786 = vlaneseq
    %v4787 = vshrl.u32 %v4786, 7
    %v4788 = vsub.s32 %v4183, %v4787
    %v4789 = vrot.slane %v4065, %v4788
    %v4790 = vsel %vm4188, %v4789, %v4785
    %v4791 = vlaneseq
    %v4792 = vshrl.u32 %v4791, 7
    %v4793 = vsub.s32 %v4190, %v4792
    %v4794 = vrot.slane %v4067, %v4793
    %v4795 = vsel %vm4195, %v4794, %v4790
    %v4796 = vlaneseq
    %v4797 = vshrl.u32 %v4796, 7
    %v4798 = vsub.s32 %v4197, %v4797
    %v4799 = vrot.slane %v4069, %v4798
    %v4800 = vsel %vm4202, %v4799, %v4795
    %v4801 = vlaneseq
    %v4802 = vshrl.u32 %v4801, 7
    %v4803 = vsub.s32 %v4204, %v4802
    %v4804 = vrot.slane %v4071, %v4803
    %v4805 = vsel %vm4209, %v4804, %v4800
    %v4806 = vlaneseq
    %v4807 = vshrl.u32 %v4806, 7
    %v4808 = vsub.s32 %v4211, %v4807
    %v4809 = vrot.slane %v4073, %v4808
    %v4810 = vsel %vm4216, %v4809, %v4805
    %v4811 = vlaneseq
    %v4812 = vshrl.u32 %v4811, 7
    %v4813 = vsub.s32 %v4218, %v4812
    %v4814 = vrot.slane %v4075, %v4813
    %v4815 = vsel %vm4223, %v4814, %v4810
    %v4816 = vlaneseq
    %v4817 = vshrl.u32 %v4816, 7
    %v4818 = vsub.s32 %v4225, %v4817
    %v4819 = vrot.slane %v4077, %v4818
    %v4820 = vsel %vm4230, %v4819, %v4815
    %v4821 = vlaneseq
    %v4822 = vshrl.u32 %v4821, 7
    %v4823 = vsub.s32 %v4232, %v4822
    %v4824 = vrot.slane %v4079, %v4823
    %v4825 = vsel %vm4237, %v4824, %v4820
    %s4826 = scalar_lea.vmem [#allocation3], 6
    %4827 = vst [vmem:[%s4826] ss:$8 sm:$0x1] %v4825
    %4828 = vst [vmem:[%s4826] ss:$8 sm:$0x0] %v4825
    %v4845 = vlaneseq
    %v4846 = vshrl.u32 %v4845, 7
    %v4847 = vsub.s32 %v4129, %v4846
    %v4848 = vrot.slane %v4081, %v4847
    %v4849 = vlaneseq
    %v4850 = vshrl.u32 %v4849, 7
    %v4851 = vsub.s32 %v4134, %v4850
    %v4852 = vrot.slane %v4083, %v4851
    %v4853 = vsel %vm4139, %v4852, %v4848
    %v4854 = vlaneseq
    %v4855 = vshrl.u32 %v4854, 7
    %v4856 = vsub.s32 %v4141, %v4855
    %v4857 = vrot.slane %v4085, %v4856
    %v4858 = vsel %vm4146, %v4857, %v4853
    %v4859 = vlaneseq
    %v4860 = vshrl.u32 %v4859, 7
    %v4861 = vsub.s32 %v4148, %v4860
    %v4862 = vrot.slane %v4087, %v4861
    %v4863 = vsel %vm4153, %v4862, %v4858
    %v4864 = vlaneseq
    %v4865 = vshrl.u32 %v4864, 7
    %v4866 = vsub.s32 %v4155, %v4865
    %v4867 = vrot.slane %v4089, %v4866
    %v4868 = vsel %vm4160, %v4867, %v4863
    %v4869 = vlaneseq
    %v4870 = vshrl.u32 %v4869, 7
    %v4871 = vsub.s32 %v4162, %v4870
    %v4872 = vrot.slane %v4091, %v4871
    %v4873 = vsel %vm4167, %v4872, %v4868
    %v4874 = vlaneseq
    %v4875 = vshrl.u32 %v4874, 7
    %v4876 = vsub.s32 %v4169, %v4875
    %v4877 = vrot.slane %v4093, %v4876
    %v4878 = vsel %vm4174, %v4877, %v4873
    %v4879 = vlaneseq
    %v4880 = vshrl.u32 %v4879, 7
    %v4881 = vsub.s32 %v4176, %v4880
    %v4882 = vrot.slane %v4095, %v4881
    %v4883 = vsel %vm4181, %v4882, %v4878
    %v4884 = vlaneseq
    %v4885 = vshrl.u32 %v4884, 7
    %v4886 = vsub.s32 %v4183, %v4885
    %v4887 = vrot.slane %v4097, %v4886
    %v4888 = vsel %vm4188, %v4887, %v4883
    %v4889 = vlaneseq
    %v4890 = vshrl.u32 %v4889, 7
    %v4891 = vsub.s32 %v4190, %v4890
    %v4892 = vrot.slane %v4099, %v4891
    %v4893 = vsel %vm4195, %v4892, %v4888
    %v4894 = vlaneseq
    %v4895 = vshrl.u32 %v4894, 7
    %v4896 = vsub.s32 %v4197, %v4895
    %v4897 = vrot.slane %v4101, %v4896
    %v4898 = vsel %vm4202, %v4897, %v4893
    %v4899 = vlaneseq
    %v4900 = vshrl.u32 %v4899, 7
    %v4901 = vsub.s32 %v4204, %v4900
    %v4902 = vrot.slane %v4103, %v4901
    %v4903 = vsel %vm4209, %v4902, %v4898
    %v4904 = vlaneseq
    %v4905 = vshrl.u32 %v4904, 7
    %v4906 = vsub.s32 %v4211, %v4905
    %v4907 = vrot.slane %v4105, %v4906
    %v4908 = vsel %vm4216, %v4907, %v4903
    %v4909 = vlaneseq
    %v4910 = vshrl.u32 %v4909, 7
    %v4911 = vsub.s32 %v4218, %v4910
    %v4912 = vrot.slane %v4107, %v4911
    %v4913 = vsel %vm4223, %v4912, %v4908
    %v4914 = vlaneseq
    %v4915 = vshrl.u32 %v4914, 7
    %v4916 = vsub.s32 %v4225, %v4915
    %v4917 = vrot.slane %v4109, %v4916
    %v4918 = vsel %vm4230, %v4917, %v4913
    %v4919 = vlaneseq
    %v4920 = vshrl.u32 %v4919, 7
    %v4921 = vsub.s32 %v4232, %v4920
    %v4922 = vrot.slane %v4111, %v4921
    %v4923 = vsel %vm4237, %v4922, %v4918
    %s4924 = scalar_lea.vmem [#allocation3], 7
    %4925 = vst [vmem:[%s4924] ss:$8 sm:$0x1] %v4923
    %4926 = vst [vmem:[%s4924] ss:$8 sm:$0x0] %v4923
    // Predicated region
    $region30: #{tpu_custom_call.1} parent=1 // pred_check
      _
    $region31: #{tpu_custom_call.1} parent=1 // pred_check_branch
      %4928 = sbr.rel (0) target = $region33
    $region32: #{tpu_custom_call.1} parent=1 // pred_region
      %s4930 = ssub.s32 128, 128
      %4931 = vsyncadd [#allocation4], %s4930
      %s4933 = sshll.u32 [#allocation3], 4
      %s4934 = int_to_ptr.vmem [resolvable:$true] %s4933
      %4936 = dma.vmem_to_hbm [thread:$0]  %s4934, 128, %s7, [#allocation4]
    $region33: #{tpu_custom_call.1} parent=1 // pred_fallthru
      _
    // Predicated region
    $region34: #{tpu_custom_call.1} parent=1 // pred_check
      _
    $region35: #{tpu_custom_call.1} parent=1 // pred_check_branch
      %4938 = sbr.rel (0) target = $region37
    $region36: #{tpu_custom_call.1} parent=1 // pred_region
      %4939 = dma.done [#allocation4], 128
    $region37: #{tpu_custom_call.1} parent=1 // pred_fallthru
      _
    %4940 = vsyncpa [#allocation4], 1

</llo_original>
